<compile_context>
chip_gen: v6e
topology: v6e:2x2x1
jax: 0.10.0
libtpu: 0.0.40
codegen_flags: <defaults>
</compile_context>

<pallas_src>
import functools

import jax
import jax.numpy as jnp
from jax.experimental import pallas as pl
from jax.experimental.pallas import tpu as pltpu


# ------------------------------ fused kernel -------------------------------

def _vit_fused_kernel(
    patches_ref,            # [1, S_pad, C*p*p]  (row 0 and tail rows are zero)
    patch_w_ref,            # [C*p*p, D]
    patch_b_ref,            # [1, D]
    cls_pos_ref,            # [S_pad, D]  (pos embed, row 0 also holds cls token)
    ln1_g_ref, ln1_b_ref,   # [depth, 1, D]
    qkv_w_ref,              # [depth, D, 3D]
    qkv_b_ref,              # [depth, 1, 3D]
    proj_w_ref,             # [depth, D, D]
    proj_b_ref,             # [depth, 1, D]
    ln2_g_ref, ln2_b_ref,   # [depth, 1, D]
    fc1_w_ref,              # [depth, D, Hm]
    fc1_b_ref,              # [depth, 1, Hm]
    fc2_w_ref,              # [depth, Hm, D]
    fc2_b_ref,              # [depth, 1, D]
    lnf_g_ref, lnf_b_ref,   # [1, D]
    pool_w_ref,             # [D, D]
    pool_b_ref,             # [1, D]
    cls3_w_ref,             # [D, NC]
    cls3_b_ref,             # [1, NC]
    o_ref,                  # [1, 1, NC]
    *, depth, heads, seq_len, seq_pad, eps):
    D = patch_w_ref.shape[1]
    Dh = D // heads
    scale = 1.0 / (Dh ** 0.5)

    def layernorm(x, g, b):
        mean = jnp.mean(x, axis=-1, keepdims=True)
        xc = x - mean
        var = jnp.mean(xc * xc, axis=-1, keepdims=True)
        return xc * jax.lax.rsqrt(var + eps) * g + b

    # ---- patch embedding + cls token + positional embedding (padded rows) ----
    tok = (jnp.dot(patches_ref[0], patch_w_ref[...],
                   preferred_element_type=jnp.float32) + patch_b_ref[...])
    row = jax.lax.broadcasted_iota(jnp.int32, (seq_pad, 1), 0)
    is_patch = jnp.logical_and(row >= 1, row < seq_len)
    xs = jnp.where(is_patch, tok, 0.0) + cls_pos_ref[...]        # [S_pad, D]

    # key-padding bias, shared by every layer / head
    kcol = jax.lax.broadcasted_iota(jnp.int32, (1, seq_pad), 1)
    key_bias = jnp.where(kcol < seq_len, 0.0, -1e30).astype(jnp.float32)

    for l in range(depth):                 # static -> fully unrolled
        # -------- attention sub-block (pre-LN) --------
        h = layernorm(xs, ln1_g_ref[l], ln1_b_ref[l])
        qkv = (jnp.dot(h, qkv_w_ref[l], preferred_element_type=jnp.float32)
               + qkv_b_ref[l])                                   # [S_pad, 3D]
        proj_w = proj_w_ref[l]                                   # [D, D]
        attn_out = proj_b_ref[l]                                 # starts as bias
        for hd in range(heads):            # static head split, stays in VMEM
            q = qkv[:, hd * Dh:(hd + 1) * Dh]
            k = qkv[:, D + hd * Dh:D + (hd + 1) * Dh]
            v = qkv[:, 2 * D + hd * Dh:2 * D + (hd + 1) * Dh]
            s = jax.lax.dot_general(q, k, (((1,), (1,)), ((), ())),
                                    preferred_element_type=jnp.float32)
            s = s * scale + key_bias
            m = jnp.max(s, axis=-1, keepdims=True)
            p = jnp.exp(s - m)
            inv = pl.reciprocal(jnp.sum(p, axis=-1, keepdims=True), approx=True)
            p = p * inv
            o_h = jnp.dot(p, v, preferred_element_type=jnp.float32)   # [S_pad, Dh]
            # head merge fused into the projection matmul
            attn_out = attn_out + jnp.dot(
                o_h, proj_w[hd * Dh:(hd + 1) * Dh, :],
                preferred_element_type=jnp.float32)
        xs = xs + attn_out                                        # residual

        # -------- MLP sub-block (pre-LN) --------
        h = layernorm(xs, ln2_g_ref[l], ln2_b_ref[l])
        h = (jnp.dot(h, fc1_w_ref[l], preferred_element_type=jnp.float32)
             + fc1_b_ref[l])
        # TODO(synk): torch nn.GELU default is exact erf; tanh approximation here.
        h = jax.nn.gelu(h, approximate=True)
        xs = xs + (jnp.dot(h, fc2_w_ref[l], preferred_element_type=jnp.float32)
                   + fc2_b_ref[l])                                # residual

    # ---- final LN -> pooler_output (tanh) -> classifier_3 ----
    xn = layernorm(xs, lnf_g_ref[...], lnf_b_ref[...])
    cls_tok = xn[0:1, :]                                          # [1, D]
    pooled = jnp.tanh(jnp.dot(cls_tok, pool_w_ref[...],
                              preferred_element_type=jnp.float32)
                      + pool_b_ref[...])
    logits = (jnp.dot(pooled, cls3_w_ref[...],
                      preferred_element_type=jnp.float32) + cls3_b_ref[...])
    o_ref[0] = logits


# --------------------------- parameter creation ----------------------------

def init_params(key, in_chans=4, img_size=16, patch=4, dim=32, depth=2,
                heads=2, mlp_hidden=64, num_classes=8):
    keys = iter(jax.random.split(key, 32))
    n = lambda shape, s=0.02: (s * jax.random.normal(next(keys), shape)).astype(jnp.float32)
    z = lambda shape: jnp.zeros(shape, jnp.float32)
    o = lambda shape: jnp.ones(shape, jnp.float32)
    num_patches = (img_size // patch) ** 2
    return {
        # patch embed conv (kernel==stride==patch) as a matmul; rows ordered
        # (C, kh, kw) to match torch Conv2d weight flattening
        "patch_w": n((in_chans * patch * patch, dim)),
        "patch_b": z((dim,)),
        "cls_token": n((1, 1, dim)),
        "pos_embed": n((1, num_patches + 1, dim)),
        # per-block params stacked along a leading depth axis (the fused
        # kernel indexes ref[layer] with a static index; all stay in VMEM)
        "ln1_g": o((depth, 1, dim)), "ln1_b": z((depth, 1, dim)),
        "qkv_w": n((depth, dim, 3 * dim)), "qkv_b": z((depth, 1, 3 * dim)),
        "proj_w": n((depth, dim, dim)), "proj_b": z((depth, 1, dim)),
        "ln2_g": o((depth, 1, dim)), "ln2_b": z((depth, 1, dim)),
        "fc1_w": n((depth, dim, mlp_hidden)), "fc1_b": z((depth, 1, mlp_hidden)),
        "fc2_w": n((depth, mlp_hidden, dim)), "fc2_b": z((depth, 1, dim)),
        "ln_g": o((dim,)), "ln_b": z((dim,)),
        # standard-ViT pooler: pooler_output = tanh(W cls + b), feature_size == dim
        "pool_w": n((dim, dim)), "pool_b": z((dim,)),
        # classifier_3 : Linear(feature_size, num_classes)
        "cls3_w": n((dim, num_classes)), "cls3_b": z((num_classes,)),
    }


# ------------------------------ forward pass -------------------------------

def haframe_vit_forward(params, x, *, patch, dim, heads, depth, eps=1e-6):
    """x: [B, C, H, W] (NCHW, f32) -> logits [B, num_classes]."""
    # eps=1e-6 follows the timm ViT convention (torch nn.LayerNorm default is 1e-5).
    x = x.astype(jnp.float32)
    B, C, H, W = x.shape
    D = dim
    Hp, Wp = H // patch, W // patch
    P = Hp * Wp
    Cpp = C * patch * patch
    S = P + 1
    S_pad = ((S + 7) // 8) * 8            # pad seq to a sublane multiple (17 -> 24)
    NC = params["cls3_b"].shape[-1]

    # ---- glue: patch extraction, rows ordered (C, kh, kw) like torch Conv2d ----
    patches = (x.reshape(B, C, Hp, patch, Wp, patch)
                 .transpose(0, 2, 4, 1, 3, 5)
                 .reshape(B, P, Cpp))
    # row 0 reserved for the cls token, tail rows are sequence padding
    patches = jnp.pad(patches, ((0, 0), (1, S_pad - S), (0, 0)))

    # cls token + positional embedding folded into one resident [S_pad, D] table
    cls_pos = jnp.pad(params["pos_embed"].reshape(S, D), ((0, S_pad - S), (0, 0)))
    cls_pos = cls_pos.at[0].add(params["cls_token"].reshape(D))

    weights = [
        params["patch_w"], params["patch_b"].reshape(1, D), cls_pos,
        params["ln1_g"], params["ln1_b"],
        params["qkv_w"], params["qkv_b"],
        params["proj_w"], params["proj_b"],
        params["ln2_g"], params["ln2_b"],
        params["fc1_w"], params["fc1_b"],
        params["fc2_w"], params["fc2_b"],
        params["ln_g"].reshape(1, D), params["ln_b"].reshape(1, D),
        params["pool_w"], params["pool_b"].reshape(1, D),
        params["cls3_w"], params["cls3_b"].reshape(1, NC),
    ]

    def resident(a):  # full array, VMEM-resident across the batch grid
        nd = a.ndim
        return pl.BlockSpec(a.shape, lambda b, _nd=nd: (0,) * _nd)

    kernel = functools.partial(
        _vit_fused_kernel,
        depth=depth, heads=heads, seq_len=S, seq_pad=S_pad, eps=eps)

    out = pl.pallas_call(
        kernel,
        out_shape=jax.ShapeDtypeStruct((B, 1, NC), jnp.float32),
        grid=(B,),
        in_specs=[pl.BlockSpec((1, S_pad, Cpp), lambda b: (b, 0, 0))]
                 + [resident(a) for a in weights],
        out_specs=pl.BlockSpec((1, 1, NC), lambda b: (b, 0, 0)),
        compiler_params=pltpu.CompilerParams(
            dimension_semantics=("parallel",)),   # v7x: batch across both TCs
    )(patches, *weights)
    return out.reshape(B, NC)


# ---------------------------------- main ------------------------------------

if __name__ == "__main__":
    key = jax.random.PRNGKey(0)
    k_param, k_x = jax.random.split(key)

    B, C, H, W = 2, 4, 16, 16
    num_classes = 8
    cfg = dict(patch=4, dim=32, heads=2, depth=2)

    params = init_params(
        k_param, in_chans=C, img_size=H, patch=cfg["patch"], dim=cfg["dim"],
        depth=cfg["depth"], heads=cfg["heads"], mlp_hidden=64,
        num_classes=num_classes)
    x = jax.random.normal(k_x, (B, C, H, W), dtype=jnp.float32)

    fwd = jax.jit(functools.partial(haframe_vit_forward, **cfg))
    out = fwd(params, x)
    out = jax.block_until_ready(out)
    assert out.shape == (B, num_classes)
    print("KERNEL_OK")
</pallas_src>

<mosaic_0001>
module attributes {stable_mosaic.version = 11 : i64} {
  func.func @_vit_fused_kernel(%arg0: i32, %arg1: memref<1x24x64xf32, #tpu.memory_space<vmem>>, %arg2: memref<64x32xf32, #tpu.memory_space<vmem>>, %arg3: memref<1x32xf32, #tpu.memory_space<vmem>>, %arg4: memref<24x32xf32, #tpu.memory_space<vmem>>, %arg5: memref<2x1x32xf32, #tpu.memory_space<vmem>>, %arg6: memref<2x1x32xf32, #tpu.memory_space<vmem>>, %arg7: memref<2x32x96xf32, #tpu.memory_space<vmem>>, %arg8: memref<2x1x96xf32, #tpu.memory_space<vmem>>, %arg9: memref<2x32x32xf32, #tpu.memory_space<vmem>>, %arg10: memref<2x1x32xf32, #tpu.memory_space<vmem>>, %arg11: memref<2x1x32xf32, #tpu.memory_space<vmem>>, %arg12: memref<2x1x32xf32, #tpu.memory_space<vmem>>, %arg13: memref<2x32x64xf32, #tpu.memory_space<vmem>>, %arg14: memref<2x1x64xf32, #tpu.memory_space<vmem>>, %arg15: memref<2x64x32xf32, #tpu.memory_space<vmem>>, %arg16: memref<2x1x32xf32, #tpu.memory_space<vmem>>, %arg17: memref<1x32xf32, #tpu.memory_space<vmem>>, %arg18: memref<1x32xf32, #tpu.memory_space<vmem>>, %arg19: memref<32x32xf32, #tpu.memory_space<vmem>>, %arg20: memref<1x32xf32, #tpu.memory_space<vmem>>, %arg21: memref<32x8xf32, #tpu.memory_space<vmem>>, %arg22: memref<1x8xf32, #tpu.memory_space<vmem>>, %arg23: memref<1x1x8xf32, #tpu.memory_space<vmem>>) attributes {dimension_semantics = [#tpu.dimension_semantics<parallel>], iteration_bounds = array<i64: 2>, scalar_prefetch = 0 : i64, scratch_operands = 0 : i64, tpu.core_type = #tpu.core_type<tc>, window_params = [{transform_indices = @transform_0, window_bounds = array<i64: 1, 24, 64>}, {pipeline_mode = #tpu.pipeline_mode<synchronous>, transform_indices = @transform_1, window_bounds = array<i64: 64, 32>}, {pipeline_mode = #tpu.pipeline_mode<synchronous>, transform_indices = @transform_2, window_bounds = array<i64: 1, 32>}, {pipeline_mode = #tpu.pipeline_mode<synchronous>, transform_indices = @transform_3, window_bounds = array<i64: 24, 32>}, {pipeline_mode = #tpu.pipeline_mode<synchronous>, transform_indices = @transform_4, window_bounds = array<i64: 2, 1, 32>}, {pipeline_mode = #tpu.pipeline_mode<synchronous>, transform_indices = @transform_5, window_bounds = array<i64: 2, 1, 32>}, {pipeline_mode = #tpu.pipeline_mode<synchronous>, transform_indices = @transform_6, window_bounds = array<i64: 2, 32, 96>}, {pipeline_mode = #tpu.pipeline_mode<synchronous>, transform_indices = @transform_7, window_bounds = array<i64: 2, 1, 96>}, {pipeline_mode = #tpu.pipeline_mode<synchronous>, transform_indices = @transform_8, window_bounds = array<i64: 2, 32, 32>}, {pipeline_mode = #tpu.pipeline_mode<synchronous>, transform_indices = @transform_9, window_bounds = array<i64: 2, 1, 32>}, {pipeline_mode = #tpu.pipeline_mode<synchronous>, transform_indices = @transform_10, window_bounds = array<i64: 2, 1, 32>}, {pipeline_mode = #tpu.pipeline_mode<synchronous>, transform_indices = @transform_11, window_bounds = array<i64: 2, 1, 32>}, {pipeline_mode = #tpu.pipeline_mode<synchronous>, transform_indices = @transform_12, window_bounds = array<i64: 2, 32, 64>}, {pipeline_mode = #tpu.pipeline_mode<synchronous>, transform_indices = @transform_13, window_bounds = array<i64: 2, 1, 64>}, {pipeline_mode = #tpu.pipeline_mode<synchronous>, transform_indices = @transform_14, window_bounds = array<i64: 2, 64, 32>}, {pipeline_mode = #tpu.pipeline_mode<synchronous>, transform_indices = @transform_15, window_bounds = array<i64: 2, 1, 32>}, {pipeline_mode = #tpu.pipeline_mode<synchronous>, transform_indices = @transform_16, window_bounds = array<i64: 1, 32>}, {pipeline_mode = #tpu.pipeline_mode<synchronous>, transform_indices = @transform_17, window_bounds = array<i64: 1, 32>}, {pipeline_mode = #tpu.pipeline_mode<synchronous>, transform_indices = @transform_18, window_bounds = array<i64: 32, 32>}, {pipeline_mode = #tpu.pipeline_mode<synchronous>, transform_indices = @transform_19, window_bounds = array<i64: 1, 32>}, {pipeline_mode = #tpu.pipeline_mode<synchronous>, transform_indices = @transform_20, window_bounds = array<i64: 32, 8>}, {pipeline_mode = #tpu.pipeline_mode<synchronous>, transform_indices = @transform_21, window_bounds = array<i64: 1, 8>}, {transform_indices = @transform_22, window_bounds = array<i64: 1, 1, 8>}]} {
    %c0 = arith.constant 0 : index
    %c0_0 = arith.constant 0 : index
    %c0_1 = arith.constant 0 : index
    %0 = vector.load %arg1[%c0, %c0_0, %c0_1] : memref<1x24x64xf32, #tpu.memory_space<vmem>>, vector<1x24x64xf32>
    %1 = vector.shape_cast %0 : vector<1x24x64xf32> to vector<24x64xf32>
    %c0_2 = arith.constant 0 : index
    %c0_3 = arith.constant 0 : index
    %2 = vector.load %arg2[%c0_2, %c0_3] : memref<64x32xf32, #tpu.memory_space<vmem>>, vector<64x32xf32>
    %cst = arith.constant dense<0.000000e+00> : vector<24x32xf32>
    %3 = tpu.matmul %1, %2, %cst {dimension_numbers = #tpu.dot_dimension_numbers<[1], [0], [0], [1], [0, 0, 1, 1], [], []>} : vector<24x64xf32>, vector<64x32xf32>, vector<24x32xf32> -> vector<24x32xf32>
    %c0_4 = arith.constant 0 : index
    %c0_5 = arith.constant 0 : index
    %4 = vector.load %arg3[%c0_4, %c0_5] : memref<1x32xf32, #tpu.memory_space<vmem>>, vector<1x32xf32>
    %5 = vector.broadcast %4 : vector<1x32xf32> to vector<24x32xf32>
    %6 = arith.addf %3, %5 : vector<24x32xf32>
    %7 = tpu.iota {dimensions = array<i32: 0>} : vector<24x1xi32>
    %c1_i32 = arith.constant 1 : i32
    %8 = vector.broadcast %c1_i32 : i32 to vector<24x1xi32>
    %9 = arith.cmpi sge, %7, %8 : vector<24x1xi32>
    %c17_i32 = arith.constant 17 : i32
    %10 = vector.broadcast %c17_i32 : i32 to vector<24x1xi32>
    %11 = arith.cmpi slt, %7, %10 : vector<24x1xi32>
    %12 = arith.andi %9, %11 : vector<24x1xi1>
    %cst_6 = arith.constant 0.000000e+00 : f32
    %13 = vector.shape_cast %12 : vector<24x1xi1> to vector<24x1xi1>
    %14 = vector.broadcast %13 : vector<24x1xi1> to vector<24x32xi1>
    %15 = vector.broadcast %cst_6 : f32 to vector<24x32xf32>
    %16 = arith.select %14, %6, %15 : vector<24x32xi1>, vector<24x32xf32>
    %c0_7 = arith.constant 0 : index
    %c0_8 = arith.constant 0 : index
    %17 = vector.load %arg4[%c0_7, %c0_8] : memref<24x32xf32, #tpu.memory_space<vmem>>, vector<24x32xf32>
    %18 = arith.addf %16, %17 : vector<24x32xf32>
    %19 = tpu.iota {dimensions = array<i32: 1>} : vector<1x24xi32>
    %c17_i32_9 = arith.constant 17 : i32
    %20 = vector.broadcast %c17_i32_9 : i32 to vector<1x24xi32>
    %21 = arith.cmpi slt, %19, %20 : vector<1x24xi32>
    %cst_10 = arith.constant 0.000000e+00 : f32
    %cst_11 = arith.constant -1.000000e+30 : f32
    %22 = vector.broadcast %cst_10 : f32 to vector<1x24xf32>
    %23 = vector.broadcast %cst_11 : f32 to vector<1x24xf32>
    %24 = arith.select %21, %22, %23 : vector<1x24xi1>, vector<1x24xf32>
    %c0_12 = arith.constant 0 : index
    %c0_13 = arith.constant 0 : index
    %c0_14 = arith.constant 0 : index
    %25 = vector.load %arg5[%c0_12, %c0_13, %c0_14] : memref<2x1x32xf32, #tpu.memory_space<vmem>>, vector<1x1x32xf32>
    %26 = vector.shape_cast %25 : vector<1x1x32xf32> to vector<1x32xf32>
    %c0_15 = arith.constant 0 : index
    %c0_16 = arith.constant 0 : index
    %c0_17 = arith.constant 0 : index
    %27 = vector.load %arg6[%c0_15, %c0_16, %c0_17] : memref<2x1x32xf32, #tpu.memory_space<vmem>>, vector<1x1x32xf32>
    %28 = vector.shape_cast %27 : vector<1x1x32xf32> to vector<1x32xf32>
    %cst_18 = arith.constant dense<0.000000e+00> : vector<24xf32>
    %29 = vector.multi_reduction <add>, %18, %cst_18 [1] : vector<24x32xf32> to vector<24xf32>
    %30 = vector.shape_cast %29 : vector<24xf32> to vector<24x1xf32>
    %cst_19 = arith.constant 3.200000e+01 : f32
    %31 = vector.broadcast %cst_19 : f32 to vector<24x1xf32>
    %32 = arith.divf %30, %31 : vector<24x1xf32>
    %33 = vector.broadcast %32 : vector<24x1xf32> to vector<24x32xf32>
    %34 = arith.subf %18, %33 : vector<24x32xf32>
    %35 = arith.mulf %34, %34 : vector<24x32xf32>
    %cst_20 = arith.constant dense<0.000000e+00> : vector<24xf32>
    %36 = vector.multi_reduction <add>, %35, %cst_20 [1] : vector<24x32xf32> to vector<24xf32>
    %37 = vector.shape_cast %36 : vector<24xf32> to vector<24x1xf32>
    %cst_21 = arith.constant 3.200000e+01 : f32
    %38 = vector.broadcast %cst_21 : f32 to vector<24x1xf32>
    %39 = arith.divf %37, %38 : vector<24x1xf32>
    %cst_22 = arith.constant 9.99999997E-7 : f32
    %40 = vector.broadcast %cst_22 : f32 to vector<24x1xf32>
    %41 = arith.addf %39, %40 : vector<24x1xf32>
    %42 = math.rsqrt %41 : vector<24x1xf32>
    %43 = vector.broadcast %42 : vector<24x1xf32> to vector<24x32xf32>
    %44 = arith.mulf %34, %43 : vector<24x32xf32>
    %45 = vector.broadcast %26 : vector<1x32xf32> to vector<24x32xf32>
    %46 = arith.mulf %44, %45 : vector<24x32xf32>
    %47 = vector.broadcast %28 : vector<1x32xf32> to vector<24x32xf32>
    %48 = arith.addf %46, %47 : vector<24x32xf32>
    %c0_23 = arith.constant 0 : index
    %c0_24 = arith.constant 0 : index
    %c0_25 = arith.constant 0 : index
    %49 = vector.load %arg7[%c0_23, %c0_24, %c0_25] : memref<2x32x96xf32, #tpu.memory_space<vmem>>, vector<1x32x96xf32>
    %50 = vector.shape_cast %49 : vector<1x32x96xf32> to vector<32x96xf32>
    %cst_26 = arith.constant dense<0.000000e+00> : vector<24x96xf32>
    %51 = tpu.matmul %48, %50, %cst_26 {dimension_numbers = #tpu.dot_dimension_numbers<[1], [0], [0], [1], [0, 0, 1, 1], [], []>} : vector<24x32xf32>, vector<32x96xf32>, vector<24x96xf32> -> vector<24x96xf32>
    %c0_27 = arith.constant 0 : index
    %c0_28 = arith.constant 0 : index
    %c0_29 = arith.constant 0 : index
    %52 = vector.load %arg8[%c0_27, %c0_28, %c0_29] : memref<2x1x96xf32, #tpu.memory_space<vmem>>, vector<1x1x96xf32>
    %53 = vector.shape_cast %52 : vector<1x1x96xf32> to vector<1x96xf32>
    %54 = vector.broadcast %53 : vector<1x96xf32> to vector<24x96xf32>
    %55 = arith.addf %51, %54 : vector<24x96xf32>
    %c0_30 = arith.constant 0 : index
    %c0_31 = arith.constant 0 : index
    %c0_32 = arith.constant 0 : index
    %56 = vector.load %arg9[%c0_30, %c0_31, %c0_32] : memref<2x32x32xf32, #tpu.memory_space<vmem>>, vector<1x32x32xf32>
    %57 = vector.shape_cast %56 : vector<1x32x32xf32> to vector<32x32xf32>
    %c0_33 = arith.constant 0 : index
    %c0_34 = arith.constant 0 : index
    %c0_35 = arith.constant 0 : index
    %58 = vector.load %arg10[%c0_33, %c0_34, %c0_35] : memref<2x1x32xf32, #tpu.memory_space<vmem>>, vector<1x1x32xf32>
    %59 = vector.shape_cast %58 : vector<1x1x32xf32> to vector<1x32xf32>
    %60 = vector.extract_strided_slice %55 {offsets = [0, 0], sizes = [24, 16], strides = [1, 1]} : vector<24x96xf32> to vector<24x16xf32>
    %61 = vector.extract_strided_slice %55 {offsets = [0, 32], sizes = [24, 16], strides = [1, 1]} : vector<24x96xf32> to vector<24x16xf32>
    %62 = vector.extract_strided_slice %55 {offsets = [0, 64], sizes = [24, 16], strides = [1, 1]} : vector<24x96xf32> to vector<24x16xf32>
    %cst_36 = arith.constant dense<0.000000e+00> : vector<24x24xf32>
    %63 = tpu.matmul %60, %61, %cst_36 {dimension_numbers = #tpu.dot_dimension_numbers<[1], [1], [0], [0], [0, 0, 1, 0], [], []>} : vector<24x16xf32>, vector<24x16xf32>, vector<24x24xf32> -> vector<24x24xf32>
    %cst_37 = arith.constant 2.500000e-01 : f32
    %64 = vector.broadcast %cst_37 : f32 to vector<24x24xf32>
    %65 = arith.mulf %63, %64 : vector<24x24xf32>
    %66 = vector.broadcast %24 : vector<1x24xf32> to vector<24x24xf32>
    %67 = arith.addf %65, %66 : vector<24x24xf32>
    %cst_38 = arith.constant dense<0xFF800000> : vector<24xf32>
    %68 = vector.multi_reduction <maximumf>, %67, %cst_38 [1] : vector<24x24xf32> to vector<24xf32>
    %69 = vector.shape_cast %68 : vector<24xf32> to vector<24x1xf32>
    %70 = vector.broadcast %69 : vector<24x1xf32> to vector<24x24xf32>
    %71 = arith.subf %67, %70 : vector<24x24xf32>
    %72 = math.exp %71 : vector<24x24xf32>
    %cst_39 = arith.constant dense<0.000000e+00> : vector<24xf32>
    %73 = vector.multi_reduction <add>, %72, %cst_39 [1] : vector<24x24xf32> to vector<24xf32>
    %74 = vector.shape_cast %73 : vector<24xf32> to vector<24x1xf32>
    %75 = tpu.reciprocal %74 {approx = true} : vector<24x1xf32> -> vector<24x1xf32>
    %76 = vector.broadcast %75 : vector<24x1xf32> to vector<24x24xf32>
    %77 = arith.mulf %72, %76 : vector<24x24xf32>
    %cst_40 = arith.constant dense<0.000000e+00> : vector<24x16xf32>
    %78 = tpu.matmul %77, %62, %cst_40 {dimension_numbers = #tpu.dot_dimension_numbers<[1], [0], [0], [1], [0, 0, 1, 1], [], []>} : vector<24x24xf32>, vector<24x16xf32>, vector<24x16xf32> -> vector<24x16xf32>
    %79 = vector.extract_strided_slice %57 {offsets = [0, 0], sizes = [16, 32], strides = [1, 1]} : vector<32x32xf32> to vector<16x32xf32>
    %cst_41 = arith.constant dense<0.000000e+00> : vector<24x32xf32>
    %80 = tpu.matmul %78, %79, %cst_41 {dimension_numbers = #tpu.dot_dimension_numbers<[1], [0], [0], [1], [0, 0, 1, 1], [], []>} : vector<24x16xf32>, vector<16x32xf32>, vector<24x32xf32> -> vector<24x32xf32>
    %81 = vector.broadcast %59 : vector<1x32xf32> to vector<24x32xf32>
    %82 = arith.addf %81, %80 : vector<24x32xf32>
    %83 = vector.extract_strided_slice %55 {offsets = [0, 16], sizes = [24, 16], strides = [1, 1]} : vector<24x96xf32> to vector<24x16xf32>
    %84 = vector.extract_strided_slice %55 {offsets = [0, 48], sizes = [24, 16], strides = [1, 1]} : vector<24x96xf32> to vector<24x16xf32>
    %85 = vector.extract_strided_slice %55 {offsets = [0, 80], sizes = [24, 16], strides = [1, 1]} : vector<24x96xf32> to vector<24x16xf32>
    %cst_42 = arith.constant dense<0.000000e+00> : vector<24x24xf32>
    %86 = tpu.matmul %83, %84, %cst_42 {dimension_numbers = #tpu.dot_dimension_numbers<[1], [1], [0], [0], [0, 0, 1, 0], [], []>} : vector<24x16xf32>, vector<24x16xf32>, vector<24x24xf32> -> vector<24x24xf32>
    %cst_43 = arith.constant 2.500000e-01 : f32
    %87 = vector.broadcast %cst_43 : f32 to vector<24x24xf32>
    %88 = arith.mulf %86, %87 : vector<24x24xf32>
    %89 = vector.broadcast %24 : vector<1x24xf32> to vector<24x24xf32>
    %90 = arith.addf %88, %89 : vector<24x24xf32>
    %cst_44 = arith.constant dense<0xFF800000> : vector<24xf32>
    %91 = vector.multi_reduction <maximumf>, %90, %cst_44 [1] : vector<24x24xf32> to vector<24xf32>
    %92 = vector.shape_cast %91 : vector<24xf32> to vector<24x1xf32>
    %93 = vector.broadcast %92 : vector<24x1xf32> to vector<24x24xf32>
    %94 = arith.subf %90, %93 : vector<24x24xf32>
    %95 = math.exp %94 : vector<24x24xf32>
    %cst_45 = arith.constant dense<0.000000e+00> : vector<24xf32>
    %96 = vector.multi_reduction <add>, %95, %cst_45 [1] : vector<24x24xf32> to vector<24xf32>
    %97 = vector.shape_cast %96 : vector<24xf32> to vector<24x1xf32>
    %98 = tpu.reciprocal %97 {approx = true} : vector<24x1xf32> -> vector<24x1xf32>
    %99 = vector.broadcast %98 : vector<24x1xf32> to vector<24x24xf32>
    %100 = arith.mulf %95, %99 : vector<24x24xf32>
    %cst_46 = arith.constant dense<0.000000e+00> : vector<24x16xf32>
    %101 = tpu.matmul %100, %85, %cst_46 {dimension_numbers = #tpu.dot_dimension_numbers<[1], [0], [0], [1], [0, 0, 1, 1], [], []>} : vector<24x24xf32>, vector<24x16xf32>, vector<24x16xf32> -> vector<24x16xf32>
    %102 = vector.extract_strided_slice %57 {offsets = [16, 0], sizes = [16, 32], strides = [1, 1]} : vector<32x32xf32> to vector<16x32xf32>
    %cst_47 = arith.constant dense<0.000000e+00> : vector<24x32xf32>
    %103 = tpu.matmul %101, %102, %cst_47 {dimension_numbers = #tpu.dot_dimension_numbers<[1], [0], [0], [1], [0, 0, 1, 1], [], []>} : vector<24x16xf32>, vector<16x32xf32>, vector<24x32xf32> -> vector<24x32xf32>
    %104 = arith.addf %82, %103 : vector<24x32xf32>
    %105 = arith.addf %18, %104 : vector<24x32xf32>
    %c0_48 = arith.constant 0 : index
    %c0_49 = arith.constant 0 : index
    %c0_50 = arith.constant 0 : index
    %106 = vector.load %arg11[%c0_48, %c0_49, %c0_50] : memref<2x1x32xf32, #tpu.memory_space<vmem>>, vector<1x1x32xf32>
    %107 = vector.shape_cast %106 : vector<1x1x32xf32> to vector<1x32xf32>
    %c0_51 = arith.constant 0 : index
    %c0_52 = arith.constant 0 : index
    %c0_53 = arith.constant 0 : index
    %108 = vector.load %arg12[%c0_51, %c0_52, %c0_53] : memref<2x1x32xf32, #tpu.memory_space<vmem>>, vector<1x1x32xf32>
    %109 = vector.shape_cast %108 : vector<1x1x32xf32> to vector<1x32xf32>
    %cst_54 = arith.constant dense<0.000000e+00> : vector<24xf32>
    %110 = vector.multi_reduction <add>, %105, %cst_54 [1] : vector<24x32xf32> to vector<24xf32>
    %111 = vector.shape_cast %110 : vector<24xf32> to vector<24x1xf32>
    %cst_55 = arith.constant 3.200000e+01 : f32
    %112 = vector.broadcast %cst_55 : f32 to vector<24x1xf32>
    %113 = arith.divf %111, %112 : vector<24x1xf32>
    %114 = vector.broadcast %113 : vector<24x1xf32> to vector<24x32xf32>
    %115 = arith.subf %105, %114 : vector<24x32xf32>
    %116 = arith.mulf %115, %115 : vector<24x32xf32>
    %cst_56 = arith.constant dense<0.000000e+00> : vector<24xf32>
    %117 = vector.multi_reduction <add>, %116, %cst_56 [1] : vector<24x32xf32> to vector<24xf32>
    %118 = vector.shape_cast %117 : vector<24xf32> to vector<24x1xf32>
    %cst_57 = arith.constant 3.200000e+01 : f32
    %119 = vector.broadcast %cst_57 : f32 to vector<24x1xf32>
    %120 = arith.divf %118, %119 : vector<24x1xf32>
    %cst_58 = arith.constant 9.99999997E-7 : f32
    %121 = vector.broadcast %cst_58 : f32 to vector<24x1xf32>
    %122 = arith.addf %120, %121 : vector<24x1xf32>
    %123 = math.rsqrt %122 : vector<24x1xf32>
    %124 = vector.broadcast %123 : vector<24x1xf32> to vector<24x32xf32>
    %125 = arith.mulf %115, %124 : vector<24x32xf32>
    %126 = vector.broadcast %107 : vector<1x32xf32> to vector<24x32xf32>
    %127 = arith.mulf %125, %126 : vector<24x32xf32>
    %128 = vector.broadcast %109 : vector<1x32xf32> to vector<24x32xf32>
    %129 = arith.addf %127, %128 : vector<24x32xf32>
    %c0_59 = arith.constant 0 : index
    %c0_60 = arith.constant 0 : index
    %c0_61 = arith.constant 0 : index
    %130 = vector.load %arg13[%c0_59, %c0_60, %c0_61] : memref<2x32x64xf32, #tpu.memory_space<vmem>>, vector<1x32x64xf32>
    %131 = vector.shape_cast %130 : vector<1x32x64xf32> to vector<32x64xf32>
    %cst_62 = arith.constant dense<0.000000e+00> : vector<24x64xf32>
    %132 = tpu.matmul %129, %131, %cst_62 {dimension_numbers = #tpu.dot_dimension_numbers<[1], [0], [0], [1], [0, 0, 1, 1], [], []>} : vector<24x32xf32>, vector<32x64xf32>, vector<24x64xf32> -> vector<24x64xf32>
    %c0_63 = arith.constant 0 : index
    %c0_64 = arith.constant 0 : index
    %c0_65 = arith.constant 0 : index
    %133 = vector.load %arg14[%c0_63, %c0_64, %c0_65] : memref<2x1x64xf32, #tpu.memory_space<vmem>>, vector<1x1x64xf32>
    %134 = vector.shape_cast %133 : vector<1x1x64xf32> to vector<1x64xf32>
    %135 = vector.broadcast %134 : vector<1x64xf32> to vector<24x64xf32>
    %136 = arith.addf %132, %135 : vector<24x64xf32>
    %137 = arith.mulf %136, %136 : vector<24x64xf32>
    %138 = arith.mulf %136, %137 : vector<24x64xf32>
    %cst_66 = arith.constant 4.471500e-02 : f32
    %139 = vector.broadcast %cst_66 : f32 to vector<24x64xf32>
    %140 = arith.mulf %139, %138 : vector<24x64xf32>
    %141 = arith.addf %136, %140 : vector<24x64xf32>
    %cst_67 = arith.constant 0.797884583 : f32
    %142 = vector.broadcast %cst_67 : f32 to vector<24x64xf32>
    %143 = arith.mulf %142, %141 : vector<24x64xf32>
    %144 = math.tanh %143 : vector<24x64xf32>
    %cst_68 = arith.constant 1.000000e+00 : f32
    %145 = vector.broadcast %cst_68 : f32 to vector<24x64xf32>
    %146 = arith.addf %145, %144 : vector<24x64xf32>
    %cst_69 = arith.constant 5.000000e-01 : f32
    %147 = vector.broadcast %cst_69 : f32 to vector<24x64xf32>
    %148 = arith.mulf %147, %146 : vector<24x64xf32>
    %149 = arith.mulf %136, %148 : vector<24x64xf32>
    %c0_70 = arith.constant 0 : index
    %c0_71 = arith.constant 0 : index
    %c0_72 = arith.constant 0 : index
    %150 = vector.load %arg15[%c0_70, %c0_71, %c0_72] : memref<2x64x32xf32, #tpu.memory_space<vmem>>, vector<1x64x32xf32>
    %151 = vector.shape_cast %150 : vector<1x64x32xf32> to vector<64x32xf32>
    %cst_73 = arith.constant dense<0.000000e+00> : vector<24x32xf32>
    %152 = tpu.matmul %149, %151, %cst_73 {dimension_numbers = #tpu.dot_dimension_numbers<[1], [0], [0], [1], [0, 0, 1, 1], [], []>} : vector<24x64xf32>, vector<64x32xf32>, vector<24x32xf32> -> vector<24x32xf32>
    %c0_74 = arith.constant 0 : index
    %c0_75 = arith.constant 0 : index
    %c0_76 = arith.constant 0 : index
    %153 = vector.load %arg16[%c0_74, %c0_75, %c0_76] : memref<2x1x32xf32, #tpu.memory_space<vmem>>, vector<1x1x32xf32>
    %154 = vector.shape_cast %153 : vector<1x1x32xf32> to vector<1x32xf32>
    %155 = vector.broadcast %154 : vector<1x32xf32> to vector<24x32xf32>
    %156 = arith.addf %152, %155 : vector<24x32xf32>
    %157 = arith.addf %105, %156 : vector<24x32xf32>
    %c1 = arith.constant 1 : index
    %c0_77 = arith.constant 0 : index
    %c0_78 = arith.constant 0 : index
    %158 = vector.load %arg5[%c1, %c0_77, %c0_78] : memref<2x1x32xf32, #tpu.memory_space<vmem>>, vector<1x1x32xf32>
    %159 = vector.shape_cast %158 : vector<1x1x32xf32> to vector<1x32xf32>
    %c1_79 = arith.constant 1 : index
    %c0_80 = arith.constant 0 : index
    %c0_81 = arith.constant 0 : index
    %160 = vector.load %arg6[%c1_79, %c0_80, %c0_81] : memref<2x1x32xf32, #tpu.memory_space<vmem>>, vector<1x1x32xf32>
    %161 = vector.shape_cast %160 : vector<1x1x32xf32> to vector<1x32xf32>
    %cst_82 = arith.constant dense<0.000000e+00> : vector<24xf32>
    %162 = vector.multi_reduction <add>, %157, %cst_82 [1] : vector<24x32xf32> to vector<24xf32>
    %163 = vector.shape_cast %162 : vector<24xf32> to vector<24x1xf32>
    %cst_83 = arith.constant 3.200000e+01 : f32
    %164 = vector.broadcast %cst_83 : f32 to vector<24x1xf32>
    %165 = arith.divf %163, %164 : vector<24x1xf32>
    %166 = vector.broadcast %165 : vector<24x1xf32> to vector<24x32xf32>
    %167 = arith.subf %157, %166 : vector<24x32xf32>
    %168 = arith.mulf %167, %167 : vector<24x32xf32>
    %cst_84 = arith.constant dense<0.000000e+00> : vector<24xf32>
    %169 = vector.multi_reduction <add>, %168, %cst_84 [1] : vector<24x32xf32> to vector<24xf32>
    %170 = vector.shape_cast %169 : vector<24xf32> to vector<24x1xf32>
    %cst_85 = arith.constant 3.200000e+01 : f32
    %171 = vector.broadcast %cst_85 : f32 to vector<24x1xf32>
    %172 = arith.divf %170, %171 : vector<24x1xf32>
    %cst_86 = arith.constant 9.99999997E-7 : f32
    %173 = vector.broadcast %cst_86 : f32 to vector<24x1xf32>
    %174 = arith.addf %172, %173 : vector<24x1xf32>
    %175 = math.rsqrt %174 : vector<24x1xf32>
    %176 = vector.broadcast %175 : vector<24x1xf32> to vector<24x32xf32>
    %177 = arith.mulf %167, %176 : vector<24x32xf32>
    %178 = vector.broadcast %159 : vector<1x32xf32> to vector<24x32xf32>
    %179 = arith.mulf %177, %178 : vector<24x32xf32>
    %180 = vector.broadcast %161 : vector<1x32xf32> to vector<24x32xf32>
    %181 = arith.addf %179, %180 : vector<24x32xf32>
    %c1_87 = arith.constant 1 : index
    %c0_88 = arith.constant 0 : index
    %c0_89 = arith.constant 0 : index
    %182 = vector.load %arg7[%c1_87, %c0_88, %c0_89] : memref<2x32x96xf32, #tpu.memory_space<vmem>>, vector<1x32x96xf32>
    %183 = vector.shape_cast %182 : vector<1x32x96xf32> to vector<32x96xf32>
    %cst_90 = arith.constant dense<0.000000e+00> : vector<24x96xf32>
    %184 = tpu.matmul %181, %183, %cst_90 {dimension_numbers = #tpu.dot_dimension_numbers<[1], [0], [0], [1], [0, 0, 1, 1], [], []>} : vector<24x32xf32>, vector<32x96xf32>, vector<24x96xf32> -> vector<24x96xf32>
    %c1_91 = arith.constant 1 : index
    %c0_92 = arith.constant 0 : index
    %c0_93 = arith.constant 0 : index
    %185 = vector.load %arg8[%c1_91, %c0_92, %c0_93] : memref<2x1x96xf32, #tpu.memory_space<vmem>>, vector<1x1x96xf32>
    %186 = vector.shape_cast %185 : vector<1x1x96xf32> to vector<1x96xf32>
    %187 = vector.broadcast %186 : vector<1x96xf32> to vector<24x96xf32>
    %188 = arith.addf %184, %187 : vector<24x96xf32>
    %c1_94 = arith.constant 1 : index
    %c0_95 = arith.constant 0 : index
    %c0_96 = arith.constant 0 : index
    %189 = vector.load %arg9[%c1_94, %c0_95, %c0_96] : memref<2x32x32xf32, #tpu.memory_space<vmem>>, vector<1x32x32xf32>
    %190 = vector.shape_cast %189 : vector<1x32x32xf32> to vector<32x32xf32>
    %c1_97 = arith.constant 1 : index
    %c0_98 = arith.constant 0 : index
    %c0_99 = arith.constant 0 : index
    %191 = vector.load %arg10[%c1_97, %c0_98, %c0_99] : memref<2x1x32xf32, #tpu.memory_space<vmem>>, vector<1x1x32xf32>
    %192 = vector.shape_cast %191 : vector<1x1x32xf32> to vector<1x32xf32>
    %193 = vector.extract_strided_slice %188 {offsets = [0, 0], sizes = [24, 16], strides = [1, 1]} : vector<24x96xf32> to vector<24x16xf32>
    %194 = vector.extract_strided_slice %188 {offsets = [0, 32], sizes = [24, 16], strides = [1, 1]} : vector<24x96xf32> to vector<24x16xf32>
    %195 = vector.extract_strided_slice %188 {offsets = [0, 64], sizes = [24, 16], strides = [1, 1]} : vector<24x96xf32> to vector<24x16xf32>
    %cst_100 = arith.constant dense<0.000000e+00> : vector<24x24xf32>
    %196 = tpu.matmul %193, %194, %cst_100 {dimension_numbers = #tpu.dot_dimension_numbers<[1], [1], [0], [0], [0, 0, 1, 0], [], []>} : vector<24x16xf32>, vector<24x16xf32>, vector<24x24xf32> -> vector<24x24xf32>
    %cst_101 = arith.constant 2.500000e-01 : f32
    %197 = vector.broadcast %cst_101 : f32 to vector<24x24xf32>
    %198 = arith.mulf %196, %197 : vector<24x24xf32>
    %199 = vector.broadcast %24 : vector<1x24xf32> to vector<24x24xf32>
    %200 = arith.addf %198, %199 : vector<24x24xf32>
    %cst_102 = arith.constant dense<0xFF800000> : vector<24xf32>
    %201 = vector.multi_reduction <maximumf>, %200, %cst_102 [1] : vector<24x24xf32> to vector<24xf32>
    %202 = vector.shape_cast %201 : vector<24xf32> to vector<24x1xf32>
    %203 = vector.broadcast %202 : vector<24x1xf32> to vector<24x24xf32>
    %204 = arith.subf %200, %203 : vector<24x24xf32>
    %205 = math.exp %204 : vector<24x24xf32>
    %cst_103 = arith.constant dense<0.000000e+00> : vector<24xf32>
    %206 = vector.multi_reduction <add>, %205, %cst_103 [1] : vector<24x24xf32> to vector<24xf32>
    %207 = vector.shape_cast %206 : vector<24xf32> to vector<24x1xf32>
    %208 = tpu.reciprocal %207 {approx = true} : vector<24x1xf32> -> vector<24x1xf32>
    %209 = vector.broadcast %208 : vector<24x1xf32> to vector<24x24xf32>
    %210 = arith.mulf %205, %209 : vector<24x24xf32>
    %cst_104 = arith.constant dense<0.000000e+00> : vector<24x16xf32>
    %211 = tpu.matmul %210, %195, %cst_104 {dimension_numbers = #tpu.dot_dimension_numbers<[1], [0], [0], [1], [0, 0, 1, 1], [], []>} : vector<24x24xf32>, vector<24x16xf32>, vector<24x16xf32> -> vector<24x16xf32>
    %212 = vector.extract_strided_slice %190 {offsets = [0, 0], sizes = [16, 32], strides = [1, 1]} : vector<32x32xf32> to vector<16x32xf32>
    %cst_105 = arith.constant dense<0.000000e+00> : vector<24x32xf32>
    %213 = tpu.matmul %211, %212, %cst_105 {dimension_numbers = #tpu.dot_dimension_numbers<[1], [0], [0], [1], [0, 0, 1, 1], [], []>} : vector<24x16xf32>, vector<16x32xf32>, vector<24x32xf32> -> vector<24x32xf32>
    %214 = vector.broadcast %192 : vector<1x32xf32> to vector<24x32xf32>
    %215 = arith.addf %214, %213 : vector<24x32xf32>
    %216 = vector.extract_strided_slice %188 {offsets = [0, 16], sizes = [24, 16], strides = [1, 1]} : vector<24x96xf32> to vector<24x16xf32>
    %217 = vector.extract_strided_slice %188 {offsets = [0, 48], sizes = [24, 16], strides = [1, 1]} : vector<24x96xf32> to vector<24x16xf32>
    %218 = vector.extract_strided_slice %188 {offsets = [0, 80], sizes = [24, 16], strides = [1, 1]} : vector<24x96xf32> to vector<24x16xf32>
    %cst_106 = arith.constant dense<0.000000e+00> : vector<24x24xf32>
    %219 = tpu.matmul %216, %217, %cst_106 {dimension_numbers = #tpu.dot_dimension_numbers<[1], [1], [0], [0], [0, 0, 1, 0], [], []>} : vector<24x16xf32>, vector<24x16xf32>, vector<24x24xf32> -> vector<24x24xf32>
    %cst_107 = arith.constant 2.500000e-01 : f32
    %220 = vector.broadcast %cst_107 : f32 to vector<24x24xf32>
    %221 = arith.mulf %219, %220 : vector<24x24xf32>
    %222 = vector.broadcast %24 : vector<1x24xf32> to vector<24x24xf32>
    %223 = arith.addf %221, %222 : vector<24x24xf32>
    %cst_108 = arith.constant dense<0xFF800000> : vector<24xf32>
    %224 = vector.multi_reduction <maximumf>, %223, %cst_108 [1] : vector<24x24xf32> to vector<24xf32>
    %225 = vector.shape_cast %224 : vector<24xf32> to vector<24x1xf32>
    %226 = vector.broadcast %225 : vector<24x1xf32> to vector<24x24xf32>
    %227 = arith.subf %223, %226 : vector<24x24xf32>
    %228 = math.exp %227 : vector<24x24xf32>
    %cst_109 = arith.constant dense<0.000000e+00> : vector<24xf32>
    %229 = vector.multi_reduction <add>, %228, %cst_109 [1] : vector<24x24xf32> to vector<24xf32>
    %230 = vector.shape_cast %229 : vector<24xf32> to vector<24x1xf32>
    %231 = tpu.reciprocal %230 {approx = true} : vector<24x1xf32> -> vector<24x1xf32>
    %232 = vector.broadcast %231 : vector<24x1xf32> to vector<24x24xf32>
    %233 = arith.mulf %228, %232 : vector<24x24xf32>
    %cst_110 = arith.constant dense<0.000000e+00> : vector<24x16xf32>
    %234 = tpu.matmul %233, %218, %cst_110 {dimension_numbers = #tpu.dot_dimension_numbers<[1], [0], [0], [1], [0, 0, 1, 1], [], []>} : vector<24x24xf32>, vector<24x16xf32>, vector<24x16xf32> -> vector<24x16xf32>
    %235 = vector.extract_strided_slice %190 {offsets = [16, 0], sizes = [16, 32], strides = [1, 1]} : vector<32x32xf32> to vector<16x32xf32>
    %cst_111 = arith.constant dense<0.000000e+00> : vector<24x32xf32>
    %236 = tpu.matmul %234, %235, %cst_111 {dimension_numbers = #tpu.dot_dimension_numbers<[1], [0], [0], [1], [0, 0, 1, 1], [], []>} : vector<24x16xf32>, vector<16x32xf32>, vector<24x32xf32> -> vector<24x32xf32>
    %237 = arith.addf %215, %236 : vector<24x32xf32>
    %238 = arith.addf %157, %237 : vector<24x32xf32>
    %c1_112 = arith.constant 1 : index
    %c0_113 = arith.constant 0 : index
    %c0_114 = arith.constant 0 : index
    %239 = vector.load %arg11[%c1_112, %c0_113, %c0_114] : memref<2x1x32xf32, #tpu.memory_space<vmem>>, vector<1x1x32xf32>
    %240 = vector.shape_cast %239 : vector<1x1x32xf32> to vector<1x32xf32>
    %c1_115 = arith.constant 1 : index
    %c0_116 = arith.constant 0 : index
    %c0_117 = arith.constant 0 : index
    %241 = vector.load %arg12[%c1_115, %c0_116, %c0_117] : memref<2x1x32xf32, #tpu.memory_space<vmem>>, vector<1x1x32xf32>
    %242 = vector.shape_cast %241 : vector<1x1x32xf32> to vector<1x32xf32>
    %cst_118 = arith.constant dense<0.000000e+00> : vector<24xf32>
    %243 = vector.multi_reduction <add>, %238, %cst_118 [1] : vector<24x32xf32> to vector<24xf32>
    %244 = vector.shape_cast %243 : vector<24xf32> to vector<24x1xf32>
    %cst_119 = arith.constant 3.200000e+01 : f32
    %245 = vector.broadcast %cst_119 : f32 to vector<24x1xf32>
    %246 = arith.divf %244, %245 : vector<24x1xf32>
    %247 = vector.broadcast %246 : vector<24x1xf32> to vector<24x32xf32>
    %248 = arith.subf %238, %247 : vector<24x32xf32>
    %249 = arith.mulf %248, %248 : vector<24x32xf32>
    %cst_120 = arith.constant dense<0.000000e+00> : vector<24xf32>
    %250 = vector.multi_reduction <add>, %249, %cst_120 [1] : vector<24x32xf32> to vector<24xf32>
    %251 = vector.shape_cast %250 : vector<24xf32> to vector<24x1xf32>
    %cst_121 = arith.constant 3.200000e+01 : f32
    %252 = vector.broadcast %cst_121 : f32 to vector<24x1xf32>
    %253 = arith.divf %251, %252 : vector<24x1xf32>
    %cst_122 = arith.constant 9.99999997E-7 : f32
    %254 = vector.broadcast %cst_122 : f32 to vector<24x1xf32>
    %255 = arith.addf %253, %254 : vector<24x1xf32>
    %256 = math.rsqrt %255 : vector<24x1xf32>
    %257 = vector.broadcast %256 : vector<24x1xf32> to vector<24x32xf32>
    %258 = arith.mulf %248, %257 : vector<24x32xf32>
    %259 = vector.broadcast %240 : vector<1x32xf32> to vector<24x32xf32>
    %260 = arith.mulf %258, %259 : vector<24x32xf32>
    %261 = vector.broadcast %242 : vector<1x32xf32> to vector<24x32xf32>
    %262 = arith.addf %260, %261 : vector<24x32xf32>
    %c1_123 = arith.constant 1 : index
    %c0_124 = arith.constant 0 : index
    %c0_125 = arith.constant 0 : index
    %263 = vector.load %arg13[%c1_123, %c0_124, %c0_125] : memref<2x32x64xf32, #tpu.memory_space<vmem>>, vector<1x32x64xf32>
    %264 = vector.shape_cast %263 : vector<1x32x64xf32> to vector<32x64xf32>
    %cst_126 = arith.constant dense<0.000000e+00> : vector<24x64xf32>
    %265 = tpu.matmul %262, %264, %cst_126 {dimension_numbers = #tpu.dot_dimension_numbers<[1], [0], [0], [1], [0, 0, 1, 1], [], []>} : vector<24x32xf32>, vector<32x64xf32>, vector<24x64xf32> -> vector<24x64xf32>
    %c1_127 = arith.constant 1 : index
    %c0_128 = arith.constant 0 : index
    %c0_129 = arith.constant 0 : index
    %266 = vector.load %arg14[%c1_127, %c0_128, %c0_129] : memref<2x1x64xf32, #tpu.memory_space<vmem>>, vector<1x1x64xf32>
    %267 = vector.shape_cast %266 : vector<1x1x64xf32> to vector<1x64xf32>
    %268 = vector.broadcast %267 : vector<1x64xf32> to vector<24x64xf32>
    %269 = arith.addf %265, %268 : vector<24x64xf32>
    %270 = arith.mulf %269, %269 : vector<24x64xf32>
    %271 = arith.mulf %269, %270 : vector<24x64xf32>
    %cst_130 = arith.constant 4.471500e-02 : f32
    %272 = vector.broadcast %cst_130 : f32 to vector<24x64xf32>
    %273 = arith.mulf %272, %271 : vector<24x64xf32>
    %274 = arith.addf %269, %273 : vector<24x64xf32>
    %cst_131 = arith.constant 0.797884583 : f32
    %275 = vector.broadcast %cst_131 : f32 to vector<24x64xf32>
    %276 = arith.mulf %275, %274 : vector<24x64xf32>
    %277 = math.tanh %276 : vector<24x64xf32>
    %cst_132 = arith.constant 1.000000e+00 : f32
    %278 = vector.broadcast %cst_132 : f32 to vector<24x64xf32>
    %279 = arith.addf %278, %277 : vector<24x64xf32>
    %cst_133 = arith.constant 5.000000e-01 : f32
    %280 = vector.broadcast %cst_133 : f32 to vector<24x64xf32>
    %281 = arith.mulf %280, %279 : vector<24x64xf32>
    %282 = arith.mulf %269, %281 : vector<24x64xf32>
    %c1_134 = arith.constant 1 : index
    %c0_135 = arith.constant 0 : index
    %c0_136 = arith.constant 0 : index
    %283 = vector.load %arg15[%c1_134, %c0_135, %c0_136] : memref<2x64x32xf32, #tpu.memory_space<vmem>>, vector<1x64x32xf32>
    %284 = vector.shape_cast %283 : vector<1x64x32xf32> to vector<64x32xf32>
    %cst_137 = arith.constant dense<0.000000e+00> : vector<24x32xf32>
    %285 = tpu.matmul %282, %284, %cst_137 {dimension_numbers = #tpu.dot_dimension_numbers<[1], [0], [0], [1], [0, 0, 1, 1], [], []>} : vector<24x64xf32>, vector<64x32xf32>, vector<24x32xf32> -> vector<24x32xf32>
    %c1_138 = arith.constant 1 : index
    %c0_139 = arith.constant 0 : index
    %c0_140 = arith.constant 0 : index
    %286 = vector.load %arg16[%c1_138, %c0_139, %c0_140] : memref<2x1x32xf32, #tpu.memory_space<vmem>>, vector<1x1x32xf32>
    %287 = vector.shape_cast %286 : vector<1x1x32xf32> to vector<1x32xf32>
    %288 = vector.broadcast %287 : vector<1x32xf32> to vector<24x32xf32>
    %289 = arith.addf %285, %288 : vector<24x32xf32>
    %290 = arith.addf %238, %289 : vector<24x32xf32>
    %c0_141 = arith.constant 0 : index
    %c0_142 = arith.constant 0 : index
    %291 = vector.load %arg17[%c0_141, %c0_142] : memref<1x32xf32, #tpu.memory_space<vmem>>, vector<1x32xf32>
    %c0_143 = arith.constant 0 : index
    %c0_144 = arith.constant 0 : index
    %292 = vector.load %arg18[%c0_143, %c0_144] : memref<1x32xf32, #tpu.memory_space<vmem>>, vector<1x32xf32>
    %cst_145 = arith.constant dense<0.000000e+00> : vector<24xf32>
    %293 = vector.multi_reduction <add>, %290, %cst_145 [1] : vector<24x32xf32> to vector<24xf32>
    %294 = vector.shape_cast %293 : vector<24xf32> to vector<24x1xf32>
    %cst_146 = arith.constant 3.200000e+01 : f32
    %295 = vector.broadcast %cst_146 : f32 to vector<24x1xf32>
    %296 = arith.divf %294, %295 : vector<24x1xf32>
    %297 = vector.broadcast %296 : vector<24x1xf32> to vector<24x32xf32>
    %298 = arith.subf %290, %297 : vector<24x32xf32>
    %299 = arith.mulf %298, %298 : vector<24x32xf32>
    %cst_147 = arith.constant dense<0.000000e+00> : vector<24xf32>
    %300 = vector.multi_reduction <add>, %299, %cst_147 [1] : vector<24x32xf32> to vector<24xf32>
    %301 = vector.shape_cast %300 : vector<24xf32> to vector<24x1xf32>
    %cst_148 = arith.constant 3.200000e+01 : f32
    %302 = vector.broadcast %cst_148 : f32 to vector<24x1xf32>
    %303 = arith.divf %301, %302 : vector<24x1xf32>
    %cst_149 = arith.constant 9.99999997E-7 : f32
    %304 = vector.broadcast %cst_149 : f32 to vector<24x1xf32>
    %305 = arith.addf %303, %304 : vector<24x1xf32>
    %306 = math.rsqrt %305 : vector<24x1xf32>
    %307 = vector.broadcast %306 : vector<24x1xf32> to vector<24x32xf32>
    %308 = arith.mulf %298, %307 : vector<24x32xf32>
    %309 = vector.broadcast %291 : vector<1x32xf32> to vector<24x32xf32>
    %310 = arith.mulf %308, %309 : vector<24x32xf32>
    %311 = vector.broadcast %292 : vector<1x32xf32> to vector<24x32xf32>
    %312 = arith.addf %310, %311 : vector<24x32xf32>
    %313 = vector.extract_strided_slice %312 {offsets = [0, 0], sizes = [1, 32], strides = [1, 1]} : vector<24x32xf32> to vector<1x32xf32>
    %c0_150 = arith.constant 0 : index
    %c0_151 = arith.constant 0 : index
    %314 = vector.load %arg19[%c0_150, %c0_151] : memref<32x32xf32, #tpu.memory_space<vmem>>, vector<32x32xf32>
    %cst_152 = arith.constant dense<0.000000e+00> : vector<1x32xf32>
    %315 = tpu.matmul %313, %314, %cst_152 {dimension_numbers = #tpu.dot_dimension_numbers<[1], [0], [0], [1], [0, 0, 1, 1], [], []>} : vector<1x32xf32>, vector<32x32xf32>, vector<1x32xf32> -> vector<1x32xf32>
    %c0_153 = arith.constant 0 : index
    %c0_154 = arith.constant 0 : index
    %316 = vector.load %arg20[%c0_153, %c0_154] : memref<1x32xf32, #tpu.memory_space<vmem>>, vector<1x32xf32>
    %317 = arith.addf %315, %316 : vector<1x32xf32>
    %318 = math.tanh %317 : vector<1x32xf32>
    %c0_155 = arith.constant 0 : index
    %c0_156 = arith.constant 0 : index
    %319 = vector.load %arg21[%c0_155, %c0_156] : memref<32x8xf32, #tpu.memory_space<vmem>>, vector<32x8xf32>
    %cst_157 = arith.constant dense<0.000000e+00> : vector<1x8xf32>
    %320 = tpu.matmul %318, %319, %cst_157 {dimension_numbers = #tpu.dot_dimension_numbers<[1], [0], [0], [1], [0, 0, 1, 1], [], []>} : vector<1x32xf32>, vector<32x8xf32>, vector<1x8xf32> -> vector<1x8xf32>
    %c0_158 = arith.constant 0 : index
    %c0_159 = arith.constant 0 : index
    %321 = vector.load %arg22[%c0_158, %c0_159] : memref<1x8xf32, #tpu.memory_space<vmem>>, vector<1x8xf32>
    %322 = arith.addf %320, %321 : vector<1x8xf32>
    %c0_160 = arith.constant 0 : index
    %c0_161 = arith.constant 0 : index
    %c0_162 = arith.constant 0 : index
    %323 = vector.load %arg23[%c0_160, %c0_161, %c0_162] : memref<1x1x8xf32, #tpu.memory_space<vmem>>, vector<1x1x8xf32>
    %324 = vector.shape_cast %323 : vector<1x1x8xf32> to vector<1x8xf32>
    %325 = vector.shape_cast %322 : vector<1x8xf32> to vector<1x1x8xf32>
    tpu.vector_store %arg23[%c0_160, %c0_161, %c0_162], %325 {strides = array<i32>} : memref<1x1x8xf32, #tpu.memory_space<vmem>>, vector<1x1x8xf32>,
    return
  }
  func.func @transform_0(%arg0: i32) -> (i32, i32, i32) {
    %c0_i32 = arith.constant 0 : i32
    %c0_i32_0 = arith.constant 0 : i32
    %c0_i32_1 = arith.constant 0 : i32
    return %arg0, %c0_i32, %c0_i32_0 : i32, i32, i32
  }
  func.func @transform_1(%arg0: i32) -> (i32, i32) {
    %c0_i32 = arith.constant 0 : i32
    %c0_i32_0 = arith.constant 0 : i32
    %c0_i32_1 = arith.constant 0 : i32
    return %c0_i32, %c0_i32_0 : i32, i32
  }
  func.func @transform_2(%arg0: i32) -> (i32, i32) {
    %c0_i32 = arith.constant 0 : i32
    %c0_i32_0 = arith.constant 0 : i32
    %c0_i32_1 = arith.constant 0 : i32
    return %c0_i32, %c0_i32_0 : i32, i32
  }
  func.func @transform_3(%arg0: i32) -> (i32, i32) {
    %c0_i32 = arith.constant 0 : i32
    %c0_i32_0 = arith.constant 0 : i32
    %c0_i32_1 = arith.constant 0 : i32
    return %c0_i32, %c0_i32_0 : i32, i32
  }
  func.func @transform_4(%arg0: i32) -> (i32, i32, i32) {
    %c0_i32 = arith.constant 0 : i32
    %c0_i32_0 = arith.constant 0 : i32
    %c0_i32_1 = arith.constant 0 : i32
    %c0_i32_2 = arith.constant 0 : i32
    return %c0_i32, %c0_i32_0, %c0_i32_1 : i32, i32, i32
  }
  func.func @transform_5(%arg0: i32) -> (i32, i32, i32) {
    %c0_i32 = arith.constant 0 : i32
    %c0_i32_0 = arith.constant 0 : i32
    %c0_i32_1 = arith.constant 0 : i32
    %c0_i32_2 = arith.constant 0 : i32
    return %c0_i32, %c0_i32_0, %c0_i32_1 : i32, i32, i32
  }
  func.func @transform_6(%arg0: i32) -> (i32, i32, i32) {
    %c0_i32 = arith.constant 0 : i32
    %c0_i32_0 = arith.constant 0 : i32
    %c0_i32_1 = arith.constant 0 : i32
    %c0_i32_2 = arith.constant 0 : i32
    return %c0_i32, %c0_i32_0, %c0_i32_1 : i32, i32, i32
  }
  func.func @transform_7(%arg0: i32) -> (i32, i32, i32) {
    %c0_i32 = arith.constant 0 : i32
    %c0_i32_0 = arith.constant 0 : i32
    %c0_i32_1 = arith.constant 0 : i32
    %c0_i32_2 = arith.constant 0 : i32
    return %c0_i32, %c0_i32_0, %c0_i32_1 : i32, i32, i32
  }
  func.func @transform_8(%arg0: i32) -> (i32, i32, i32) {
    %c0_i32 = arith.constant 0 : i32
    %c0_i32_0 = arith.constant 0 : i32
    %c0_i32_1 = arith.constant 0 : i32
    %c0_i32_2 = arith.constant 0 : i32
    return %c0_i32, %c0_i32_0, %c0_i32_1 : i32, i32, i32
  }
  func.func @transform_9(%arg0: i32) -> (i32, i32, i32) {
    %c0_i32 = arith.constant 0 : i32
    %c0_i32_0 = arith.constant 0 : i32
    %c0_i32_1 = arith.constant 0 : i32
    %c0_i32_2 = arith.constant 0 : i32
    return %c0_i32, %c0_i32_0, %c0_i32_1 : i32, i32, i32
  }
  func.func @transform_10(%arg0: i32) -> (i32, i32, i32) {
    %c0_i32 = arith.constant 0 : i32
    %c0_i32_0 = arith.constant 0 : i32
    %c0_i32_1 = arith.constant 0 : i32
    %c0_i32_2 = arith.constant 0 : i32
    return %c0_i32, %c0_i32_0, %c0_i32_1 : i32, i32, i32
  }
  func.func @transform_11(%arg0: i32) -> (i32, i32, i32) {
    %c0_i32 = arith.constant 0 : i32
    %c0_i32_0 = arith.constant 0 : i32
    %c0_i32_1 = arith.constant 0 : i32
    %c0_i32_2 = arith.constant 0 : i32
    return %c0_i32, %c0_i32_0, %c0_i32_1 : i32, i32, i32
  }
  func.func @transform_12(%arg0: i32) -> (i32, i32, i32) {
    %c0_i32 = arith.constant 0 : i32
    %c0_i32_0 = arith.constant 0 : i32
    %c0_i32_1 = arith.constant 0 : i32
    %c0_i32_2 = arith.constant 0 : i32
    return %c0_i32, %c0_i32_0, %c0_i32_1 : i32, i32, i32
  }
  func.func @transform_13(%arg0: i32) -> (i32, i32, i32) {
    %c0_i32 = arith.constant 0 : i32
    %c0_i32_0 = arith.constant 0 : i32
    %c0_i32_1 = arith.constant 0 : i32
    %c0_i32_2 = arith.constant 0 : i32
    return %c0_i32, %c0_i32_0, %c0_i32_1 : i32, i32, i32
  }
  func.func @transform_14(%arg0: i32) -> (i32, i32, i32) {
    %c0_i32 = arith.constant 0 : i32
    %c0_i32_0 = arith.constant 0 : i32
    %c0_i32_1 = arith.constant 0 : i32
    %c0_i32_2 = arith.constant 0 : i32
    return %c0_i32, %c0_i32_0, %c0_i32_1 : i32, i32, i32
  }
  func.func @transform_15(%arg0: i32) -> (i32, i32, i32) {
    %c0_i32 = arith.constant 0 : i32
    %c0_i32_0 = arith.constant 0 : i32
    %c0_i32_1 = arith.constant 0 : i32
    %c0_i32_2 = arith.constant 0 : i32
    return %c0_i32, %c0_i32_0, %c0_i32_1 : i32, i32, i32
  }
  func.func @transform_16(%arg0: i32) -> (i32, i32) {
    %c0_i32 = arith.constant 0 : i32
    %c0_i32_0 = arith.constant 0 : i32
    %c0_i32_1 = arith.constant 0 : i32
    return %c0_i32, %c0_i32_0 : i32, i32
  }
  func.func @transform_17(%arg0: i32) -> (i32, i32) {
    %c0_i32 = arith.constant 0 : i32
    %c0_i32_0 = arith.constant 0 : i32
    %c0_i32_1 = arith.constant 0 : i32
    return %c0_i32, %c0_i32_0 : i32, i32
  }
  func.func @transform_18(%arg0: i32) -> (i32, i32) {
    %c0_i32 = arith.constant 0 : i32
    %c0_i32_0 = arith.constant 0 : i32
    %c0_i32_1 = arith.constant 0 : i32
    return %c0_i32, %c0_i32_0 : i32, i32
  }
  func.func @transform_19(%arg0: i32) -> (i32, i32) {
    %c0_i32 = arith.constant 0 : i32
    %c0_i32_0 = arith.constant 0 : i32
    %c0_i32_1 = arith.constant 0 : i32
    return %c0_i32, %c0_i32_0 : i32, i32
  }
  func.func @transform_20(%arg0: i32) -> (i32, i32) {
    %c0_i32 = arith.constant 0 : i32
    %c0_i32_0 = arith.constant 0 : i32
    %c0_i32_1 = arith.constant 0 : i32
    return %c0_i32, %c0_i32_0 : i32, i32
  }
  func.func @transform_21(%arg0: i32) -> (i32, i32) {
    %c0_i32 = arith.constant 0 : i32
    %c0_i32_0 = arith.constant 0 : i32
    %c0_i32_1 = arith.constant 0 : i32
    return %c0_i32, %c0_i32_0 : i32, i32
  }
  func.func @transform_22(%arg0: i32) -> (i32, i32, i32) {
    %c0_i32 = arith.constant 0 : i32
    %c0_i32_0 = arith.constant 0 : i32
    %c0_i32_1 = arith.constant 0 : i32
    return %arg0, %c0_i32, %c0_i32_0 : i32, i32, i32
  }
}

</mosaic_0001>

<llo_original>
// kernel: haframe_vit_forward.1
$region0: #{haframe_vit_forward.1}
  #allocation0 [shape = 'u32[]', space=smem, size = 0x4, offset = 0x4, fixed_abs, tag = 'smem constant byte address 0x4 - core index']
  #allocation1 [shape = 'u32[144,128]{1,0:T(1,128)}', space=vmem, size = 0x12000, scoped, tag = 'internal scratch']
  %s0 = inlined_call_operand.vmem [shape: f32[2,24,64], index: 0, kind: input, shape index: {}]
  %s1 = inlined_call_operand.vmem [shape: f32[64,32], index: 1, kind: input, shape index: {}]
  %s2 = inlined_call_operand.vmem [shape: f32[1,32], index: 2, kind: input, shape index: {}]
  %s3 = inlined_call_operand.vmem [shape: f32[24,32], index: 3, kind: input, shape index: {}]
  %s4 = inlined_call_operand.vmem [shape: f32[2,1,32], index: 4, kind: input, shape index: {}]
  %s5 = inlined_call_operand.vmem [shape: f32[2,1,32], index: 5, kind: input, shape index: {}]
  %s6 = inlined_call_operand.vmem [shape: f32[2,32,96], index: 6, kind: input, shape index: {}]
  %s7 = inlined_call_operand.vmem [shape: f32[2,1,96], index: 7, kind: input, shape index: {}]
  %s8 = inlined_call_operand.vmem [shape: f32[2,32,32], index: 8, kind: input, shape index: {}]
  %s9 = inlined_call_operand.vmem [shape: f32[2,1,32], index: 9, kind: input, shape index: {}]
  %s10 = inlined_call_operand.vmem [shape: f32[2,1,32], index: 10, kind: input, shape index: {}]
  %s11 = inlined_call_operand.vmem [shape: f32[2,1,32], index: 11, kind: input, shape index: {}]
  %s12 = inlined_call_operand.vmem [shape: f32[2,32,64], index: 12, kind: input, shape index: {}]
  %s13 = inlined_call_operand.vmem [shape: f32[2,1,64], index: 13, kind: input, shape index: {}]
  %s14 = inlined_call_operand.vmem [shape: f32[2,64,32], index: 14, kind: input, shape index: {}]
  %s15 = inlined_call_operand.vmem [shape: f32[2,1,32], index: 15, kind: input, shape index: {}]
  %s16 = inlined_call_operand.vmem [shape: f32[1,32], index: 16, kind: input, shape index: {}]
  %s17 = inlined_call_operand.vmem [shape: f32[1,32], index: 17, kind: input, shape index: {}]
  %s18 = inlined_call_operand.vmem [shape: f32[32,32], index: 18, kind: input, shape index: {}]
  %s19 = inlined_call_operand.vmem [shape: f32[1,32], index: 19, kind: input, shape index: {}]
  %s20 = inlined_call_operand.vmem [shape: f32[32,8], index: 20, kind: input, shape index: {}]
  %s21 = inlined_call_operand.vmem [shape: f32[1,8], index: 21, kind: input, shape index: {}]
  %s22 = inlined_call_operand.hbm [shape: f32[2,1,8], index: 22, kind: output, shape index: {}]
  %s23 = sld [smem:[#allocation0]]
  $region121: #{haframe_vit_forward.1} parent=0
    _
  %s25 = ssub.s32 1, %s23
  %s26 = scalar_select 0, %s25, %s23
  $region1: #{haframe_vit_forward.1} parent=0
    #allocation2 [shape = 'u8[1024]{0}', space=vmem, size = 0x400, scoped, tag = 'output window, operand 0']
    #allocation3 [shape = 's32[2]{0}', space=sflag, size = 0x8, scoped, tag = 'scoped memory for haframe_vit_forward.1']
    %27 = vsyncpa [#allocation3], 0
    %s28 = scalar_lea.sflag [#allocation3], 1
    %29 = vsyncpa %s28, 0
    loop: start=0, step=1, limit=4
    $region2: #{haframe_vit_forward.1} parent=1 // loop_pre_header
      _
    $region3: #{haframe_vit_forward.1} parent=1 // loop_header
      %s31 = sphi 0, %s35
      %p32 = scmp.ge.s32.totalorder %s31, 4
      %s41 = sphi 0, %s43
      %s44 = sphi 0, %s41
      %s45 = sphi 0, %s44
      %s61 = sphi 0, %s45
      %s65 = sphi 0, %s65
      %s67 = sphi 0, %s65
      %s68 = sphi 0, %s67
      %s82 = sphi 0, %s68
      %s86 = sphi 0, %s86
      %s88 = sphi 0, %s86
      %s89 = sphi 0, %s88
      %s103 = sphi 0, %s89
      %s107 = sphi 0, %s107
      %s109 = sphi 0, %s107
      %s110 = sphi 0, %s109
      %s124 = sphi 0, %s110
      %s128 = sphi 0, %s128
      %s130 = sphi 0, %s128
      %s131 = sphi 0, %s130
      %s145 = sphi 0, %s131
      %s149 = sphi 0, %s149
      %s151 = sphi 0, %s149
      %s152 = sphi 0, %s151
      %s166 = sphi 0, %s152
      %s170 = sphi 0, %s170
      %s172 = sphi 0, %s170
      %s173 = sphi 0, %s172
      %s187 = sphi 0, %s173
      %s191 = sphi 0, %s191
      %s193 = sphi 0, %s191
      %s194 = sphi 0, %s193
      %s208 = sphi 0, %s194
      %s212 = sphi 0, %s212
      %s214 = sphi 0, %s212
      %s215 = sphi 0, %s214
      %s229 = sphi 0, %s215
      %s233 = sphi 0, %s233
      %s235 = sphi 0, %s233
      %s236 = sphi 0, %s235
      %s250 = sphi 0, %s236
      %s254 = sphi 0, %s254
      %s256 = sphi 0, %s254
      %s257 = sphi 0, %s256
      %s271 = sphi 0, %s257
      %s275 = sphi 0, %s275
      %s277 = sphi 0, %s275
      %s278 = sphi 0, %s277
      %s292 = sphi 0, %s278
      %s296 = sphi 0, %s296
      %s298 = sphi 0, %s296
      %s299 = sphi 0, %s298
      %s313 = sphi 0, %s299
      %s317 = sphi 0, %s317
      %s319 = sphi 0, %s317
      %s320 = sphi 0, %s319
      %s334 = sphi 0, %s320
      %s338 = sphi 0, %s338
      %s340 = sphi 0, %s338
      %s341 = sphi 0, %s340
      %s355 = sphi 0, %s341
      %s359 = sphi 0, %s359
      %s361 = sphi 0, %s359
      %s362 = sphi 0, %s361
      %s376 = sphi 0, %s362
      %s380 = sphi 0, %s380
      %s382 = sphi 0, %s380
      %s383 = sphi 0, %s382
      %s397 = sphi 0, %s383
      %s401 = sphi 0, %s401
      %s403 = sphi 0, %s401
      %s404 = sphi 0, %s403
      %s418 = sphi 0, %s404
      %s422 = sphi 0, %s422
      %s424 = sphi 0, %s422
      %s425 = sphi 0, %s424
      %s439 = sphi 0, %s425
      %s443 = sphi 0, %s443
      %s445 = sphi 0, %s443
      %s446 = sphi 0, %s445
      %s460 = sphi 0, %s446
      %s464 = sphi 0, %s464
      %s466 = sphi 0, %s464
      %s467 = sphi 0, %s466
      %s481 = sphi 0, %s467
      %s485 = sphi 0, %s485
      %s487 = sphi 0, %s485
      %s488 = sphi 0, %s487
      %s502 = sphi 0, %s488
      %s508 = sphi 0, %s510
      %s511 = sphi 0, %s508
      %s512 = sphi 0, %s511
      %s528 = sphi 0, %s512
    $region4: #{haframe_vit_forward.1} parent=1 // loop_header_branch
      %34 = sbr.rel (%p32) target = $region8
    $region5: #{haframe_vit_forward.1} parent=1 // loop_body
      %s36 = ssub.s32 %s31, 1
      %s37 = ssub.s32 %s31, 2
      %s38 = sadd.s32 %s31, 1
      %s39 = ssub.s32 %s31, %s38
      %p40 = scmp.eq.s32.totalorder %s39, 0
      %s42 = sadd.s32 %s41, 1
      %s43 = scalar_select %p40, %s41, %s42
      %p46 = pneg %p40
      %p47 = scmp.eq.s32.totalorder %s31, 1
      %p48 = por %p46, %p47
      %p49 = scmp.ne.s32.totalorder %s41, %s44
      %p50 = scmp.eq.s32.totalorder %s31, 0
      %p51 = por %p49, %p50
      %p52 = scmp.ne.s32.totalorder %s41, %s44
      %p53 = scmp.eq.s32.totalorder %s36, 1
      %p54 = por %p52, %p53
      %p55 = scmp.ne.s32.totalorder %s44, %s45
      %p56 = scmp.eq.s32.totalorder %s36, 0
      %p57 = por %p55, %p56
      %p58 = scmp.ne.s32.totalorder %s44, %s45
      %p59 = scmp.eq.s32.totalorder %s37, 1
      %p60 = por %p58, %p59
      %p62 = scmp.ne.s32.totalorder %s45, %s61
      %p63 = scmp.eq.s32.totalorder %s37, 0
      %p64 = por %p62, %p63
      %s66 = sadd.s32 %s65, 1
      %p69 = scmp.eq.s32.totalorder %s31, 1
      %p70 = scmp.ne.s32.totalorder %s65, %s67
      %p71 = scmp.eq.s32.totalorder %s31, 0
      %p72 = por %p70, %p71
      %p73 = scmp.ne.s32.totalorder %s65, %s67
      %p74 = scmp.eq.s32.totalorder %s36, 1
      %p75 = por %p73, %p74
      %p76 = scmp.ne.s32.totalorder %s67, %s68
      %p77 = scmp.eq.s32.totalorder %s36, 0
      %p78 = por %p76, %p77
      %p79 = scmp.ne.s32.totalorder %s67, %s68
      %p80 = scmp.eq.s32.totalorder %s37, 1
      %p81 = por %p79, %p80
      %p83 = scmp.ne.s32.totalorder %s68, %s82
      %p84 = scmp.eq.s32.totalorder %s37, 0
      %p85 = por %p83, %p84
      %s87 = sadd.s32 %s86, 1
      %p90 = scmp.eq.s32.totalorder %s31, 1
      %p91 = scmp.ne.s32.totalorder %s86, %s88
      %p92 = scmp.eq.s32.totalorder %s31, 0
      %p93 = por %p91, %p92
      %p94 = scmp.ne.s32.totalorder %s86, %s88
      %p95 = scmp.eq.s32.totalorder %s36, 1
      %p96 = por %p94, %p95
      %p97 = scmp.ne.s32.totalorder %s88, %s89
      %p98 = scmp.eq.s32.totalorder %s36, 0
      %p99 = por %p97, %p98
      %p100 = scmp.ne.s32.totalorder %s88, %s89
      %p101 = scmp.eq.s32.totalorder %s37, 1
      %p102 = por %p100, %p101
      %p104 = scmp.ne.s32.totalorder %s89, %s103
      %p105 = scmp.eq.s32.totalorder %s37, 0
      %p106 = por %p104, %p105
      %s108 = sadd.s32 %s107, 1
      %p111 = scmp.eq.s32.totalorder %s31, 1
      %p112 = scmp.ne.s32.totalorder %s107, %s109
      %p113 = scmp.eq.s32.totalorder %s31, 0
      %p114 = por %p112, %p113
      %p115 = scmp.ne.s32.totalorder %s107, %s109
      %p116 = scmp.eq.s32.totalorder %s36, 1
      %p117 = por %p115, %p116
      %p118 = scmp.ne.s32.totalorder %s109, %s110
      %p119 = scmp.eq.s32.totalorder %s36, 0
      %p120 = por %p118, %p119
      %p121 = scmp.ne.s32.totalorder %s109, %s110
      %p122 = scmp.eq.s32.totalorder %s37, 1
      %p123 = por %p121, %p122
      %p125 = scmp.ne.s32.totalorder %s110, %s124
      %p126 = scmp.eq.s32.totalorder %s37, 0
      %p127 = por %p125, %p126
      %s129 = sadd.s32 %s128, 1
      %p132 = scmp.eq.s32.totalorder %s31, 1
      %p133 = scmp.ne.s32.totalorder %s128, %s130
      %p134 = scmp.eq.s32.totalorder %s31, 0
      %p135 = por %p133, %p134
      %p136 = scmp.ne.s32.totalorder %s128, %s130
      %p137 = scmp.eq.s32.totalorder %s36, 1
      %p138 = por %p136, %p137
      %p139 = scmp.ne.s32.totalorder %s130, %s131
      %p140 = scmp.eq.s32.totalorder %s36, 0
      %p141 = por %p139, %p140
      %p142 = scmp.ne.s32.totalorder %s130, %s131
      %p143 = scmp.eq.s32.totalorder %s37, 1
      %p144 = por %p142, %p143
      %p146 = scmp.ne.s32.totalorder %s131, %s145
      %p147 = scmp.eq.s32.totalorder %s37, 0
      %p148 = por %p146, %p147
      %s150 = sadd.s32 %s149, 1
      %p153 = scmp.eq.s32.totalorder %s31, 1
      %p154 = scmp.ne.s32.totalorder %s149, %s151
      %p155 = scmp.eq.s32.totalorder %s31, 0
      %p156 = por %p154, %p155
      %p157 = scmp.ne.s32.totalorder %s149, %s151
      %p158 = scmp.eq.s32.totalorder %s36, 1
      %p159 = por %p157, %p158
      %p160 = scmp.ne.s32.totalorder %s151, %s152
      %p161 = scmp.eq.s32.totalorder %s36, 0
      %p162 = por %p160, %p161
      %p163 = scmp.ne.s32.totalorder %s151, %s152
      %p164 = scmp.eq.s32.totalorder %s37, 1
      %p165 = por %p163, %p164
      %p167 = scmp.ne.s32.totalorder %s152, %s166
      %p168 = scmp.eq.s32.totalorder %s37, 0
      %p169 = por %p167, %p168
      %s171 = sadd.s32 %s170, 1
      %p174 = scmp.eq.s32.totalorder %s31, 1
      %p175 = scmp.ne.s32.totalorder %s170, %s172
      %p176 = scmp.eq.s32.totalorder %s31, 0
      %p177 = por %p175, %p176
      %p178 = scmp.ne.s32.totalorder %s170, %s172
      %p179 = scmp.eq.s32.totalorder %s36, 1
      %p180 = por %p178, %p179
      %p181 = scmp.ne.s32.totalorder %s172, %s173
      %p182 = scmp.eq.s32.totalorder %s36, 0
      %p183 = por %p181, %p182
      %p184 = scmp.ne.s32.totalorder %s172, %s173
      %p185 = scmp.eq.s32.totalorder %s37, 1
      %p186 = por %p184, %p185
      %p188 = scmp.ne.s32.totalorder %s173, %s187
      %p189 = scmp.eq.s32.totalorder %s37, 0
      %p190 = por %p188, %p189
      %s192 = sadd.s32 %s191, 1
      %p195 = scmp.eq.s32.totalorder %s31, 1
      %p196 = scmp.ne.s32.totalorder %s191, %s193
      %p197 = scmp.eq.s32.totalorder %s31, 0
      %p198 = por %p196, %p197
      %p199 = scmp.ne.s32.totalorder %s191, %s193
      %p200 = scmp.eq.s32.totalorder %s36, 1
      %p201 = por %p199, %p200
      %p202 = scmp.ne.s32.totalorder %s193, %s194
      %p203 = scmp.eq.s32.totalorder %s36, 0
      %p204 = por %p202, %p203
      %p205 = scmp.ne.s32.totalorder %s193, %s194
      %p206 = scmp.eq.s32.totalorder %s37, 1
      %p207 = por %p205, %p206
      %p209 = scmp.ne.s32.totalorder %s194, %s208
      %p210 = scmp.eq.s32.totalorder %s37, 0
      %p211 = por %p209, %p210
      %s213 = sadd.s32 %s212, 1
      %p216 = scmp.eq.s32.totalorder %s31, 1
      %p217 = scmp.ne.s32.totalorder %s212, %s214
      %p218 = scmp.eq.s32.totalorder %s31, 0
      %p219 = por %p217, %p218
      %p220 = scmp.ne.s32.totalorder %s212, %s214
      %p221 = scmp.eq.s32.totalorder %s36, 1
      %p222 = por %p220, %p221
      %p223 = scmp.ne.s32.totalorder %s214, %s215
      %p224 = scmp.eq.s32.totalorder %s36, 0
      %p225 = por %p223, %p224
      %p226 = scmp.ne.s32.totalorder %s214, %s215
      %p227 = scmp.eq.s32.totalorder %s37, 1
      %p228 = por %p226, %p227
      %p230 = scmp.ne.s32.totalorder %s215, %s229
      %p231 = scmp.eq.s32.totalorder %s37, 0
      %p232 = por %p230, %p231
      %s234 = sadd.s32 %s233, 1
      %p237 = scmp.eq.s32.totalorder %s31, 1
      %p238 = scmp.ne.s32.totalorder %s233, %s235
      %p239 = scmp.eq.s32.totalorder %s31, 0
      %p240 = por %p238, %p239
      %p241 = scmp.ne.s32.totalorder %s233, %s235
      %p242 = scmp.eq.s32.totalorder %s36, 1
      %p243 = por %p241, %p242
      %p244 = scmp.ne.s32.totalorder %s235, %s236
      %p245 = scmp.eq.s32.totalorder %s36, 0
      %p246 = por %p244, %p245
      %p247 = scmp.ne.s32.totalorder %s235, %s236
      %p248 = scmp.eq.s32.totalorder %s37, 1
      %p249 = por %p247, %p248
      %p251 = scmp.ne.s32.totalorder %s236, %s250
      %p252 = scmp.eq.s32.totalorder %s37, 0
      %p253 = por %p251, %p252
      %s255 = sadd.s32 %s254, 1
      %p258 = scmp.eq.s32.totalorder %s31, 1
      %p259 = scmp.ne.s32.totalorder %s254, %s256
      %p260 = scmp.eq.s32.totalorder %s31, 0
      %p261 = por %p259, %p260
      %p262 = scmp.ne.s32.totalorder %s254, %s256
      %p263 = scmp.eq.s32.totalorder %s36, 1
      %p264 = por %p262, %p263
      %p265 = scmp.ne.s32.totalorder %s256, %s257
      %p266 = scmp.eq.s32.totalorder %s36, 0
      %p267 = por %p265, %p266
      %p268 = scmp.ne.s32.totalorder %s256, %s257
      %p269 = scmp.eq.s32.totalorder %s37, 1
      %p270 = por %p268, %p269
      %p272 = scmp.ne.s32.totalorder %s257, %s271
      %p273 = scmp.eq.s32.totalorder %s37, 0
      %p274 = por %p272, %p273
      %s276 = sadd.s32 %s275, 1
      %p279 = scmp.eq.s32.totalorder %s31, 1
      %p280 = scmp.ne.s32.totalorder %s275, %s277
      %p281 = scmp.eq.s32.totalorder %s31, 0
      %p282 = por %p280, %p281
      %p283 = scmp.ne.s32.totalorder %s275, %s277
      %p284 = scmp.eq.s32.totalorder %s36, 1
      %p285 = por %p283, %p284
      %p286 = scmp.ne.s32.totalorder %s277, %s278
      %p287 = scmp.eq.s32.totalorder %s36, 0
      %p288 = por %p286, %p287
      %p289 = scmp.ne.s32.totalorder %s277, %s278
      %p290 = scmp.eq.s32.totalorder %s37, 1
      %p291 = por %p289, %p290
      %p293 = scmp.ne.s32.totalorder %s278, %s292
      %p294 = scmp.eq.s32.totalorder %s37, 0
      %p295 = por %p293, %p294
      %s297 = sadd.s32 %s296, 1
      %p300 = scmp.eq.s32.totalorder %s31, 1
      %p301 = scmp.ne.s32.totalorder %s296, %s298
      %p302 = scmp.eq.s32.totalorder %s31, 0
      %p303 = por %p301, %p302
      %p304 = scmp.ne.s32.totalorder %s296, %s298
      %p305 = scmp.eq.s32.totalorder %s36, 1
      %p306 = por %p304, %p305
      %p307 = scmp.ne.s32.totalorder %s298, %s299
      %p308 = scmp.eq.s32.totalorder %s36, 0
      %p309 = por %p307, %p308
      %p310 = scmp.ne.s32.totalorder %s298, %s299
      %p311 = scmp.eq.s32.totalorder %s37, 1
      %p312 = por %p310, %p311
      %p314 = scmp.ne.s32.totalorder %s299, %s313
      %p315 = scmp.eq.s32.totalorder %s37, 0
      %p316 = por %p314, %p315
      %s318 = sadd.s32 %s317, 1
      %p321 = scmp.eq.s32.totalorder %s31, 1
      %p322 = scmp.ne.s32.totalorder %s317, %s319
      %p323 = scmp.eq.s32.totalorder %s31, 0
      %p324 = por %p322, %p323
      %p325 = scmp.ne.s32.totalorder %s317, %s319
      %p326 = scmp.eq.s32.totalorder %s36, 1
      %p327 = por %p325, %p326
      %p328 = scmp.ne.s32.totalorder %s319, %s320
      %p329 = scmp.eq.s32.totalorder %s36, 0
      %p330 = por %p328, %p329
      %p331 = scmp.ne.s32.totalorder %s319, %s320
      %p332 = scmp.eq.s32.totalorder %s37, 1
      %p333 = por %p331, %p332
      %p335 = scmp.ne.s32.totalorder %s320, %s334
      %p336 = scmp.eq.s32.totalorder %s37, 0
      %p337 = por %p335, %p336
      %s339 = sadd.s32 %s338, 1
      %p342 = scmp.eq.s32.totalorder %s31, 1
      %p343 = scmp.ne.s32.totalorder %s338, %s340
      %p344 = scmp.eq.s32.totalorder %s31, 0
      %p345 = por %p343, %p344
      %p346 = scmp.ne.s32.totalorder %s338, %s340
      %p347 = scmp.eq.s32.totalorder %s36, 1
      %p348 = por %p346, %p347
      %p349 = scmp.ne.s32.totalorder %s340, %s341
      %p350 = scmp.eq.s32.totalorder %s36, 0
      %p351 = por %p349, %p350
      %p352 = scmp.ne.s32.totalorder %s340, %s341
      %p353 = scmp.eq.s32.totalorder %s37, 1
      %p354 = por %p352, %p353
      %p356 = scmp.ne.s32.totalorder %s341, %s355
      %p357 = scmp.eq.s32.totalorder %s37, 0
      %p358 = por %p356, %p357
      %s360 = sadd.s32 %s359, 1
      %p363 = scmp.eq.s32.totalorder %s31, 1
      %p364 = scmp.ne.s32.totalorder %s359, %s361
      %p365 = scmp.eq.s32.totalorder %s31, 0
      %p366 = por %p364, %p365
      %p367 = scmp.ne.s32.totalorder %s359, %s361
      %p368 = scmp.eq.s32.totalorder %s36, 1
      %p369 = por %p367, %p368
      %p370 = scmp.ne.s32.totalorder %s361, %s362
      %p371 = scmp.eq.s32.totalorder %s36, 0
      %p372 = por %p370, %p371
      %p373 = scmp.ne.s32.totalorder %s361, %s362
      %p374 = scmp.eq.s32.totalorder %s37, 1
      %p375 = por %p373, %p374
      %p377 = scmp.ne.s32.totalorder %s362, %s376
      %p378 = scmp.eq.s32.totalorder %s37, 0
      %p379 = por %p377, %p378
      %s381 = sadd.s32 %s380, 1
      %p384 = scmp.eq.s32.totalorder %s31, 1
      %p385 = scmp.ne.s32.totalorder %s380, %s382
      %p386 = scmp.eq.s32.totalorder %s31, 0
      %p387 = por %p385, %p386
      %p388 = scmp.ne.s32.totalorder %s380, %s382
      %p389 = scmp.eq.s32.totalorder %s36, 1
      %p390 = por %p388, %p389
      %p391 = scmp.ne.s32.totalorder %s382, %s383
      %p392 = scmp.eq.s32.totalorder %s36, 0
      %p393 = por %p391, %p392
      %p394 = scmp.ne.s32.totalorder %s382, %s383
      %p395 = scmp.eq.s32.totalorder %s37, 1
      %p396 = por %p394, %p395
      %p398 = scmp.ne.s32.totalorder %s383, %s397
      %p399 = scmp.eq.s32.totalorder %s37, 0
      %p400 = por %p398, %p399
      %s402 = sadd.s32 %s401, 1
      %p405 = scmp.eq.s32.totalorder %s31, 1
      %p406 = scmp.ne.s32.totalorder %s401, %s403
      %p407 = scmp.eq.s32.totalorder %s31, 0
      %p408 = por %p406, %p407
      %p409 = scmp.ne.s32.totalorder %s401, %s403
      %p410 = scmp.eq.s32.totalorder %s36, 1
      %p411 = por %p409, %p410
      %p412 = scmp.ne.s32.totalorder %s403, %s404
      %p413 = scmp.eq.s32.totalorder %s36, 0
      %p414 = por %p412, %p413
      %p415 = scmp.ne.s32.totalorder %s403, %s404
      %p416 = scmp.eq.s32.totalorder %s37, 1
      %p417 = por %p415, %p416
      %p419 = scmp.ne.s32.totalorder %s404, %s418
      %p420 = scmp.eq.s32.totalorder %s37, 0
      %p421 = por %p419, %p420
      %s423 = sadd.s32 %s422, 1
      %p426 = scmp.eq.s32.totalorder %s31, 1
      %p427 = scmp.ne.s32.totalorder %s422, %s424
      %p428 = scmp.eq.s32.totalorder %s31, 0
      %p429 = por %p427, %p428
      %p430 = scmp.ne.s32.totalorder %s422, %s424
      %p431 = scmp.eq.s32.totalorder %s36, 1
      %p432 = por %p430, %p431
      %p433 = scmp.ne.s32.totalorder %s424, %s425
      %p434 = scmp.eq.s32.totalorder %s36, 0
      %p435 = por %p433, %p434
      %p436 = scmp.ne.s32.totalorder %s424, %s425
      %p437 = scmp.eq.s32.totalorder %s37, 1
      %p438 = por %p436, %p437
      %p440 = scmp.ne.s32.totalorder %s425, %s439
      %p441 = scmp.eq.s32.totalorder %s37, 0
      %p442 = por %p440, %p441
      %s444 = sadd.s32 %s443, 1
      %p447 = scmp.eq.s32.totalorder %s31, 1
      %p448 = scmp.ne.s32.totalorder %s443, %s445
      %p449 = scmp.eq.s32.totalorder %s31, 0
      %p450 = por %p448, %p449
      %p451 = scmp.ne.s32.totalorder %s443, %s445
      %p452 = scmp.eq.s32.totalorder %s36, 1
      %p453 = por %p451, %p452
      %p454 = scmp.ne.s32.totalorder %s445, %s446
      %p455 = scmp.eq.s32.totalorder %s36, 0
      %p456 = por %p454, %p455
      %p457 = scmp.ne.s32.totalorder %s445, %s446
      %p458 = scmp.eq.s32.totalorder %s37, 1
      %p459 = por %p457, %p458
      %p461 = scmp.ne.s32.totalorder %s446, %s460
      %p462 = scmp.eq.s32.totalorder %s37, 0
      %p463 = por %p461, %p462
      %s465 = sadd.s32 %s464, 1
      %p468 = scmp.eq.s32.totalorder %s31, 1
      %p469 = scmp.ne.s32.totalorder %s464, %s466
      %p470 = scmp.eq.s32.totalorder %s31, 0
      %p471 = por %p469, %p470
      %p472 = scmp.ne.s32.totalorder %s464, %s466
      %p473 = scmp.eq.s32.totalorder %s36, 1
      %p474 = por %p472, %p473
      %p475 = scmp.ne.s32.totalorder %s466, %s467
      %p476 = scmp.eq.s32.totalorder %s36, 0
      %p477 = por %p475, %p476
      %p478 = scmp.ne.s32.totalorder %s466, %s467
      %p479 = scmp.eq.s32.totalorder %s37, 1
      %p480 = por %p478, %p479
      %p482 = scmp.ne.s32.totalorder %s467, %s481
      %p483 = scmp.eq.s32.totalorder %s37, 0
      %p484 = por %p482, %p483
      %s486 = sadd.s32 %s485, 1
      %p489 = scmp.eq.s32.totalorder %s31, 1
      %p490 = scmp.ne.s32.totalorder %s485, %s487
      %p491 = scmp.eq.s32.totalorder %s31, 0
      %p492 = por %p490, %p491
      %p493 = scmp.ne.s32.totalorder %s485, %s487
      %p494 = scmp.eq.s32.totalorder %s36, 1
      %p495 = por %p493, %p494
      %p496 = scmp.ne.s32.totalorder %s487, %s488
      %p497 = scmp.eq.s32.totalorder %s36, 0
      %p498 = por %p496, %p497
      %p499 = scmp.ne.s32.totalorder %s487, %s488
      %p500 = scmp.eq.s32.totalorder %s37, 1
      %p501 = por %p499, %p500
      %p503 = scmp.ne.s32.totalorder %s488, %s502
      %p504 = scmp.eq.s32.totalorder %s37, 0
      %p505 = por %p503, %p504
      %s506 = ssub.s32 %s31, %s38
      %p507 = scmp.eq.s32.totalorder %s506, 0
      %s509 = sadd.s32 %s508, 1
      %s510 = scalar_select %p507, %s508, %s509
      %p513 = pneg %p507
      %p514 = scmp.eq.s32.totalorder %s31, 1
      %p515 = por %p513, %p514
      %p516 = scmp.ne.s32.totalorder %s508, %s511
      %p517 = scmp.eq.s32.totalorder %s31, 0
      %p518 = por %p516, %p517
      %p519 = scmp.ne.s32.totalorder %s508, %s511
      %p520 = scmp.eq.s32.totalorder %s36, 1
      %p521 = por %p519, %p520
      %p522 = scmp.ne.s32.totalorder %s511, %s512
      %p523 = scmp.eq.s32.totalorder %s36, 0
      %p524 = por %p522, %p523
      %p525 = scmp.ne.s32.totalorder %s511, %s512
      %p526 = scmp.eq.s32.totalorder %s37, 1
      %p527 = por %p525, %p526
      %p529 = scmp.ne.s32.totalorder %s512, %s528
      %p530 = scmp.eq.s32.totalorder %s37, 0
      %p531 = por %p529, %p530
      %p532 = scmp.le.s32.totalorder 1, %s31
      %p533 = scmp.lt.s32.totalorder %s31, 3
      %p534 = pnand %p532, %p533
      %p535 = pneg %p534
      // Predicated region
      $region9: #{haframe_vit_forward.1} parent=5 // pred_check
        _
      $region10: #{haframe_vit_forward.1} parent=5 // pred_check_branch
        %537 = sbr.rel (%p534) target = $region12
      $region11: #{haframe_vit_forward.1} parent=5 // pred_region
        %s538 = ssub.s32 %s31, 1
        // Predicated region
        $region13: #{haframe_vit_forward.1} parent=11 // pred_check
          %p539 = pneg %p78
        $region14: #{haframe_vit_forward.1} parent=11 // pred_check_branch
          %541 = sbr.rel (%p539) target = $region16
        $region15: #{haframe_vit_forward.1} parent=11 // pred_region
          _
        $region16: #{haframe_vit_forward.1} parent=11 // pred_fallthru
          _
        // Predicated region
        $region17: #{haframe_vit_forward.1} parent=11 // pred_check
          %p542 = pneg %p99
        $region18: #{haframe_vit_forward.1} parent=11 // pred_check_branch
          %544 = sbr.rel (%p542) target = $region20
        $region19: #{haframe_vit_forward.1} parent=11 // pred_region
          _
        $region20: #{haframe_vit_forward.1} parent=11 // pred_fallthru
          _
        // Predicated region
        $region21: #{haframe_vit_forward.1} parent=11 // pred_check
          %p545 = pneg %p120
        $region22: #{haframe_vit_forward.1} parent=11 // pred_check_branch
          %547 = sbr.rel (%p545) target = $region24
        $region23: #{haframe_vit_forward.1} parent=11 // pred_region
          _
        $region24: #{haframe_vit_forward.1} parent=11 // pred_fallthru
          _
        // Predicated region
        $region25: #{haframe_vit_forward.1} parent=11 // pred_check
          %p548 = pneg %p141
        $region26: #{haframe_vit_forward.1} parent=11 // pred_check_branch
          %550 = sbr.rel (%p548) target = $region28
        $region27: #{haframe_vit_forward.1} parent=11 // pred_region
          _
        $region28: #{haframe_vit_forward.1} parent=11 // pred_fallthru
          _
        // Predicated region
        $region29: #{haframe_vit_forward.1} parent=11 // pred_check
          %p551 = pneg %p162
        $region30: #{haframe_vit_forward.1} parent=11 // pred_check_branch
          %553 = sbr.rel (%p551) target = $region32
        $region31: #{haframe_vit_forward.1} parent=11 // pred_region
          _
        $region32: #{haframe_vit_forward.1} parent=11 // pred_fallthru
          _
        // Predicated region
        $region33: #{haframe_vit_forward.1} parent=11 // pred_check
          %p554 = pneg %p183
        $region34: #{haframe_vit_forward.1} parent=11 // pred_check_branch
          %556 = sbr.rel (%p554) target = $region36
        $region35: #{haframe_vit_forward.1} parent=11 // pred_region
          _
        $region36: #{haframe_vit_forward.1} parent=11 // pred_fallthru
          _
        // Predicated region
        $region37: #{haframe_vit_forward.1} parent=11 // pred_check
          %p557 = pneg %p204
        $region38: #{haframe_vit_forward.1} parent=11 // pred_check_branch
          %559 = sbr.rel (%p557) target = $region40
        $region39: #{haframe_vit_forward.1} parent=11 // pred_region
          _
        $region40: #{haframe_vit_forward.1} parent=11 // pred_fallthru
          _
        // Predicated region
        $region41: #{haframe_vit_forward.1} parent=11 // pred_check
          %p560 = pneg %p225
        $region42: #{haframe_vit_forward.1} parent=11 // pred_check_branch
          %562 = sbr.rel (%p560) target = $region44
        $region43: #{haframe_vit_forward.1} parent=11 // pred_region
          _
        $region44: #{haframe_vit_forward.1} parent=11 // pred_fallthru
          _
        // Predicated region
        $region45: #{haframe_vit_forward.1} parent=11 // pred_check
          %p563 = pneg %p246
        $region46: #{haframe_vit_forward.1} parent=11 // pred_check_branch
          %565 = sbr.rel (%p563) target = $region48
        $region47: #{haframe_vit_forward.1} parent=11 // pred_region
          _
        $region48: #{haframe_vit_forward.1} parent=11 // pred_fallthru
          _
        // Predicated region
        $region49: #{haframe_vit_forward.1} parent=11 // pred_check
          %p566 = pneg %p267
        $region50: #{haframe_vit_forward.1} parent=11 // pred_check_branch
          %568 = sbr.rel (%p566) target = $region52
        $region51: #{haframe_vit_forward.1} parent=11 // pred_region
          _
        $region52: #{haframe_vit_forward.1} parent=11 // pred_fallthru
          _
        // Predicated region
        $region53: #{haframe_vit_forward.1} parent=11 // pred_check
          %p569 = pneg %p288
        $region54: #{haframe_vit_forward.1} parent=11 // pred_check_branch
          %571 = sbr.rel (%p569) target = $region56
        $region55: #{haframe_vit_forward.1} parent=11 // pred_region
          _
        $region56: #{haframe_vit_forward.1} parent=11 // pred_fallthru
          _
        // Predicated region
        $region57: #{haframe_vit_forward.1} parent=11 // pred_check
          %p572 = pneg %p309
        $region58: #{haframe_vit_forward.1} parent=11 // pred_check_branch
          %574 = sbr.rel (%p572) target = $region60
        $region59: #{haframe_vit_forward.1} parent=11 // pred_region
          _
        $region60: #{haframe_vit_forward.1} parent=11 // pred_fallthru
          _
        // Predicated region
        $region61: #{haframe_vit_forward.1} parent=11 // pred_check
          %p575 = pneg %p330
        $region62: #{haframe_vit_forward.1} parent=11 // pred_check_branch
          %577 = sbr.rel (%p575) target = $region64
        $region63: #{haframe_vit_forward.1} parent=11 // pred_region
          _
        $region64: #{haframe_vit_forward.1} parent=11 // pred_fallthru
          _
        // Predicated region
        $region65: #{haframe_vit_forward.1} parent=11 // pred_check
          %p578 = pneg %p351
        $region66: #{haframe_vit_forward.1} parent=11 // pred_check_branch
          %580 = sbr.rel (%p578) target = $region68
        $region67: #{haframe_vit_forward.1} parent=11 // pred_region
          _
        $region68: #{haframe_vit_forward.1} parent=11 // pred_fallthru
          _
        // Predicated region
        $region69: #{haframe_vit_forward.1} parent=11 // pred_check
          %p581 = pneg %p372
        $region70: #{haframe_vit_forward.1} parent=11 // pred_check_branch
          %583 = sbr.rel (%p581) target = $region72
        $region71: #{haframe_vit_forward.1} parent=11 // pred_region
          _
        $region72: #{haframe_vit_forward.1} parent=11 // pred_fallthru
          _
        // Predicated region
        $region73: #{haframe_vit_forward.1} parent=11 // pred_check
          %p584 = pneg %p393
        $region74: #{haframe_vit_forward.1} parent=11 // pred_check_branch
          %586 = sbr.rel (%p584) target = $region76
        $region75: #{haframe_vit_forward.1} parent=11 // pred_region
          _
        $region76: #{haframe_vit_forward.1} parent=11 // pred_fallthru
          _
        // Predicated region
        $region77: #{haframe_vit_forward.1} parent=11 // pred_check
          %p587 = pneg %p414
        $region78: #{haframe_vit_forward.1} parent=11 // pred_check_branch
          %589 = sbr.rel (%p587) target = $region80
        $region79: #{haframe_vit_forward.1} parent=11 // pred_region
          _
        $region80: #{haframe_vit_forward.1} parent=11 // pred_fallthru
          _
        // Predicated region
        $region81: #{haframe_vit_forward.1} parent=11 // pred_check
          %p590 = pneg %p435
        $region82: #{haframe_vit_forward.1} parent=11 // pred_check_branch
          %592 = sbr.rel (%p590) target = $region84
        $region83: #{haframe_vit_forward.1} parent=11 // pred_region
          _
        $region84: #{haframe_vit_forward.1} parent=11 // pred_fallthru
          _
        // Predicated region
        $region85: #{haframe_vit_forward.1} parent=11 // pred_check
          %p593 = pneg %p456
        $region86: #{haframe_vit_forward.1} parent=11 // pred_check_branch
          %595 = sbr.rel (%p593) target = $region88
        $region87: #{haframe_vit_forward.1} parent=11 // pred_region
          _
        $region88: #{haframe_vit_forward.1} parent=11 // pred_fallthru
          _
        // Predicated region
        $region89: #{haframe_vit_forward.1} parent=11 // pred_check
          %p596 = pneg %p477
        $region90: #{haframe_vit_forward.1} parent=11 // pred_check_branch
          %598 = sbr.rel (%p596) target = $region92
        $region91: #{haframe_vit_forward.1} parent=11 // pred_region
          _
        $region92: #{haframe_vit_forward.1} parent=11 // pred_fallthru
          _
        // Predicated region
        $region93: #{haframe_vit_forward.1} parent=11 // pred_check
          %p599 = pneg %p498
        $region94: #{haframe_vit_forward.1} parent=11 // pred_check_branch
          %601 = sbr.rel (%p599) target = $region96
        $region95: #{haframe_vit_forward.1} parent=11 // pred_region
          _
        $region96: #{haframe_vit_forward.1} parent=11 // pred_fallthru
          _
      $region12: #{haframe_vit_forward.1} parent=5 // pred_fallthru
        _
      %p602 = scmp.lt.s32.totalorder %s31, 2
      // Predicated region
      $region97: #{haframe_vit_forward.1} parent=5 // pred_check
        %p603 = pneg %p602
      $region98: #{haframe_vit_forward.1} parent=5 // pred_check_branch
        %605 = sbr.rel (%p603) target = $region100
      $region99: #{haframe_vit_forward.1} parent=5 // pred_region
        // Predicated region
        $region101: #{haframe_vit_forward.1} parent=99 // pred_check
          %p606 = pneg %p51
        $region102: #{haframe_vit_forward.1} parent=99 // pred_check_branch
          %608 = sbr.rel (%p606) target = $region104
        $region103: #{haframe_vit_forward.1} parent=99 // pred_region
          %p609 = scmp.lt.s32.totalorder %s31, 1
          %s610 = scalar_select %p609, %s31, 1
          %s611 = smul.addr %s610, 3
          %s612 = smul.addr %s611, 8
          %s613 = scalar_lea.vmem %s0, %s612
        $region104: #{haframe_vit_forward.1} parent=99 // pred_fallthru
          _
      $region100: #{haframe_vit_forward.1} parent=5 // pred_fallthru
        _
      %p614 = scmp.le.s32.totalorder 1, %s31
      %p615 = scmp.lt.s32.totalorder %s31, 3
      %p616 = pnand %p614, %p615
      %p617 = pneg %p616
      // Predicated region
      $region105: #{haframe_vit_forward.1} parent=5 // pred_check
        _
      $region106: #{haframe_vit_forward.1} parent=5 // pred_check_branch
        %619 = sbr.rel (%p616) target = $region108
      $region107: #{haframe_vit_forward.1} parent=5 // pred_region
        %s620 = ssub.s32 %s31, 1
        %p621 = scmp.lt.s32.totalorder %s36, 1
        %s622 = scalar_select %p621, %s36, 1
        %s623 = smul.addr %s622, 3
        %s624 = smul.addr %s623, 8
        %s625 = scalar_lea.vmem %s0, %s624
        %p626 = pneg %p57
        %p627 = pneg %p54
        %p628 = pneg %p78
        %p629 = pneg %p75
        %p630 = pneg %p99
        %p631 = pneg %p96
        %p632 = pneg %p120
        %p633 = pneg %p117
        %p634 = pneg %p141
        %p635 = pneg %p138
        %p636 = pneg %p162
        %p637 = pneg %p159
        %p638 = pneg %p183
        %p639 = pneg %p180
        %p640 = pneg %p204
        %p641 = pneg %p201
        %p642 = pneg %p225
        %p643 = pneg %p222
        %p644 = pneg %p246
        %p645 = pneg %p243
        %p646 = pneg %p267
        %p647 = pneg %p264
        %p648 = pneg %p288
        %p649 = pneg %p285
        %p650 = pneg %p309
        %p651 = pneg %p306
        %p652 = pneg %p330
        %p653 = pneg %p327
        %p654 = pneg %p351
        %p655 = pneg %p348
        %p656 = pneg %p372
        %p657 = pneg %p369
        %p658 = pneg %p393
        %p659 = pneg %p390
        %p660 = pneg %p414
        %p661 = pneg %p411
        %p662 = pneg %p435
        %p663 = pneg %p432
        %p664 = pneg %p456
        %p665 = pneg %p453
        %p666 = pneg %p477
        %p667 = pneg %p474
        %p668 = pneg %p498
        %p669 = pneg %p495
        %p670 = pneg %p524
        %p671 = pneg %p521
        %s672 = sand.u32 %s511, 1
        %s673 = scalar_lea.sflag [#allocation3], %s672
        %s674 = sand.u32 %s511, 1
        %s675 = scalar_lea.vmem [#allocation2], %s674
        %p676 = scmp.lt.s32.totalorder %s36, 1
        %s677 = scalar_select %p676, %s36, 1
        %s678 = smul.addr %s677, 3
        %s679 = smul.addr %s678, 8
        %s680 = scalar_lea.vmem %s0, %s679
        %v681 = vld [vmem:[%s680] sm:$0xff]
        %v682 = vld [vmem:[%s680 + $0x8] sm:$0xff]
        %v683 = vld [vmem:[%s680 + $0x10] sm:$0xff]
        %v684 = vld [vmem:[%s1] sm:$0xff]
        %v685 = vld [vmem:[%s1 + $0x8] sm:$0xff]
        %v686 = vld [vmem:[%s1 + $0x10] sm:$0xff]
        %v687 = vld [vmem:[%s1 + $0x18] sm:$0xff]
        %v688 = vld [vmem:[%s1 + $0x20] sm:$0xff]
        %v689 = vld [vmem:[%s1 + $0x28] sm:$0xff]
        %v690 = vld [vmem:[%s1 + $0x30] sm:$0xff]
        %v691 = vld [vmem:[%s1 + $0x38] sm:$0xff]
        %v692 = vld [vmem:[%s2] sm:$0x1]
        %v694 = vlaneseq
        %v695 = vshrl.u32 %v694, 7
        %v696 = vsub.s32 0, %v695
        %v697 = vrot.slane %v692, %v696
        %vm699 = vcmask 523264
        %v701 = vsel %vm699, %v681, 0
        %v704 = vsel %vm699, %v682, 0
        %v707 = vsel %vm699, %v683, 0
        %709 = vmatprep.subr.mxu0 0.0
        %710 = vmatpush1.msra.mxu0 0.0
        %711 = vmatprep.subr.mxu0 0.0
        %712 = vmatpush1.msra.mxu0 0.0
        %713 = vmatprep.subr.mxu0 0.0
        %714 = vmatpush1.msra.mxu0 0.0
        %715 = vmatprep.subr.mxu0 0.0
        %716 = vmatpush1.msra.mxu0 0.0
        %717 = vmatprep.subr.mxu0 0.0
        %718 = vmatpush1.msra.mxu0 0.0
        %719 = vmatprep.subr.mxu0 0.0
        %720 = vmatpush1.msra.mxu0 0.0
        %721 = vmatprep.subr.mxu0 0.0
        %722 = vmatpush1.msra.mxu0 0.0
        %723 = vmatprep.subr.mxu0 0.0
        %724 = vmatpush1.msra.mxu0 0.0
        %725 = vmatprep.subr.mxu0 0.0
        %726 = vmatpush1.msra.mxu0 %v691
        %727 = vmatprep.subr.mxu0 0.0
        %728 = vmatpush1.msra.mxu0 %v690
        %729 = vmatprep.subr.mxu0 0.0
        %730 = vmatpush1.msra.mxu0 %v689
        %731 = vmatprep.subr.mxu0 0.0
        %732 = vmatpush1.msra.mxu0 %v688
        %733 = vmatprep.subr.mxu0 0.0
        %734 = vmatpush1.msra.mxu0 %v687
        %735 = vmatprep.subr.mxu0 0.0
        %736 = vmatpush1.msra.mxu0 %v686
        %737 = vmatprep.subr.mxu0 0.0
        %738 = vmatpush1.msra.mxu0 %v685
        %739 = vmatprep.subr.mxu0 0.0
        %740 = vmatpush1.msra.mxu0 %v684
        %741 = vmatprep.subr.mxu0 0.0
        %742 = vmatpush2.msra.mxu0 0.0
        %743 = vmatprep.subr.mxu0 0.0
        %744 = vmatpush2.msra.mxu0 0.0
        %745 = vmatprep.subr.mxu0 0.0
        %746 = vmatpush2.msra.mxu0 0.0
        %747 = vmatprep.subr.mxu0 0.0
        %748 = vmatpush2.msra.mxu0 0.0
        %749 = vmatprep.subr.mxu0 0.0
        %750 = vmatpush2.msra.mxu0 0.0
        %751 = vmatprep.subr.mxu0 0.0
        %752 = vmatpush2.msra.mxu0 0.0
        %753 = vmatprep.subr.mxu0 0.0
        %754 = vmatpush2.msra.mxu0 0.0
        %755 = vmatprep.subr.mxu0 0.0
        %756 = vmatpush2.msra.mxu0 0.0
        %757 = vmatprep.subr.mxu0 0.0
        %758 = vmatpush2.msra.mxu0 0.0
        %759 = vmatprep.subr.mxu0 0.0
        %760 = vmatpush2.msra.mxu0 0.0
        %761 = vmatprep.subr.mxu0 0.0
        %762 = vmatpush2.msra.mxu0 0.0
        %763 = vmatprep.subr.mxu0 0.0
        %764 = vmatpush2.msra.mxu0 0.0
        %765 = vmatprep.subr.mxu0 0.0
        %766 = vmatpush2.msra.mxu0 0.0
        %767 = vmatprep.subr.mxu0 0.0
        %768 = vmatpush2.msra.mxu0 0.0
        %769 = vmatprep.subr.mxu0 0.0
        %770 = vmatpush2.msra.mxu0 0.0
        %771 = vmatprep.subr.mxu0 0.0
        %772 = vmatpush2.msra.mxu0 0.0
        %773 = vmatprep.mubr.f32.mxu0 0.0
        %774 = vmatmul.mubr.f32.gmra.mxu0 %v701
        %v775 = vpop.f32.mrf.mxu0
        %v776 = vadd.f32 %v697, %v775
        %v777 = vpop.f32.mrf.mxu0
        %778 = vmatprep.mubr.f32.mxu0 0.0
        %779 = vmatmul.mubr.f32.gmra.mxu0 %v704
        %v780 = vpop.f32.mrf.mxu0
        %v781 = vadd.f32 %v697, %v780
        %v782 = vpop.f32.mrf.mxu0
        %783 = vmatprep.mubr.f32.mxu0 0.0
        %784 = vmatmul.mubr.f32.gmra.mxu0 %v707
        %v785 = vpop.f32.mrf.mxu0
        %v786 = vadd.f32 %v697, %v785
        %v787 = vpop.f32.mrf.mxu0
        %788 = vdwg.mxu0
        %v789 = vlaneseq
        %v790 = vshrl.u32 %v789, 7
        %v791 = vadd.s32 %v790, 8
        %v792 = vadd.s32 %v790, 16
        %vm793 = vcmp.ge.s32.totalorder %v790, 1
        %vm794 = vcmp.ge.s32.totalorder %v791, 1
        %vm795 = vcmp.ge.s32.totalorder %v792, 1
        %vm796 = vcmp.lt.s32.totalorder %v790, 17
        %vm797 = vcmp.lt.s32.totalorder %v791, 17
        %vm798 = vcmp.lt.s32.totalorder %v792, 17
        %vm799 = vmand %vm793, %vm796
        %vm800 = vmand %vm794, %vm797
        %vm801 = vmand %vm795, %vm798
        %v802 = vsel %vm799, 1, 0
        %v803 = vsel %vm800, 1, 0
        %v804 = vsel %vm801, 1, 0
        %vm805 = vcmp.eq.s32.totalorder %v802, 1
        %vm806 = vcmp.eq.s32.totalorder %v803, 1
        %vm807 = vcmp.eq.s32.totalorder %v804, 1
        %v808 = vsel %vm805, %v776, 0.0
        %v809 = vsel %vm806, %v781, 0.0
        %v810 = vsel %vm807, %v786, 0.0
        %v811 = vld [vmem:[%s3] sm:$0xff]
        %v812 = vld [vmem:[%s3 + $0x8] sm:$0xff]
        %v813 = vld [vmem:[%s3 + $0x10] sm:$0xff]
        %v814 = vadd.f32 %v808, %v811
        %v815 = vadd.f32 %v809, %v812
        %v816 = vadd.f32 %v810, %v813
        %v817 = vlaneseq
        %v818 = vand.u32 %v817, 127
        %vm819 = vcmp.lt.s32.totalorder %v818, 17
        %v820 = vsel %vm819, 0.0, -1e+30
        %v821 = vld [vmem:[%s4] sm:$0x1]
        %v822 = vld [vmem:[%s5] sm:$0x1]
        %vm823 = vcmask 261120
        %v824 = vsel %vm823, %v814, 0.0
        %825 = vadd.xlane.f32.xlu0 %v824
        %v826 = vpop.xlane.xlu0 %825
        %v827 = vsel %vm823, %v815, 0.0
        %828 = vadd.xlane.f32.xlu0 %v827
        %v829 = vpop.xlane.xlu0 %828
        %v830 = vsel %vm823, %v816, 0.0
        %831 = vadd.xlane.f32.xlu0 %v830
        %v832 = vpop.xlane.xlu0 %831
        %v833 = vrcp.pop 32.0
        %v834 = vmul.f32 %v826, %v833
        %v835 = vmul.f32 %v829, %v833
        %v836 = vmul.f32 %v832, %v833
        %v837 = vsub.f32 %v814, %v834
        %v838 = vsub.f32 %v815, %v835
        %v839 = vsub.f32 %v816, %v836
        %v840 = vmul.f32 %v837, %v837
        %v841 = vmul.f32 %v838, %v838
        %v842 = vmul.f32 %v839, %v839
        %v843 = vsel %vm823, %v840, 0.0
        %844 = vadd.xlane.f32.xlu0 %v843
        %v845 = vpop.xlane.xlu0 %844
        %v846 = vsel %vm823, %v841, 0.0
        %847 = vadd.xlane.f32.xlu0 %v846
        %v848 = vpop.xlane.xlu0 %847
        %v849 = vsel %vm823, %v842, 0.0
        %850 = vadd.xlane.f32.xlu0 %v849
        %v851 = vpop.xlane.xlu0 %850
        %v852 = vmul.f32 %v845, %v833
        %v853 = vmul.f32 %v848, %v833
        %v854 = vmul.f32 %v851, %v833
        %v855 = vadd.f32 %v852, 1e-06
        %v856 = vadd.f32 %v853, 1e-06
        %v857 = vadd.f32 %v854, 1e-06
        %v858 = vrsqrt.pop %v855
        %v859 = vrsqrt.pop %v856
        %v860 = vrsqrt.pop %v857
        %v861 = vmul.f32 %v837, %v858
        %v862 = vmul.f32 %v838, %v859
        %v863 = vmul.f32 %v839, %v860
        %v865 = vlaneseq
        %v866 = vshrl.u32 %v865, 7
        %v867 = vsub.s32 0, %v866
        %v868 = vrot.slane %v821, %v867
        %v870 = vmul.f32 %v861, %v868
        %v871 = vmul.f32 %v862, %v868
        %v872 = vmul.f32 %v863, %v868
        %v874 = vlaneseq
        %v875 = vshrl.u32 %v874, 7
        %v876 = vsub.s32 0, %v875
        %v877 = vrot.slane %v822, %v876
        %v879 = vadd.f32 %v870, %v877
        %v880 = vadd.f32 %v871, %v877
        %v881 = vadd.f32 %v872, %v877
        %v882 = vld [vmem:[%s6] sm:$0xff]
        %v883 = vld [vmem:[%s6 + $0x8] sm:$0xff]
        %v884 = vld [vmem:[%s6 + $0x10] sm:$0xff]
        %v885 = vld [vmem:[%s6 + $0x18] sm:$0xff]
        %v886 = vld [vmem:[%s7] sm:$0x1]
        %v888 = vlaneseq
        %v889 = vshrl.u32 %v888, 7
        %v890 = vsub.s32 0, %v889
        %v891 = vrot.slane %v886, %v890
        %v894 = vsel %vm823, %v879, 0
        %v897 = vsel %vm823, %v880, 0
        %v900 = vsel %vm823, %v881, 0
        %902 = vmatprep.subr.mxu0 0.0
        %903 = vmatpush1.msra.mxu0 0.0
        %904 = vmatprep.subr.mxu0 0.0
        %905 = vmatpush1.msra.mxu0 0.0
        %906 = vmatprep.subr.mxu0 0.0
        %907 = vmatpush1.msra.mxu0 0.0
        %908 = vmatprep.subr.mxu0 0.0
        %909 = vmatpush1.msra.mxu0 0.0
        %910 = vmatprep.subr.mxu0 0.0
        %911 = vmatpush1.msra.mxu0 0.0
        %912 = vmatprep.subr.mxu0 0.0
        %913 = vmatpush1.msra.mxu0 0.0
        %914 = vmatprep.subr.mxu0 0.0
        %915 = vmatpush1.msra.mxu0 0.0
        %916 = vmatprep.subr.mxu0 0.0
        %917 = vmatpush1.msra.mxu0 0.0
        %918 = vmatprep.subr.mxu0 0.0
        %919 = vmatpush1.msra.mxu0 0.0
        %920 = vmatprep.subr.mxu0 0.0
        %921 = vmatpush1.msra.mxu0 0.0
        %922 = vmatprep.subr.mxu0 0.0
        %923 = vmatpush1.msra.mxu0 0.0
        %924 = vmatprep.subr.mxu0 0.0
        %925 = vmatpush1.msra.mxu0 0.0
        %926 = vmatprep.subr.mxu0 0.0
        %927 = vmatpush1.msra.mxu0 %v885
        %928 = vmatprep.subr.mxu0 0.0
        %929 = vmatpush1.msra.mxu0 %v884
        %930 = vmatprep.subr.mxu0 0.0
        %931 = vmatpush1.msra.mxu0 %v883
        %932 = vmatprep.subr.mxu0 0.0
        %933 = vmatpush1.msra.mxu0 %v882
        %934 = vmatprep.subr.mxu0 0.0
        %935 = vmatpush2.msra.mxu0 0.0
        %936 = vmatprep.subr.mxu0 0.0
        %937 = vmatpush2.msra.mxu0 0.0
        %938 = vmatprep.subr.mxu0 0.0
        %939 = vmatpush2.msra.mxu0 0.0
        %940 = vmatprep.subr.mxu0 0.0
        %941 = vmatpush2.msra.mxu0 0.0
        %942 = vmatprep.subr.mxu0 0.0
        %943 = vmatpush2.msra.mxu0 0.0
        %944 = vmatprep.subr.mxu0 0.0
        %945 = vmatpush2.msra.mxu0 0.0
        %946 = vmatprep.subr.mxu0 0.0
        %947 = vmatpush2.msra.mxu0 0.0
        %948 = vmatprep.subr.mxu0 0.0
        %949 = vmatpush2.msra.mxu0 0.0
        %950 = vmatprep.subr.mxu0 0.0
        %951 = vmatpush2.msra.mxu0 0.0
        %952 = vmatprep.subr.mxu0 0.0
        %953 = vmatpush2.msra.mxu0 0.0
        %954 = vmatprep.subr.mxu0 0.0
        %955 = vmatpush2.msra.mxu0 0.0
        %956 = vmatprep.subr.mxu0 0.0
        %957 = vmatpush2.msra.mxu0 0.0
        %958 = vmatprep.subr.mxu0 0.0
        %959 = vmatpush2.msra.mxu0 0.0
        %960 = vmatprep.subr.mxu0 0.0
        %961 = vmatpush2.msra.mxu0 0.0
        %962 = vmatprep.subr.mxu0 0.0
        %963 = vmatpush2.msra.mxu0 0.0
        %964 = vmatprep.subr.mxu0 0.0
        %965 = vmatpush2.msra.mxu0 0.0
        %966 = vmatprep.mubr.f32.mxu0 0.0
        %967 = vmatmul.mubr.f32.gmra.mxu0 %v894
        %v968 = vpop.f32.mrf.mxu0
        %v969 = vadd.f32 %v891, %v968
        %v970 = vpop.f32.mrf.mxu0
        %971 = vmatprep.mubr.f32.mxu0 0.0
        %972 = vmatmul.mubr.f32.gmra.mxu0 %v897
        %v973 = vpop.f32.mrf.mxu0
        %v974 = vadd.f32 %v891, %v973
        %v975 = vpop.f32.mrf.mxu0
        %976 = vmatprep.mubr.f32.mxu0 0.0
        %977 = vmatmul.mubr.f32.gmra.mxu0 %v900
        %v978 = vpop.f32.mrf.mxu0
        %v979 = vadd.f32 %v891, %v978
        %v980 = vpop.f32.mrf.mxu0
        %981 = vdwg.mxu0
        %v982 = vld [vmem:[%s8] sm:$0xff]
        %v983 = vld [vmem:[%s8 + $0x8] sm:$0xff]
        %v984 = vld [vmem:[%s8 + $0x10] sm:$0xff]
        %v985 = vld [vmem:[%s8 + $0x18] sm:$0xff]
        %v986 = vld [vmem:[%s9] sm:$0x1]
        %990 = vrot.lane.b32.xlu0 %v969, 96
        %v991 = vpop.permute.xlu0 %990
        %992 = vrot.lane.b32.xlu0 %v974, 96
        %v993 = vpop.permute.xlu0 %992
        %994 = vrot.lane.b32.xlu0 %v979, 96
        %v995 = vpop.permute.xlu0 %994
        %vm996 = vcmask 130048
        %v997 = vsel %vm996, %v969, 0
        %v999 = vsel %vm996, %v974, 0
        %v1001 = vsel %vm996, %v979, 0
        %v1003 = vsel %vm996, %v991, 0
        %v1005 = vsel %vm996, %v993, 0
        %v1007 = vsel %vm996, %v995, 0
        %1009 = vmatprep.subr.mxu0 0.0
        %1010 = vmatpush1.xpose.msra.mxu0 0.0
        %1011 = vmatprep.subr.mxu0 0.0
        %1012 = vmatpush1.xpose.msra.mxu0 0.0
        %1013 = vmatprep.subr.mxu0 0.0
        %1014 = vmatpush1.xpose.msra.mxu0 0.0
        %1015 = vmatprep.subr.mxu0 0.0
        %1016 = vmatpush1.xpose.msra.mxu0 0.0
        %1017 = vmatprep.subr.mxu0 0.0
        %1018 = vmatpush1.xpose.msra.mxu0 0.0
        %1019 = vmatprep.subr.mxu0 0.0
        %1020 = vmatpush1.xpose.msra.mxu0 0.0
        %1021 = vmatprep.subr.mxu0 0.0
        %1022 = vmatpush1.xpose.msra.mxu0 0.0
        %1023 = vmatprep.subr.mxu0 0.0
        %1024 = vmatpush1.xpose.msra.mxu0 0.0
        %1025 = vmatprep.subr.mxu0 0.0
        %1026 = vmatpush1.xpose.msra.mxu0 0.0
        %1027 = vmatprep.subr.mxu0 0.0
        %1028 = vmatpush1.xpose.msra.mxu0 0.0
        %1029 = vmatprep.subr.mxu0 0.0
        %1030 = vmatpush1.xpose.msra.mxu0 0.0
        %1031 = vmatprep.subr.mxu0 0.0
        %1032 = vmatpush1.xpose.msra.mxu0 0.0
        %1033 = vmatprep.subr.mxu0 0.0
        %1034 = vmatpush1.xpose.msra.mxu0 0.0
        %1035 = vmatprep.subr.mxu0 0.0
        %1036 = vmatpush1.xpose.msra.mxu0 %v1007
        %1037 = vmatprep.subr.mxu0 0.0
        %1038 = vmatpush1.xpose.msra.mxu0 %v1005
        %1039 = vmatprep.subr.mxu0 0.0
        %1040 = vmatpush1.xpose.msra.mxu0 %v1003
        %1041 = vmatprep.subr.mxu0 0.0
        %1042 = vmatpush2.xpose.msra.mxu0 0.0
        %1043 = vmatprep.subr.mxu0 0.0
        %1044 = vmatpush2.xpose.msra.mxu0 0.0
        %1045 = vmatprep.subr.mxu0 0.0
        %1046 = vmatpush2.xpose.msra.mxu0 0.0
        %1047 = vmatprep.subr.mxu0 0.0
        %1048 = vmatpush2.xpose.msra.mxu0 0.0
        %1049 = vmatprep.subr.mxu0 0.0
        %1050 = vmatpush2.xpose.msra.mxu0 0.0
        %1051 = vmatprep.subr.mxu0 0.0
        %1052 = vmatpush2.xpose.msra.mxu0 0.0
        %1053 = vmatprep.subr.mxu0 0.0
        %1054 = vmatpush2.xpose.msra.mxu0 0.0
        %1055 = vmatprep.subr.mxu0 0.0
        %1056 = vmatpush2.xpose.msra.mxu0 0.0
        %1057 = vmatprep.subr.mxu0 0.0
        %1058 = vmatpush2.xpose.msra.mxu0 0.0
        %1059 = vmatprep.subr.mxu0 0.0
        %1060 = vmatpush2.xpose.msra.mxu0 0.0
        %1061 = vmatprep.subr.mxu0 0.0
        %1062 = vmatpush2.xpose.msra.mxu0 0.0
        %1063 = vmatprep.subr.mxu0 0.0
        %1064 = vmatpush2.xpose.msra.mxu0 0.0
        %1065 = vmatprep.subr.mxu0 0.0
        %1066 = vmatpush2.xpose.msra.mxu0 0.0
        %1067 = vmatprep.subr.mxu0 0.0
        %1068 = vmatpush2.xpose.msra.mxu0 0.0
        %1069 = vmatprep.subr.mxu0 0.0
        %1070 = vmatpush2.xpose.msra.mxu0 0.0
        %1071 = vmatprep.subr.mxu0 0.0
        %1072 = vmatpush2.xpose.msra.mxu0 0.0
        %1073 = vmatprep.mubr.f32.mxu0 0.0
        %1074 = vmatmul.mubr.f32.gmra.mxu0 %v997
        %v1075 = vpop.f32.mrf.mxu0
        %v1076 = vadd.f32 0.0, %v1075
        %v1077 = vpop.f32.mrf.mxu0
        %1078 = vmatprep.mubr.f32.mxu0 0.0
        %1079 = vmatmul.mubr.f32.gmra.mxu0 %v999
        %v1080 = vpop.f32.mrf.mxu0
        %v1081 = vadd.f32 0.0, %v1080
        %v1082 = vpop.f32.mrf.mxu0
        %1083 = vmatprep.mubr.f32.mxu0 0.0
        %1084 = vmatmul.mubr.f32.gmra.mxu0 %v1001
        %v1085 = vpop.f32.mrf.mxu0
        %v1086 = vadd.f32 0.0, %v1085
        %v1087 = vpop.f32.mrf.mxu0
        %1088 = vdwg.mxu0
        %v1089 = vmul.f32 %v1076, 0.25
        %v1090 = vmul.f32 %v1081, 0.25
        %v1091 = vmul.f32 %v1086, 0.25
        %v1092 = vadd.f32 %v1089, %v820
        %v1093 = vadd.f32 %v1090, %v820
        %v1094 = vadd.f32 %v1091, %v820
        %vm1095 = vcmask 195584
        %v1096 = vsel %vm1095, %v1092, -inf
        %1097 = vmax.xlane.f32.xlu0 %v1096
        %v1098 = vpop.xlane.xlu0 %1097
        %v1099 = vsel %vm1095, %v1093, -inf
        %1100 = vmax.xlane.f32.xlu0 %v1099
        %v1101 = vpop.xlane.xlu0 %1100
        %v1102 = vsel %vm1095, %v1094, -inf
        %1103 = vmax.xlane.f32.xlu0 %v1102
        %v1104 = vpop.xlane.xlu0 %1103
        %v1105 = vsub.f32 %v1092, %v1098
        %v1106 = vsub.f32 %v1093, %v1101
        %v1107 = vsub.f32 %v1094, %v1104
        %v1108 = vmul.f32 %v1105, 1.442695
        %v1109 = vpow.pop %v1108
        %v1110 = vmul.f32 %v1106, 1.442695
        %v1111 = vpow.pop %v1110
        %v1112 = vmul.f32 %v1107, 1.442695
        %v1113 = vpow.pop %v1112
        %v1114 = vsel %vm1095, %v1109, 0.0
        %1115 = vadd.xlane.f32.xlu0 %v1114
        %v1116 = vpop.xlane.xlu0 %1115
        %v1117 = vsel %vm1095, %v1111, 0.0
        %1118 = vadd.xlane.f32.xlu0 %v1117
        %v1119 = vpop.xlane.xlu0 %1118
        %v1120 = vsel %vm1095, %v1113, 0.0
        %1121 = vadd.xlane.f32.xlu0 %v1120
        %v1122 = vpop.xlane.xlu0 %1121
        %v1123 = vrcp.pop %v1116
        %v1124 = vrcp.pop %v1119
        %v1125 = vrcp.pop %v1122
        %v1126 = vmul.f32 %v1109, %v1123
        %v1127 = vmul.f32 %v1111, %v1124
        %v1128 = vmul.f32 %v1113, %v1125
        %1129 = vrot.lane.b32.xlu0 %v969, 64
        %v1130 = vpop.permute.xlu0 %1129
        %1131 = vrot.lane.b32.xlu0 %v974, 64
        %v1132 = vpop.permute.xlu0 %1131
        %1133 = vrot.lane.b32.xlu0 %v979, 64
        %v1134 = vpop.permute.xlu0 %1133
        %v1139 = vsel %vm1095, %v1126, 0
        %v1142 = vsel %vm1095, %v1127, 0
        %v1145 = vsel %vm1095, %v1128, 0
        %1147 = vmatprep.subr.mxu0 0.0
        %1148 = vmatpush1.msra.mxu0 0.0
        %1149 = vmatprep.subr.mxu0 0.0
        %1150 = vmatpush1.msra.mxu0 0.0
        %1151 = vmatprep.subr.mxu0 0.0
        %1152 = vmatpush1.msra.mxu0 0.0
        %1153 = vmatprep.subr.mxu0 0.0
        %1154 = vmatpush1.msra.mxu0 0.0
        %1155 = vmatprep.subr.mxu0 0.0
        %1156 = vmatpush1.msra.mxu0 0.0
        %1157 = vmatprep.subr.mxu0 0.0
        %1158 = vmatpush1.msra.mxu0 0.0
        %1159 = vmatprep.subr.mxu0 0.0
        %1160 = vmatpush1.msra.mxu0 0.0
        %1161 = vmatprep.subr.mxu0 0.0
        %1162 = vmatpush1.msra.mxu0 0.0
        %1163 = vmatprep.subr.mxu0 0.0
        %1164 = vmatpush1.msra.mxu0 0.0
        %1165 = vmatprep.subr.mxu0 0.0
        %1166 = vmatpush1.msra.mxu0 0.0
        %1167 = vmatprep.subr.mxu0 0.0
        %1168 = vmatpush1.msra.mxu0 0.0
        %1169 = vmatprep.subr.mxu0 0.0
        %1170 = vmatpush1.msra.mxu0 0.0
        %1171 = vmatprep.subr.mxu0 0.0
        %1172 = vmatpush1.msra.mxu0 0.0
        %1173 = vmatprep.subr.mxu0 0.0
        %1174 = vmatpush1.msra.mxu0 %v1134
        %1175 = vmatprep.subr.mxu0 0.0
        %1176 = vmatpush1.msra.mxu0 %v1132
        %1177 = vmatprep.subr.mxu0 0.0
        %1178 = vmatpush1.msra.mxu0 %v1130
        %1179 = vmatprep.subr.mxu0 0.0
        %1180 = vmatpush2.msra.mxu0 0.0
        %1181 = vmatprep.subr.mxu0 0.0
        %1182 = vmatpush2.msra.mxu0 0.0
        %1183 = vmatprep.subr.mxu0 0.0
        %1184 = vmatpush2.msra.mxu0 0.0
        %1185 = vmatprep.subr.mxu0 0.0
        %1186 = vmatpush2.msra.mxu0 0.0
        %1187 = vmatprep.subr.mxu0 0.0
        %1188 = vmatpush2.msra.mxu0 0.0
        %1189 = vmatprep.subr.mxu0 0.0
        %1190 = vmatpush2.msra.mxu0 0.0
        %1191 = vmatprep.subr.mxu0 0.0
        %1192 = vmatpush2.msra.mxu0 0.0
        %1193 = vmatprep.subr.mxu0 0.0
        %1194 = vmatpush2.msra.mxu0 0.0
        %1195 = vmatprep.subr.mxu0 0.0
        %1196 = vmatpush2.msra.mxu0 0.0
        %1197 = vmatprep.subr.mxu0 0.0
        %1198 = vmatpush2.msra.mxu0 0.0
        %1199 = vmatprep.subr.mxu0 0.0
        %1200 = vmatpush2.msra.mxu0 0.0
        %1201 = vmatprep.subr.mxu0 0.0
        %1202 = vmatpush2.msra.mxu0 0.0
        %1203 = vmatprep.subr.mxu0 0.0
        %1204 = vmatpush2.msra.mxu0 0.0
        %1205 = vmatprep.subr.mxu0 0.0
        %1206 = vmatpush2.msra.mxu0 0.0
        %1207 = vmatprep.subr.mxu0 0.0
        %1208 = vmatpush2.msra.mxu0 0.0
        %1209 = vmatprep.subr.mxu0 0.0
        %1210 = vmatpush2.msra.mxu0 0.0
        %1211 = vmatprep.mubr.f32.mxu0 0.0
        %1212 = vmatmul.mubr.f32.gmra.mxu0 %v1139
        %v1213 = vpop.f32.mrf.mxu0
        %v1214 = vadd.f32 0.0, %v1213
        %v1215 = vpop.f32.mrf.mxu0
        %1216 = vmatprep.mubr.f32.mxu0 0.0
        %1217 = vmatmul.mubr.f32.gmra.mxu0 %v1142
        %v1218 = vpop.f32.mrf.mxu0
        %v1219 = vadd.f32 0.0, %v1218
        %v1220 = vpop.f32.mrf.mxu0
        %1221 = vmatprep.mubr.f32.mxu0 0.0
        %1222 = vmatmul.mubr.f32.gmra.mxu0 %v1145
        %v1223 = vpop.f32.mrf.mxu0
        %v1224 = vadd.f32 0.0, %v1223
        %v1225 = vpop.f32.mrf.mxu0
        %1226 = vdwg.mxu0
        %v1228 = vsel %vm996, %v1214, 0
        %v1231 = vsel %vm996, %v1219, 0
        %v1234 = vsel %vm996, %v1224, 0
        %1236 = vmatprep.subr.mxu0 0.0
        %1237 = vmatpush1.msra.mxu0 0.0
        %1238 = vmatprep.subr.mxu0 0.0
        %1239 = vmatpush1.msra.mxu0 0.0
        %1240 = vmatprep.subr.mxu0 0.0
        %1241 = vmatpush1.msra.mxu0 0.0
        %1242 = vmatprep.subr.mxu0 0.0
        %1243 = vmatpush1.msra.mxu0 0.0
        %1244 = vmatprep.subr.mxu0 0.0
        %1245 = vmatpush1.msra.mxu0 0.0
        %1246 = vmatprep.subr.mxu0 0.0
        %1247 = vmatpush1.msra.mxu0 0.0
        %1248 = vmatprep.subr.mxu0 0.0
        %1249 = vmatpush1.msra.mxu0 0.0
        %1250 = vmatprep.subr.mxu0 0.0
        %1251 = vmatpush1.msra.mxu0 0.0
        %1252 = vmatprep.subr.mxu0 0.0
        %1253 = vmatpush1.msra.mxu0 0.0
        %1254 = vmatprep.subr.mxu0 0.0
        %1255 = vmatpush1.msra.mxu0 0.0
        %1256 = vmatprep.subr.mxu0 0.0
        %1257 = vmatpush1.msra.mxu0 0.0
        %1258 = vmatprep.subr.mxu0 0.0
        %1259 = vmatpush1.msra.mxu0 0.0
        %1260 = vmatprep.subr.mxu0 0.0
        %1261 = vmatpush1.msra.mxu0 0.0
        %1262 = vmatprep.subr.mxu0 0.0
        %1263 = vmatpush1.msra.mxu0 0.0
        %1264 = vmatprep.subr.mxu0 0.0
        %1265 = vmatpush1.msra.mxu0 %v983
        %1266 = vmatprep.subr.mxu0 0.0
        %1267 = vmatpush1.msra.mxu0 %v982
        %1268 = vmatprep.subr.mxu0 0.0
        %1269 = vmatpush2.msra.mxu0 0.0
        %1270 = vmatprep.subr.mxu0 0.0
        %1271 = vmatpush2.msra.mxu0 0.0
        %1272 = vmatprep.subr.mxu0 0.0
        %1273 = vmatpush2.msra.mxu0 0.0
        %1274 = vmatprep.subr.mxu0 0.0
        %1275 = vmatpush2.msra.mxu0 0.0
        %1276 = vmatprep.subr.mxu0 0.0
        %1277 = vmatpush2.msra.mxu0 0.0
        %1278 = vmatprep.subr.mxu0 0.0
        %1279 = vmatpush2.msra.mxu0 0.0
        %1280 = vmatprep.subr.mxu0 0.0
        %1281 = vmatpush2.msra.mxu0 0.0
        %1282 = vmatprep.subr.mxu0 0.0
        %1283 = vmatpush2.msra.mxu0 0.0
        %1284 = vmatprep.subr.mxu0 0.0
        %1285 = vmatpush2.msra.mxu0 0.0
        %1286 = vmatprep.subr.mxu0 0.0
        %1287 = vmatpush2.msra.mxu0 0.0
        %1288 = vmatprep.subr.mxu0 0.0
        %1289 = vmatpush2.msra.mxu0 0.0
        %1290 = vmatprep.subr.mxu0 0.0
        %1291 = vmatpush2.msra.mxu0 0.0
        %1292 = vmatprep.subr.mxu0 0.0
        %1293 = vmatpush2.msra.mxu0 0.0
        %1294 = vmatprep.subr.mxu0 0.0
        %1295 = vmatpush2.msra.mxu0 0.0
        %1296 = vmatprep.subr.mxu0 0.0
        %1297 = vmatpush2.msra.mxu0 0.0
        %1298 = vmatprep.subr.mxu0 0.0
        %1299 = vmatpush2.msra.mxu0 0.0
        %1300 = vmatprep.mubr.f32.mxu0 0.0
        %1301 = vmatmul.mubr.f32.gmra.mxu0 %v1228
        %v1302 = vpop.f32.mrf.mxu0
        %v1303 = vadd.f32 0.0, %v1302
        %v1304 = vpop.f32.mrf.mxu0
        %1305 = vmatprep.mubr.f32.mxu0 0.0
        %1306 = vmatmul.mubr.f32.gmra.mxu0 %v1231
        %v1307 = vpop.f32.mrf.mxu0
        %v1308 = vadd.f32 0.0, %v1307
        %v1309 = vpop.f32.mrf.mxu0
        %1310 = vmatprep.mubr.f32.mxu0 0.0
        %1311 = vmatmul.mubr.f32.gmra.mxu0 %v1234
        %v1312 = vpop.f32.mrf.mxu0
        %v1313 = vadd.f32 0.0, %v1312
        %v1314 = vpop.f32.mrf.mxu0
        %1315 = vdwg.mxu0
        %v1317 = vlaneseq
        %v1318 = vshrl.u32 %v1317, 7
        %v1319 = vsub.s32 0, %v1318
        %v1320 = vrot.slane %v986, %v1319
        %v1322 = vadd.f32 %v1320, %v1303
        %v1323 = vadd.f32 %v1320, %v1308
        %v1324 = vadd.f32 %v1320, %v1313
        %1325 = vrot.lane.b32.xlu0 %v969, 112
        %v1326 = vpop.permute.xlu0 %1325
        %1327 = vrot.lane.b32.xlu0 %v974, 112
        %v1328 = vpop.permute.xlu0 %1327
        %1329 = vrot.lane.b32.xlu0 %v979, 112
        %v1330 = vpop.permute.xlu0 %1329
        %1331 = vrot.lane.b32.xlu0 %v969, 80
        %v1332 = vpop.permute.xlu0 %1331
        %1333 = vrot.lane.b32.xlu0 %v974, 80
        %v1334 = vpop.permute.xlu0 %1333
        %1335 = vrot.lane.b32.xlu0 %v979, 80
        %v1336 = vpop.permute.xlu0 %1335
        %v1337 = vsel %vm996, %v1326, 0
        %v1339 = vsel %vm996, %v1328, 0
        %v1341 = vsel %vm996, %v1330, 0
        %v1343 = vsel %vm996, %v1332, 0
        %v1345 = vsel %vm996, %v1334, 0
        %v1347 = vsel %vm996, %v1336, 0
        %1349 = vmatprep.subr.mxu0 0.0
        %1350 = vmatpush1.xpose.msra.mxu0 0.0
        %1351 = vmatprep.subr.mxu0 0.0
        %1352 = vmatpush1.xpose.msra.mxu0 0.0
        %1353 = vmatprep.subr.mxu0 0.0
        %1354 = vmatpush1.xpose.msra.mxu0 0.0
        %1355 = vmatprep.subr.mxu0 0.0
        %1356 = vmatpush1.xpose.msra.mxu0 0.0
        %1357 = vmatprep.subr.mxu0 0.0
        %1358 = vmatpush1.xpose.msra.mxu0 0.0
        %1359 = vmatprep.subr.mxu0 0.0
        %1360 = vmatpush1.xpose.msra.mxu0 0.0
        %1361 = vmatprep.subr.mxu0 0.0
        %1362 = vmatpush1.xpose.msra.mxu0 0.0
        %1363 = vmatprep.subr.mxu0 0.0
        %1364 = vmatpush1.xpose.msra.mxu0 0.0
        %1365 = vmatprep.subr.mxu0 0.0
        %1366 = vmatpush1.xpose.msra.mxu0 0.0
        %1367 = vmatprep.subr.mxu0 0.0
        %1368 = vmatpush1.xpose.msra.mxu0 0.0
        %1369 = vmatprep.subr.mxu0 0.0
        %1370 = vmatpush1.xpose.msra.mxu0 0.0
        %1371 = vmatprep.subr.mxu0 0.0
        %1372 = vmatpush1.xpose.msra.mxu0 0.0
        %1373 = vmatprep.subr.mxu0 0.0
        %1374 = vmatpush1.xpose.msra.mxu0 0.0
        %1375 = vmatprep.subr.mxu0 0.0
        %1376 = vmatpush1.xpose.msra.mxu0 %v1347
        %1377 = vmatprep.subr.mxu0 0.0
        %1378 = vmatpush1.xpose.msra.mxu0 %v1345
        %1379 = vmatprep.subr.mxu0 0.0
        %1380 = vmatpush1.xpose.msra.mxu0 %v1343
        %1381 = vmatprep.subr.mxu0 0.0
        %1382 = vmatpush2.xpose.msra.mxu0 0.0
        %1383 = vmatprep.subr.mxu0 0.0
        %1384 = vmatpush2.xpose.msra.mxu0 0.0
        %1385 = vmatprep.subr.mxu0 0.0
        %1386 = vmatpush2.xpose.msra.mxu0 0.0
        %1387 = vmatprep.subr.mxu0 0.0
        %1388 = vmatpush2.xpose.msra.mxu0 0.0
        %1389 = vmatprep.subr.mxu0 0.0
        %1390 = vmatpush2.xpose.msra.mxu0 0.0
        %1391 = vmatprep.subr.mxu0 0.0
        %1392 = vmatpush2.xpose.msra.mxu0 0.0
        %1393 = vmatprep.subr.mxu0 0.0
        %1394 = vmatpush2.xpose.msra.mxu0 0.0
        %1395 = vmatprep.subr.mxu0 0.0
        %1396 = vmatpush2.xpose.msra.mxu0 0.0
        %1397 = vmatprep.subr.mxu0 0.0
        %1398 = vmatpush2.xpose.msra.mxu0 0.0
        %1399 = vmatprep.subr.mxu0 0.0
        %1400 = vmatpush2.xpose.msra.mxu0 0.0
        %1401 = vmatprep.subr.mxu0 0.0
        %1402 = vmatpush2.xpose.msra.mxu0 0.0
        %1403 = vmatprep.subr.mxu0 0.0
        %1404 = vmatpush2.xpose.msra.mxu0 0.0
        %1405 = vmatprep.subr.mxu0 0.0
        %1406 = vmatpush2.xpose.msra.mxu0 0.0
        %1407 = vmatprep.subr.mxu0 0.0
        %1408 = vmatpush2.xpose.msra.mxu0 0.0
        %1409 = vmatprep.subr.mxu0 0.0
        %1410 = vmatpush2.xpose.msra.mxu0 0.0
        %1411 = vmatprep.subr.mxu0 0.0
        %1412 = vmatpush2.xpose.msra.mxu0 0.0
        %1413 = vmatprep.mubr.f32.mxu0 0.0
        %1414 = vmatmul.mubr.f32.gmra.mxu0 %v1337
        %v1415 = vpop.f32.mrf.mxu0
        %v1416 = vadd.f32 0.0, %v1415
        %v1417 = vpop.f32.mrf.mxu0
        %1418 = vmatprep.mubr.f32.mxu0 0.0
        %1419 = vmatmul.mubr.f32.gmra.mxu0 %v1339
        %v1420 = vpop.f32.mrf.mxu0
        %v1421 = vadd.f32 0.0, %v1420
        %v1422 = vpop.f32.mrf.mxu0
        %1423 = vmatprep.mubr.f32.mxu0 0.0
        %1424 = vmatmul.mubr.f32.gmra.mxu0 %v1341
        %v1425 = vpop.f32.mrf.mxu0
        %v1426 = vadd.f32 0.0, %v1425
        %v1427 = vpop.f32.mrf.mxu0
        %1428 = vdwg.mxu0
        %v1429 = vmul.f32 %v1416, 0.25
        %v1430 = vmul.f32 %v1421, 0.25
        %v1431 = vmul.f32 %v1426, 0.25
        %v1432 = vadd.f32 %v1429, %v820
        %v1433 = vadd.f32 %v1430, %v820
        %v1434 = vadd.f32 %v1431, %v820
        %v1435 = vsel %vm1095, %v1432, -inf
        %1436 = vmax.xlane.f32.xlu0 %v1435
        %v1437 = vpop.xlane.xlu0 %1436
        %v1438 = vsel %vm1095, %v1433, -inf
        %1439 = vmax.xlane.f32.xlu0 %v1438
        %v1440 = vpop.xlane.xlu0 %1439
        %v1441 = vsel %vm1095, %v1434, -inf
        %1442 = vmax.xlane.f32.xlu0 %v1441
        %v1443 = vpop.xlane.xlu0 %1442
        %v1444 = vsub.f32 %v1432, %v1437
        %v1445 = vsub.f32 %v1433, %v1440
        %v1446 = vsub.f32 %v1434, %v1443
        %v1447 = vmul.f32 %v1444, 1.442695
        %v1448 = vpow.pop %v1447
        %v1449 = vmul.f32 %v1445, 1.442695
        %v1450 = vpow.pop %v1449
        %v1451 = vmul.f32 %v1446, 1.442695
        %v1452 = vpow.pop %v1451
        %v1453 = vsel %vm1095, %v1448, 0.0
        %1454 = vadd.xlane.f32.xlu0 %v1453
        %v1455 = vpop.xlane.xlu0 %1454
        %v1456 = vsel %vm1095, %v1450, 0.0
        %1457 = vadd.xlane.f32.xlu0 %v1456
        %v1458 = vpop.xlane.xlu0 %1457
        %v1459 = vsel %vm1095, %v1452, 0.0
        %1460 = vadd.xlane.f32.xlu0 %v1459
        %v1461 = vpop.xlane.xlu0 %1460
        %v1462 = vrcp.pop %v1455
        %v1463 = vrcp.pop %v1458
        %v1464 = vrcp.pop %v1461
        %v1465 = vmul.f32 %v1448, %v1462
        %v1466 = vmul.f32 %v1450, %v1463
        %v1467 = vmul.f32 %v1452, %v1464
        %1468 = vrot.lane.b32.xlu0 %v969, 48
        %v1469 = vpop.permute.xlu0 %1468
        %1470 = vrot.lane.b32.xlu0 %v974, 48
        %v1471 = vpop.permute.xlu0 %1470
        %1472 = vrot.lane.b32.xlu0 %v979, 48
        %v1473 = vpop.permute.xlu0 %1472
        %v1478 = vsel %vm1095, %v1465, 0
        %v1481 = vsel %vm1095, %v1466, 0
        %v1484 = vsel %vm1095, %v1467, 0
        %1486 = vmatprep.subr.mxu0 0.0
        %1487 = vmatpush1.msra.mxu0 0.0
        %1488 = vmatprep.subr.mxu0 0.0
        %1489 = vmatpush1.msra.mxu0 0.0
        %1490 = vmatprep.subr.mxu0 0.0
        %1491 = vmatpush1.msra.mxu0 0.0
        %1492 = vmatprep.subr.mxu0 0.0
        %1493 = vmatpush1.msra.mxu0 0.0
        %1494 = vmatprep.subr.mxu0 0.0
        %1495 = vmatpush1.msra.mxu0 0.0
        %1496 = vmatprep.subr.mxu0 0.0
        %1497 = vmatpush1.msra.mxu0 0.0
        %1498 = vmatprep.subr.mxu0 0.0
        %1499 = vmatpush1.msra.mxu0 0.0
        %1500 = vmatprep.subr.mxu0 0.0
        %1501 = vmatpush1.msra.mxu0 0.0
        %1502 = vmatprep.subr.mxu0 0.0
        %1503 = vmatpush1.msra.mxu0 0.0
        %1504 = vmatprep.subr.mxu0 0.0
        %1505 = vmatpush1.msra.mxu0 0.0
        %1506 = vmatprep.subr.mxu0 0.0
        %1507 = vmatpush1.msra.mxu0 0.0
        %1508 = vmatprep.subr.mxu0 0.0
        %1509 = vmatpush1.msra.mxu0 0.0
        %1510 = vmatprep.subr.mxu0 0.0
        %1511 = vmatpush1.msra.mxu0 0.0
        %1512 = vmatprep.subr.mxu0 0.0
        %1513 = vmatpush1.msra.mxu0 %v1473
        %1514 = vmatprep.subr.mxu0 0.0
        %1515 = vmatpush1.msra.mxu0 %v1471
        %1516 = vmatprep.subr.mxu0 0.0
        %1517 = vmatpush1.msra.mxu0 %v1469
        %1518 = vmatprep.subr.mxu0 0.0
        %1519 = vmatpush2.msra.mxu0 0.0
        %1520 = vmatprep.subr.mxu0 0.0
        %1521 = vmatpush2.msra.mxu0 0.0
        %1522 = vmatprep.subr.mxu0 0.0
        %1523 = vmatpush2.msra.mxu0 0.0
        %1524 = vmatprep.subr.mxu0 0.0
        %1525 = vmatpush2.msra.mxu0 0.0
        %1526 = vmatprep.subr.mxu0 0.0
        %1527 = vmatpush2.msra.mxu0 0.0
        %1528 = vmatprep.subr.mxu0 0.0
        %1529 = vmatpush2.msra.mxu0 0.0
        %1530 = vmatprep.subr.mxu0 0.0
        %1531 = vmatpush2.msra.mxu0 0.0
        %1532 = vmatprep.subr.mxu0 0.0
        %1533 = vmatpush2.msra.mxu0 0.0
        %1534 = vmatprep.subr.mxu0 0.0
        %1535 = vmatpush2.msra.mxu0 0.0
        %1536 = vmatprep.subr.mxu0 0.0
        %1537 = vmatpush2.msra.mxu0 0.0
        %1538 = vmatprep.subr.mxu0 0.0
        %1539 = vmatpush2.msra.mxu0 0.0
        %1540 = vmatprep.subr.mxu0 0.0
        %1541 = vmatpush2.msra.mxu0 0.0
        %1542 = vmatprep.subr.mxu0 0.0
        %1543 = vmatpush2.msra.mxu0 0.0
        %1544 = vmatprep.subr.mxu0 0.0
        %1545 = vmatpush2.msra.mxu0 0.0
        %1546 = vmatprep.subr.mxu0 0.0
        %1547 = vmatpush2.msra.mxu0 0.0
        %1548 = vmatprep.subr.mxu0 0.0
        %1549 = vmatpush2.msra.mxu0 0.0
        %1550 = vmatprep.mubr.f32.mxu0 0.0
        %1551 = vmatmul.mubr.f32.gmra.mxu0 %v1478
        %v1552 = vpop.f32.mrf.mxu0
        %v1553 = vadd.f32 0.0, %v1552
        %v1554 = vpop.f32.mrf.mxu0
        %1555 = vmatprep.mubr.f32.mxu0 0.0
        %1556 = vmatmul.mubr.f32.gmra.mxu0 %v1481
        %v1557 = vpop.f32.mrf.mxu0
        %v1558 = vadd.f32 0.0, %v1557
        %v1559 = vpop.f32.mrf.mxu0
        %1560 = vmatprep.mubr.f32.mxu0 0.0
        %1561 = vmatmul.mubr.f32.gmra.mxu0 %v1484
        %v1562 = vpop.f32.mrf.mxu0
        %v1563 = vadd.f32 0.0, %v1562
        %v1564 = vpop.f32.mrf.mxu0
        %1565 = vdwg.mxu0
        %v1567 = vsel %vm996, %v1553, 0
        %v1570 = vsel %vm996, %v1558, 0
        %v1573 = vsel %vm996, %v1563, 0
        %1575 = vmatprep.subr.mxu0 0.0
        %1576 = vmatpush1.msra.mxu0 0.0
        %1577 = vmatprep.subr.mxu0 0.0
        %1578 = vmatpush1.msra.mxu0 0.0
        %1579 = vmatprep.subr.mxu0 0.0
        %1580 = vmatpush1.msra.mxu0 0.0
        %1581 = vmatprep.subr.mxu0 0.0
        %1582 = vmatpush1.msra.mxu0 0.0
        %1583 = vmatprep.subr.mxu0 0.0
        %1584 = vmatpush1.msra.mxu0 0.0
        %1585 = vmatprep.subr.mxu0 0.0
        %1586 = vmatpush1.msra.mxu0 0.0
        %1587 = vmatprep.subr.mxu0 0.0
        %1588 = vmatpush1.msra.mxu0 0.0
        %1589 = vmatprep.subr.mxu0 0.0
        %1590 = vmatpush1.msra.mxu0 0.0
        %1591 = vmatprep.subr.mxu0 0.0
        %1592 = vmatpush1.msra.mxu0 0.0
        %1593 = vmatprep.subr.mxu0 0.0
        %1594 = vmatpush1.msra.mxu0 0.0
        %1595 = vmatprep.subr.mxu0 0.0
        %1596 = vmatpush1.msra.mxu0 0.0
        %1597 = vmatprep.subr.mxu0 0.0
        %1598 = vmatpush1.msra.mxu0 0.0
        %1599 = vmatprep.subr.mxu0 0.0
        %1600 = vmatpush1.msra.mxu0 0.0
        %1601 = vmatprep.subr.mxu0 0.0
        %1602 = vmatpush1.msra.mxu0 0.0
        %1603 = vmatprep.subr.mxu0 0.0
        %1604 = vmatpush1.msra.mxu0 %v985
        %1605 = vmatprep.subr.mxu0 0.0
        %1606 = vmatpush1.msra.mxu0 %v984
        %1607 = vmatprep.subr.mxu0 0.0
        %1608 = vmatpush2.msra.mxu0 0.0
        %1609 = vmatprep.subr.mxu0 0.0
        %1610 = vmatpush2.msra.mxu0 0.0
        %1611 = vmatprep.subr.mxu0 0.0
        %1612 = vmatpush2.msra.mxu0 0.0
        %1613 = vmatprep.subr.mxu0 0.0
        %1614 = vmatpush2.msra.mxu0 0.0
        %1615 = vmatprep.subr.mxu0 0.0
        %1616 = vmatpush2.msra.mxu0 0.0
        %1617 = vmatprep.subr.mxu0 0.0
        %1618 = vmatpush2.msra.mxu0 0.0
        %1619 = vmatprep.subr.mxu0 0.0
        %1620 = vmatpush2.msra.mxu0 0.0
        %1621 = vmatprep.subr.mxu0 0.0
        %1622 = vmatpush2.msra.mxu0 0.0
        %1623 = vmatprep.subr.mxu0 0.0
        %1624 = vmatpush2.msra.mxu0 0.0
        %1625 = vmatprep.subr.mxu0 0.0
        %1626 = vmatpush2.msra.mxu0 0.0
        %1627 = vmatprep.subr.mxu0 0.0
        %1628 = vmatpush2.msra.mxu0 0.0
        %1629 = vmatprep.subr.mxu0 0.0
        %1630 = vmatpush2.msra.mxu0 0.0
        %1631 = vmatprep.subr.mxu0 0.0
        %1632 = vmatpush2.msra.mxu0 0.0
        %1633 = vmatprep.subr.mxu0 0.0
        %1634 = vmatpush2.msra.mxu0 0.0
        %1635 = vmatprep.subr.mxu0 0.0
        %1636 = vmatpush2.msra.mxu0 0.0
        %1637 = vmatprep.subr.mxu0 0.0
        %1638 = vmatpush2.msra.mxu0 0.0
        %1639 = vmatprep.mubr.f32.mxu0 0.0
        %1640 = vmatmul.mubr.f32.gmra.mxu0 %v1567
        %v1641 = vpop.f32.mrf.mxu0
        %v1642 = vadd.f32 0.0, %v1641
        %v1643 = vpop.f32.mrf.mxu0
        %1644 = vmatprep.mubr.f32.mxu0 0.0
        %1645 = vmatmul.mubr.f32.gmra.mxu0 %v1570
        %v1646 = vpop.f32.mrf.mxu0
        %v1647 = vadd.f32 0.0, %v1646
        %v1648 = vpop.f32.mrf.mxu0
        %1649 = vmatprep.mubr.f32.mxu0 0.0
        %1650 = vmatmul.mubr.f32.gmra.mxu0 %v1573
        %v1651 = vpop.f32.mrf.mxu0
        %v1652 = vadd.f32 0.0, %v1651
        %v1653 = vpop.f32.mrf.mxu0
        %1654 = vdwg.mxu0
        %v1655 = vadd.f32 %v1322, %v1642
        %v1656 = vadd.f32 %v1323, %v1647
        %v1657 = vadd.f32 %v1324, %v1652
        %v1658 = vadd.f32 %v814, %v1655
        %v1659 = vadd.f32 %v815, %v1656
        %v1660 = vadd.f32 %v816, %v1657
        %v1661 = vld [vmem:[%s10] sm:$0x1]
        %v1662 = vld [vmem:[%s11] sm:$0x1]
        %v1663 = vsel %vm823, %v1658, 0.0
        %1664 = vadd.xlane.f32.xlu0 %v1663
        %v1665 = vpop.xlane.xlu0 %1664
        %v1666 = vsel %vm823, %v1659, 0.0
        %1667 = vadd.xlane.f32.xlu0 %v1666
        %v1668 = vpop.xlane.xlu0 %1667
        %v1669 = vsel %vm823, %v1660, 0.0
        %1670 = vadd.xlane.f32.xlu0 %v1669
        %v1671 = vpop.xlane.xlu0 %1670
        %v1672 = vmul.f32 %v1665, %v833
        %v1673 = vmul.f32 %v1668, %v833
        %v1674 = vmul.f32 %v1671, %v833
        %v1675 = vsub.f32 %v1658, %v1672
        %v1676 = vsub.f32 %v1659, %v1673
        %v1677 = vsub.f32 %v1660, %v1674
        %v1678 = vmul.f32 %v1675, %v1675
        %v1679 = vmul.f32 %v1676, %v1676
        %v1680 = vmul.f32 %v1677, %v1677
        %v1681 = vsel %vm823, %v1678, 0.0
        %1682 = vadd.xlane.f32.xlu0 %v1681
        %v1683 = vpop.xlane.xlu0 %1682
        %v1684 = vsel %vm823, %v1679, 0.0
        %1685 = vadd.xlane.f32.xlu0 %v1684
        %v1686 = vpop.xlane.xlu0 %1685
        %v1687 = vsel %vm823, %v1680, 0.0
        %1688 = vadd.xlane.f32.xlu0 %v1687
        %v1689 = vpop.xlane.xlu0 %1688
        %v1690 = vmul.f32 %v1683, %v833
        %v1691 = vmul.f32 %v1686, %v833
        %v1692 = vmul.f32 %v1689, %v833
        %v1693 = vadd.f32 %v1690, 1e-06
        %v1694 = vadd.f32 %v1691, 1e-06
        %v1695 = vadd.f32 %v1692, 1e-06
        %v1696 = vrsqrt.pop %v1693
        %v1697 = vrsqrt.pop %v1694
        %v1698 = vrsqrt.pop %v1695
        %v1699 = vmul.f32 %v1675, %v1696
        %v1700 = vmul.f32 %v1676, %v1697
        %v1701 = vmul.f32 %v1677, %v1698
        %v1703 = vlaneseq
        %v1704 = vshrl.u32 %v1703, 7
        %v1705 = vsub.s32 0, %v1704
        %v1706 = vrot.slane %v1661, %v1705
        %v1708 = vmul.f32 %v1699, %v1706
        %v1709 = vmul.f32 %v1700, %v1706
        %v1710 = vmul.f32 %v1701, %v1706
        %v1712 = vlaneseq
        %v1713 = vshrl.u32 %v1712, 7
        %v1714 = vsub.s32 0, %v1713
        %v1715 = vrot.slane %v1662, %v1714
        %v1717 = vadd.f32 %v1708, %v1715
        %v1718 = vadd.f32 %v1709, %v1715
        %v1719 = vadd.f32 %v1710, %v1715
        %v1720 = vld [vmem:[%s12] sm:$0xff]
        %v1721 = vld [vmem:[%s12 + $0x8] sm:$0xff]
        %v1722 = vld [vmem:[%s12 + $0x10] sm:$0xff]
        %v1723 = vld [vmem:[%s12 + $0x18] sm:$0xff]
        %v1724 = vld [vmem:[%s13] sm:$0x1]
        %v1726 = vlaneseq
        %v1727 = vshrl.u32 %v1726, 7
        %v1728 = vsub.s32 0, %v1727
        %v1729 = vrot.slane %v1724, %v1728
        %v1732 = vsel %vm823, %v1717, 0
        %v1735 = vsel %vm823, %v1718, 0
        %v1738 = vsel %vm823, %v1719, 0
        %1740 = vmatprep.subr.mxu0 0.0
        %1741 = vmatpush1.msra.mxu0 0.0
        %1742 = vmatprep.subr.mxu0 0.0
        %1743 = vmatpush1.msra.mxu0 0.0
        %1744 = vmatprep.subr.mxu0 0.0
        %1745 = vmatpush1.msra.mxu0 0.0
        %1746 = vmatprep.subr.mxu0 0.0
        %1747 = vmatpush1.msra.mxu0 0.0
        %1748 = vmatprep.subr.mxu0 0.0
        %1749 = vmatpush1.msra.mxu0 0.0
        %1750 = vmatprep.subr.mxu0 0.0
        %1751 = vmatpush1.msra.mxu0 0.0
        %1752 = vmatprep.subr.mxu0 0.0
        %1753 = vmatpush1.msra.mxu0 0.0
        %1754 = vmatprep.subr.mxu0 0.0
        %1755 = vmatpush1.msra.mxu0 0.0
        %1756 = vmatprep.subr.mxu0 0.0
        %1757 = vmatpush1.msra.mxu0 0.0
        %1758 = vmatprep.subr.mxu0 0.0
        %1759 = vmatpush1.msra.mxu0 0.0
        %1760 = vmatprep.subr.mxu0 0.0
        %1761 = vmatpush1.msra.mxu0 0.0
        %1762 = vmatprep.subr.mxu0 0.0
        %1763 = vmatpush1.msra.mxu0 0.0
        %1764 = vmatprep.subr.mxu0 0.0
        %1765 = vmatpush1.msra.mxu0 %v1723
        %1766 = vmatprep.subr.mxu0 0.0
        %1767 = vmatpush1.msra.mxu0 %v1722
        %1768 = vmatprep.subr.mxu0 0.0
        %1769 = vmatpush1.msra.mxu0 %v1721
        %1770 = vmatprep.subr.mxu0 0.0
        %1771 = vmatpush1.msra.mxu0 %v1720
        %1772 = vmatprep.subr.mxu0 0.0
        %1773 = vmatpush2.msra.mxu0 0.0
        %1774 = vmatprep.subr.mxu0 0.0
        %1775 = vmatpush2.msra.mxu0 0.0
        %1776 = vmatprep.subr.mxu0 0.0
        %1777 = vmatpush2.msra.mxu0 0.0
        %1778 = vmatprep.subr.mxu0 0.0
        %1779 = vmatpush2.msra.mxu0 0.0
        %1780 = vmatprep.subr.mxu0 0.0
        %1781 = vmatpush2.msra.mxu0 0.0
        %1782 = vmatprep.subr.mxu0 0.0
        %1783 = vmatpush2.msra.mxu0 0.0
        %1784 = vmatprep.subr.mxu0 0.0
        %1785 = vmatpush2.msra.mxu0 0.0
        %1786 = vmatprep.subr.mxu0 0.0
        %1787 = vmatpush2.msra.mxu0 0.0
        %1788 = vmatprep.subr.mxu0 0.0
        %1789 = vmatpush2.msra.mxu0 0.0
        %1790 = vmatprep.subr.mxu0 0.0
        %1791 = vmatpush2.msra.mxu0 0.0
        %1792 = vmatprep.subr.mxu0 0.0
        %1793 = vmatpush2.msra.mxu0 0.0
        %1794 = vmatprep.subr.mxu0 0.0
        %1795 = vmatpush2.msra.mxu0 0.0
        %1796 = vmatprep.subr.mxu0 0.0
        %1797 = vmatpush2.msra.mxu0 0.0
        %1798 = vmatprep.subr.mxu0 0.0
        %1799 = vmatpush2.msra.mxu0 0.0
        %1800 = vmatprep.subr.mxu0 0.0
        %1801 = vmatpush2.msra.mxu0 0.0
        %1802 = vmatprep.subr.mxu0 0.0
        %1803 = vmatpush2.msra.mxu0 0.0
        %1804 = vmatprep.mubr.f32.mxu0 0.0
        %1805 = vmatmul.mubr.f32.gmra.mxu0 %v1732
        %v1806 = vpop.f32.mrf.mxu0
        %v1807 = vadd.f32 %v1729, %v1806
        %v1808 = vpop.f32.mrf.mxu0
        %1809 = vmatprep.mubr.f32.mxu0 0.0
        %1810 = vmatmul.mubr.f32.gmra.mxu0 %v1735
        %v1811 = vpop.f32.mrf.mxu0
        %v1812 = vadd.f32 %v1729, %v1811
        %v1813 = vpop.f32.mrf.mxu0
        %1814 = vmatprep.mubr.f32.mxu0 0.0
        %1815 = vmatmul.mubr.f32.gmra.mxu0 %v1738
        %v1816 = vpop.f32.mrf.mxu0
        %v1817 = vadd.f32 %v1729, %v1816
        %v1818 = vpop.f32.mrf.mxu0
        %1819 = vdwg.mxu0
        %v1820 = vmul.f32 %v1807, %v1807
        %v1821 = vmul.f32 %v1812, %v1812
        %v1822 = vmul.f32 %v1817, %v1817
        %v1823 = vmul.f32 %v1807, %v1820
        %v1824 = vmul.f32 %v1812, %v1821
        %v1825 = vmul.f32 %v1817, %v1822
        %v1826 = vmul.f32 %v1823, 0.044715
        %v1827 = vmul.f32 %v1824, 0.044715
        %v1828 = vmul.f32 %v1825, 0.044715
        %v1829 = vadd.f32 %v1807, %v1826
        %v1830 = vadd.f32 %v1812, %v1827
        %v1831 = vadd.f32 %v1817, %v1828
        %v1832 = vmul.f32 %v1829, 0.7978846
        %v1833 = vmul.f32 %v1830, 0.7978846
        %v1834 = vmul.f32 %v1831, 0.7978846
        %v1835 = vtanh.pop %v1832
        %v1836 = vtanh.pop %v1833
        %v1837 = vtanh.pop %v1834
        %v1838 = vadd.f32 %v1835, 1.0
        %v1839 = vadd.f32 %v1836, 1.0
        %v1840 = vadd.f32 %v1837, 1.0
        %v1841 = vmul.f32 %v1838, 0.5
        %v1842 = vmul.f32 %v1839, 0.5
        %v1843 = vmul.f32 %v1840, 0.5
        %v1844 = vmul.f32 %v1807, %v1841
        %v1845 = vmul.f32 %v1812, %v1842
        %v1846 = vmul.f32 %v1817, %v1843
        %v1847 = vld [vmem:[%s14] sm:$0xff]
        %v1848 = vld [vmem:[%s14 + $0x8] sm:$0xff]
        %v1849 = vld [vmem:[%s14 + $0x10] sm:$0xff]
        %v1850 = vld [vmem:[%s14 + $0x18] sm:$0xff]
        %v1851 = vld [vmem:[%s14 + $0x20] sm:$0xff]
        %v1852 = vld [vmem:[%s14 + $0x28] sm:$0xff]
        %v1853 = vld [vmem:[%s14 + $0x30] sm:$0xff]
        %v1854 = vld [vmem:[%s14 + $0x38] sm:$0xff]
        %v1855 = vld [vmem:[%s15] sm:$0x1]
        %v1857 = vlaneseq
        %v1858 = vshrl.u32 %v1857, 7
        %v1859 = vsub.s32 0, %v1858
        %v1860 = vrot.slane %v1855, %v1859
        %v1863 = vsel %vm699, %v1844, 0
        %v1866 = vsel %vm699, %v1845, 0
        %v1869 = vsel %vm699, %v1846, 0
        %1871 = vmatprep.subr.mxu0 0.0
        %1872 = vmatpush1.msra.mxu0 0.0
        %1873 = vmatprep.subr.mxu0 0.0
        %1874 = vmatpush1.msra.mxu0 0.0
        %1875 = vmatprep.subr.mxu0 0.0
        %1876 = vmatpush1.msra.mxu0 0.0
        %1877 = vmatprep.subr.mxu0 0.0
        %1878 = vmatpush1.msra.mxu0 0.0
        %1879 = vmatprep.subr.mxu0 0.0
        %1880 = vmatpush1.msra.mxu0 0.0
        %1881 = vmatprep.subr.mxu0 0.0
        %1882 = vmatpush1.msra.mxu0 0.0
        %1883 = vmatprep.subr.mxu0 0.0
        %1884 = vmatpush1.msra.mxu0 0.0
        %1885 = vmatprep.subr.mxu0 0.0
        %1886 = vmatpush1.msra.mxu0 0.0
        %1887 = vmatprep.subr.mxu0 0.0
        %1888 = vmatpush1.msra.mxu0 %v1854
        %1889 = vmatprep.subr.mxu0 0.0
        %1890 = vmatpush1.msra.mxu0 %v1853
        %1891 = vmatprep.subr.mxu0 0.0
        %1892 = vmatpush1.msra.mxu0 %v1852
        %1893 = vmatprep.subr.mxu0 0.0
        %1894 = vmatpush1.msra.mxu0 %v1851
        %1895 = vmatprep.subr.mxu0 0.0
        %1896 = vmatpush1.msra.mxu0 %v1850
        %1897 = vmatprep.subr.mxu0 0.0
        %1898 = vmatpush1.msra.mxu0 %v1849
        %1899 = vmatprep.subr.mxu0 0.0
        %1900 = vmatpush1.msra.mxu0 %v1848
        %1901 = vmatprep.subr.mxu0 0.0
        %1902 = vmatpush1.msra.mxu0 %v1847
        %1903 = vmatprep.subr.mxu0 0.0
        %1904 = vmatpush2.msra.mxu0 0.0
        %1905 = vmatprep.subr.mxu0 0.0
        %1906 = vmatpush2.msra.mxu0 0.0
        %1907 = vmatprep.subr.mxu0 0.0
        %1908 = vmatpush2.msra.mxu0 0.0
        %1909 = vmatprep.subr.mxu0 0.0
        %1910 = vmatpush2.msra.mxu0 0.0
        %1911 = vmatprep.subr.mxu0 0.0
        %1912 = vmatpush2.msra.mxu0 0.0
        %1913 = vmatprep.subr.mxu0 0.0
        %1914 = vmatpush2.msra.mxu0 0.0
        %1915 = vmatprep.subr.mxu0 0.0
        %1916 = vmatpush2.msra.mxu0 0.0
        %1917 = vmatprep.subr.mxu0 0.0
        %1918 = vmatpush2.msra.mxu0 0.0
        %1919 = vmatprep.subr.mxu0 0.0
        %1920 = vmatpush2.msra.mxu0 0.0
        %1921 = vmatprep.subr.mxu0 0.0
        %1922 = vmatpush2.msra.mxu0 0.0
        %1923 = vmatprep.subr.mxu0 0.0
        %1924 = vmatpush2.msra.mxu0 0.0
        %1925 = vmatprep.subr.mxu0 0.0
        %1926 = vmatpush2.msra.mxu0 0.0
        %1927 = vmatprep.subr.mxu0 0.0
        %1928 = vmatpush2.msra.mxu0 0.0
        %1929 = vmatprep.subr.mxu0 0.0
        %1930 = vmatpush2.msra.mxu0 0.0
        %1931 = vmatprep.subr.mxu0 0.0
        %1932 = vmatpush2.msra.mxu0 0.0
        %1933 = vmatprep.subr.mxu0 0.0
        %1934 = vmatpush2.msra.mxu0 0.0
        %1935 = vmatprep.mubr.f32.mxu0 0.0
        %1936 = vmatmul.mubr.f32.gmra.mxu0 %v1863
        %v1937 = vpop.f32.mrf.mxu0
        %v1938 = vadd.f32 %v1860, %v1937
        %v1939 = vpop.f32.mrf.mxu0
        %1940 = vmatprep.mubr.f32.mxu0 0.0
        %1941 = vmatmul.mubr.f32.gmra.mxu0 %v1866
        %v1942 = vpop.f32.mrf.mxu0
        %v1943 = vadd.f32 %v1860, %v1942
        %v1944 = vpop.f32.mrf.mxu0
        %1945 = vmatprep.mubr.f32.mxu0 0.0
        %1946 = vmatmul.mubr.f32.gmra.mxu0 %v1869
        %v1947 = vpop.f32.mrf.mxu0
        %v1948 = vadd.f32 %v1860, %v1947
        %v1949 = vpop.f32.mrf.mxu0
        %1950 = vdwg.mxu0
        %v1951 = vadd.f32 %v1658, %v1938
        %v1952 = vadd.f32 %v1659, %v1943
        %v1953 = vadd.f32 %v1660, %v1948
        %s1954 = scalar_lea.vmem %s4, 1
        %v1955 = vld [vmem:[%s1954] sm:$0x1]
        %s1956 = scalar_lea.vmem %s5, 1
        %v1957 = vld [vmem:[%s1956] sm:$0x1]
        %v1958 = vsel %vm823, %v1951, 0.0
        %1959 = vadd.xlane.f32.xlu0 %v1958
        %v1960 = vpop.xlane.xlu0 %1959
        %v1961 = vsel %vm823, %v1952, 0.0
        %1962 = vadd.xlane.f32.xlu0 %v1961
        %v1963 = vpop.xlane.xlu0 %1962
        %v1964 = vsel %vm823, %v1953, 0.0
        %1965 = vadd.xlane.f32.xlu0 %v1964
        %v1966 = vpop.xlane.xlu0 %1965
        %v1967 = vmul.f32 %v1960, %v833
        %v1968 = vmul.f32 %v1963, %v833
        %v1969 = vmul.f32 %v1966, %v833
        %v1970 = vsub.f32 %v1951, %v1967
        %v1971 = vsub.f32 %v1952, %v1968
        %v1972 = vsub.f32 %v1953, %v1969
        %v1973 = vmul.f32 %v1970, %v1970
        %v1974 = vmul.f32 %v1971, %v1971
        %v1975 = vmul.f32 %v1972, %v1972
        %v1976 = vsel %vm823, %v1973, 0.0
        %1977 = vadd.xlane.f32.xlu0 %v1976
        %v1978 = vpop.xlane.xlu0 %1977
        %v1979 = vsel %vm823, %v1974, 0.0
        %1980 = vadd.xlane.f32.xlu0 %v1979
        %v1981 = vpop.xlane.xlu0 %1980
        %v1982 = vsel %vm823, %v1975, 0.0
        %1983 = vadd.xlane.f32.xlu0 %v1982
        %v1984 = vpop.xlane.xlu0 %1983
        %v1985 = vmul.f32 %v1978, %v833
        %v1986 = vmul.f32 %v1981, %v833
        %v1987 = vmul.f32 %v1984, %v833
        %v1988 = vadd.f32 %v1985, 1e-06
        %v1989 = vadd.f32 %v1986, 1e-06
        %v1990 = vadd.f32 %v1987, 1e-06
        %v1991 = vrsqrt.pop %v1988
        %v1992 = vrsqrt.pop %v1989
        %v1993 = vrsqrt.pop %v1990
        %v1994 = vmul.f32 %v1970, %v1991
        %v1995 = vmul.f32 %v1971, %v1992
        %v1996 = vmul.f32 %v1972, %v1993
        %v1998 = vlaneseq
        %v1999 = vshrl.u32 %v1998, 7
        %v2000 = vsub.s32 0, %v1999
        %v2001 = vrot.slane %v1955, %v2000
        %v2003 = vmul.f32 %v1994, %v2001
        %v2004 = vmul.f32 %v1995, %v2001
        %v2005 = vmul.f32 %v1996, %v2001
        %v2007 = vlaneseq
        %v2008 = vshrl.u32 %v2007, 7
        %v2009 = vsub.s32 0, %v2008
        %v2010 = vrot.slane %v1957, %v2009
        %v2012 = vadd.f32 %v2003, %v2010
        %v2013 = vadd.f32 %v2004, %v2010
        %v2014 = vadd.f32 %v2005, %v2010
        %s2015 = scalar_lea.vmem %s6, 32
        %v2016 = vld [vmem:[%s2015] sm:$0xff]
        %v2017 = vld [vmem:[%s2015 + $0x8] sm:$0xff]
        %v2018 = vld [vmem:[%s2015 + $0x10] sm:$0xff]
        %v2019 = vld [vmem:[%s2015 + $0x18] sm:$0xff]
        %s2020 = scalar_lea.vmem %s7, 1
        %v2021 = vld [vmem:[%s2020] sm:$0x1]
        %v2023 = vlaneseq
        %v2024 = vshrl.u32 %v2023, 7
        %v2025 = vsub.s32 0, %v2024
        %v2026 = vrot.slane %v2021, %v2025
        %v2029 = vsel %vm823, %v2012, 0
        %v2032 = vsel %vm823, %v2013, 0
        %v2035 = vsel %vm823, %v2014, 0
        %2037 = vmatprep.subr.mxu0 0.0
        %2038 = vmatpush1.msra.mxu0 0.0
        %2039 = vmatprep.subr.mxu0 0.0
        %2040 = vmatpush1.msra.mxu0 0.0
        %2041 = vmatprep.subr.mxu0 0.0
        %2042 = vmatpush1.msra.mxu0 0.0
        %2043 = vmatprep.subr.mxu0 0.0
        %2044 = vmatpush1.msra.mxu0 0.0
        %2045 = vmatprep.subr.mxu0 0.0
        %2046 = vmatpush1.msra.mxu0 0.0
        %2047 = vmatprep.subr.mxu0 0.0
        %2048 = vmatpush1.msra.mxu0 0.0
        %2049 = vmatprep.subr.mxu0 0.0
        %2050 = vmatpush1.msra.mxu0 0.0
        %2051 = vmatprep.subr.mxu0 0.0
        %2052 = vmatpush1.msra.mxu0 0.0
        %2053 = vmatprep.subr.mxu0 0.0
        %2054 = vmatpush1.msra.mxu0 0.0
        %2055 = vmatprep.subr.mxu0 0.0
        %2056 = vmatpush1.msra.mxu0 0.0
        %2057 = vmatprep.subr.mxu0 0.0
        %2058 = vmatpush1.msra.mxu0 0.0
        %2059 = vmatprep.subr.mxu0 0.0
        %2060 = vmatpush1.msra.mxu0 0.0
        %2061 = vmatprep.subr.mxu0 0.0
        %2062 = vmatpush1.msra.mxu0 %v2019
        %2063 = vmatprep.subr.mxu0 0.0
        %2064 = vmatpush1.msra.mxu0 %v2018
        %2065 = vmatprep.subr.mxu0 0.0
        %2066 = vmatpush1.msra.mxu0 %v2017
        %2067 = vmatprep.subr.mxu0 0.0
        %2068 = vmatpush1.msra.mxu0 %v2016
        %2069 = vmatprep.subr.mxu0 0.0
        %2070 = vmatpush2.msra.mxu0 0.0
        %2071 = vmatprep.subr.mxu0 0.0
        %2072 = vmatpush2.msra.mxu0 0.0
        %2073 = vmatprep.subr.mxu0 0.0
        %2074 = vmatpush2.msra.mxu0 0.0
        %2075 = vmatprep.subr.mxu0 0.0
        %2076 = vmatpush2.msra.mxu0 0.0
        %2077 = vmatprep.subr.mxu0 0.0
        %2078 = vmatpush2.msra.mxu0 0.0
        %2079 = vmatprep.subr.mxu0 0.0
        %2080 = vmatpush2.msra.mxu0 0.0
        %2081 = vmatprep.subr.mxu0 0.0
        %2082 = vmatpush2.msra.mxu0 0.0
        %2083 = vmatprep.subr.mxu0 0.0
        %2084 = vmatpush2.msra.mxu0 0.0
        %2085 = vmatprep.subr.mxu0 0.0
        %2086 = vmatpush2.msra.mxu0 0.0
        %2087 = vmatprep.subr.mxu0 0.0
        %2088 = vmatpush2.msra.mxu0 0.0
        %2089 = vmatprep.subr.mxu0 0.0
        %2090 = vmatpush2.msra.mxu0 0.0
        %2091 = vmatprep.subr.mxu0 0.0
        %2092 = vmatpush2.msra.mxu0 0.0
        %2093 = vmatprep.subr.mxu0 0.0
        %2094 = vmatpush2.msra.mxu0 0.0
        %2095 = vmatprep.subr.mxu0 0.0
        %2096 = vmatpush2.msra.mxu0 0.0
        %2097 = vmatprep.subr.mxu0 0.0
        %2098 = vmatpush2.msra.mxu0 0.0
        %2099 = vmatprep.subr.mxu0 0.0
        %2100 = vmatpush2.msra.mxu0 0.0
        %2101 = vmatprep.mubr.f32.mxu0 0.0
        %2102 = vmatmul.mubr.f32.gmra.mxu0 %v2029
        %v2103 = vpop.f32.mrf.mxu0
        %v2104 = vadd.f32 %v2026, %v2103
        %v2105 = vpop.f32.mrf.mxu0
        %2106 = vmatprep.mubr.f32.mxu0 0.0
        %2107 = vmatmul.mubr.f32.gmra.mxu0 %v2032
        %v2108 = vpop.f32.mrf.mxu0
        %v2109 = vadd.f32 %v2026, %v2108
        %v2110 = vpop.f32.mrf.mxu0
        %2111 = vmatprep.mubr.f32.mxu0 0.0
        %2112 = vmatmul.mubr.f32.gmra.mxu0 %v2035
        %v2113 = vpop.f32.mrf.mxu0
        %v2114 = vadd.f32 %v2026, %v2113
        %v2115 = vpop.f32.mrf.mxu0
        %2116 = vdwg.mxu0
        %s2117 = scalar_lea.vmem %s8, 32
        %v2118 = vld [vmem:[%s2117] sm:$0xff]
        %v2119 = vld [vmem:[%s2117 + $0x8] sm:$0xff]
        %v2120 = vld [vmem:[%s2117 + $0x10] sm:$0xff]
        %v2121 = vld [vmem:[%s2117 + $0x18] sm:$0xff]
        %s2122 = scalar_lea.vmem %s9, 1
        %v2123 = vld [vmem:[%s2122] sm:$0x1]
        %2127 = vrot.lane.b32.xlu0 %v2104, 96
        %v2128 = vpop.permute.xlu0 %2127
        %2129 = vrot.lane.b32.xlu0 %v2109, 96
        %v2130 = vpop.permute.xlu0 %2129
        %2131 = vrot.lane.b32.xlu0 %v2114, 96
        %v2132 = vpop.permute.xlu0 %2131
        %v2133 = vsel %vm996, %v2104, 0
        %v2135 = vsel %vm996, %v2109, 0
        %v2137 = vsel %vm996, %v2114, 0
        %v2139 = vsel %vm996, %v2128, 0
        %v2141 = vsel %vm996, %v2130, 0
        %v2143 = vsel %vm996, %v2132, 0
        %2145 = vmatprep.subr.mxu0 0.0
        %2146 = vmatpush1.xpose.msra.mxu0 0.0
        %2147 = vmatprep.subr.mxu0 0.0
        %2148 = vmatpush1.xpose.msra.mxu0 0.0
        %2149 = vmatprep.subr.mxu0 0.0
        %2150 = vmatpush1.xpose.msra.mxu0 0.0
        %2151 = vmatprep.subr.mxu0 0.0
        %2152 = vmatpush1.xpose.msra.mxu0 0.0
        %2153 = vmatprep.subr.mxu0 0.0
        %2154 = vmatpush1.xpose.msra.mxu0 0.0
        %2155 = vmatprep.subr.mxu0 0.0
        %2156 = vmatpush1.xpose.msra.mxu0 0.0
        %2157 = vmatprep.subr.mxu0 0.0
        %2158 = vmatpush1.xpose.msra.mxu0 0.0
        %2159 = vmatprep.subr.mxu0 0.0
        %2160 = vmatpush1.xpose.msra.mxu0 0.0
        %2161 = vmatprep.subr.mxu0 0.0
        %2162 = vmatpush1.xpose.msra.mxu0 0.0
        %2163 = vmatprep.subr.mxu0 0.0
        %2164 = vmatpush1.xpose.msra.mxu0 0.0
        %2165 = vmatprep.subr.mxu0 0.0
        %2166 = vmatpush1.xpose.msra.mxu0 0.0
        %2167 = vmatprep.subr.mxu0 0.0
        %2168 = vmatpush1.xpose.msra.mxu0 0.0
        %2169 = vmatprep.subr.mxu0 0.0
        %2170 = vmatpush1.xpose.msra.mxu0 0.0
        %2171 = vmatprep.subr.mxu0 0.0
        %2172 = vmatpush1.xpose.msra.mxu0 %v2143
        %2173 = vmatprep.subr.mxu0 0.0
        %2174 = vmatpush1.xpose.msra.mxu0 %v2141
        %2175 = vmatprep.subr.mxu0 0.0
        %2176 = vmatpush1.xpose.msra.mxu0 %v2139
        %2177 = vmatprep.subr.mxu0 0.0
        %2178 = vmatpush2.xpose.msra.mxu0 0.0
        %2179 = vmatprep.subr.mxu0 0.0
        %2180 = vmatpush2.xpose.msra.mxu0 0.0
        %2181 = vmatprep.subr.mxu0 0.0
        %2182 = vmatpush2.xpose.msra.mxu0 0.0
        %2183 = vmatprep.subr.mxu0 0.0
        %2184 = vmatpush2.xpose.msra.mxu0 0.0
        %2185 = vmatprep.subr.mxu0 0.0
        %2186 = vmatpush2.xpose.msra.mxu0 0.0
        %2187 = vmatprep.subr.mxu0 0.0
        %2188 = vmatpush2.xpose.msra.mxu0 0.0
        %2189 = vmatprep.subr.mxu0 0.0
        %2190 = vmatpush2.xpose.msra.mxu0 0.0
        %2191 = vmatprep.subr.mxu0 0.0
        %2192 = vmatpush2.xpose.msra.mxu0 0.0
        %2193 = vmatprep.subr.mxu0 0.0
        %2194 = vmatpush2.xpose.msra.mxu0 0.0
        %2195 = vmatprep.subr.mxu0 0.0
        %2196 = vmatpush2.xpose.msra.mxu0 0.0
        %2197 = vmatprep.subr.mxu0 0.0
        %2198 = vmatpush2.xpose.msra.mxu0 0.0
        %2199 = vmatprep.subr.mxu0 0.0
        %2200 = vmatpush2.xpose.msra.mxu0 0.0
        %2201 = vmatprep.subr.mxu0 0.0
        %2202 = vmatpush2.xpose.msra.mxu0 0.0
        %2203 = vmatprep.subr.mxu0 0.0
        %2204 = vmatpush2.xpose.msra.mxu0 0.0
        %2205 = vmatprep.subr.mxu0 0.0
        %2206 = vmatpush2.xpose.msra.mxu0 0.0
        %2207 = vmatprep.subr.mxu0 0.0
        %2208 = vmatpush2.xpose.msra.mxu0 0.0
        %2209 = vmatprep.mubr.f32.mxu0 0.0
        %2210 = vmatmul.mubr.f32.gmra.mxu0 %v2133
        %v2211 = vpop.f32.mrf.mxu0
        %v2212 = vadd.f32 0.0, %v2211
        %v2213 = vpop.f32.mrf.mxu0
        %2214 = vmatprep.mubr.f32.mxu0 0.0
        %2215 = vmatmul.mubr.f32.gmra.mxu0 %v2135
        %v2216 = vpop.f32.mrf.mxu0
        %v2217 = vadd.f32 0.0, %v2216
        %v2218 = vpop.f32.mrf.mxu0
        %2219 = vmatprep.mubr.f32.mxu0 0.0
        %2220 = vmatmul.mubr.f32.gmra.mxu0 %v2137
        %v2221 = vpop.f32.mrf.mxu0
        %v2222 = vadd.f32 0.0, %v2221
        %v2223 = vpop.f32.mrf.mxu0
        %2224 = vdwg.mxu0
        %v2225 = vmul.f32 %v2212, 0.25
        %v2226 = vmul.f32 %v2217, 0.25
        %v2227 = vmul.f32 %v2222, 0.25
        %v2228 = vadd.f32 %v2225, %v820
        %v2229 = vadd.f32 %v2226, %v820
        %v2230 = vadd.f32 %v2227, %v820
        %v2231 = vsel %vm1095, %v2228, -inf
        %2232 = vmax.xlane.f32.xlu0 %v2231
        %v2233 = vpop.xlane.xlu0 %2232
        %v2234 = vsel %vm1095, %v2229, -inf
        %2235 = vmax.xlane.f32.xlu0 %v2234
        %v2236 = vpop.xlane.xlu0 %2235
        %v2237 = vsel %vm1095, %v2230, -inf
        %2238 = vmax.xlane.f32.xlu0 %v2237
        %v2239 = vpop.xlane.xlu0 %2238
        %v2240 = vsub.f32 %v2228, %v2233
        %v2241 = vsub.f32 %v2229, %v2236
        %v2242 = vsub.f32 %v2230, %v2239
        %v2243 = vmul.f32 %v2240, 1.442695
        %v2244 = vpow.pop %v2243
        %v2245 = vmul.f32 %v2241, 1.442695
        %v2246 = vpow.pop %v2245
        %v2247 = vmul.f32 %v2242, 1.442695
        %v2248 = vpow.pop %v2247
        %v2249 = vsel %vm1095, %v2244, 0.0
        %2250 = vadd.xlane.f32.xlu0 %v2249
        %v2251 = vpop.xlane.xlu0 %2250
        %v2252 = vsel %vm1095, %v2246, 0.0
        %2253 = vadd.xlane.f32.xlu0 %v2252
        %v2254 = vpop.xlane.xlu0 %2253
        %v2255 = vsel %vm1095, %v2248, 0.0
        %2256 = vadd.xlane.f32.xlu0 %v2255
        %v2257 = vpop.xlane.xlu0 %2256
        %v2258 = vrcp.pop %v2251
        %v2259 = vrcp.pop %v2254
        %v2260 = vrcp.pop %v2257
        %v2261 = vmul.f32 %v2244, %v2258
        %v2262 = vmul.f32 %v2246, %v2259
        %v2263 = vmul.f32 %v2248, %v2260
        %2264 = vrot.lane.b32.xlu0 %v2104, 64
        %v2265 = vpop.permute.xlu0 %2264
        %2266 = vrot.lane.b32.xlu0 %v2109, 64
        %v2267 = vpop.permute.xlu0 %2266
        %2268 = vrot.lane.b32.xlu0 %v2114, 64
        %v2269 = vpop.permute.xlu0 %2268
        %v2274 = vsel %vm1095, %v2261, 0
        %v2277 = vsel %vm1095, %v2262, 0
        %v2280 = vsel %vm1095, %v2263, 0
        %2282 = vmatprep.subr.mxu0 0.0
        %2283 = vmatpush1.msra.mxu0 0.0
        %2284 = vmatprep.subr.mxu0 0.0
        %2285 = vmatpush1.msra.mxu0 0.0
        %2286 = vmatprep.subr.mxu0 0.0
        %2287 = vmatpush1.msra.mxu0 0.0
        %2288 = vmatprep.subr.mxu0 0.0
        %2289 = vmatpush1.msra.mxu0 0.0
        %2290 = vmatprep.subr.mxu0 0.0
        %2291 = vmatpush1.msra.mxu0 0.0
        %2292 = vmatprep.subr.mxu0 0.0
        %2293 = vmatpush1.msra.mxu0 0.0
        %2294 = vmatprep.subr.mxu0 0.0
        %2295 = vmatpush1.msra.mxu0 0.0
        %2296 = vmatprep.subr.mxu0 0.0
        %2297 = vmatpush1.msra.mxu0 0.0
        %2298 = vmatprep.subr.mxu0 0.0
        %2299 = vmatpush1.msra.mxu0 0.0
        %2300 = vmatprep.subr.mxu0 0.0
        %2301 = vmatpush1.msra.mxu0 0.0
        %2302 = vmatprep.subr.mxu0 0.0
        %2303 = vmatpush1.msra.mxu0 0.0
        %2304 = vmatprep.subr.mxu0 0.0
        %2305 = vmatpush1.msra.mxu0 0.0
        %2306 = vmatprep.subr.mxu0 0.0
        %2307 = vmatpush1.msra.mxu0 0.0
        %2308 = vmatprep.subr.mxu0 0.0
        %2309 = vmatpush1.msra.mxu0 %v2269
        %2310 = vmatprep.subr.mxu0 0.0
        %2311 = vmatpush1.msra.mxu0 %v2267
        %2312 = vmatprep.subr.mxu0 0.0
        %2313 = vmatpush1.msra.mxu0 %v2265
        %2314 = vmatprep.subr.mxu0 0.0
        %2315 = vmatpush2.msra.mxu0 0.0
        %2316 = vmatprep.subr.mxu0 0.0
        %2317 = vmatpush2.msra.mxu0 0.0
        %2318 = vmatprep.subr.mxu0 0.0
        %2319 = vmatpush2.msra.mxu0 0.0
        %2320 = vmatprep.subr.mxu0 0.0
        %2321 = vmatpush2.msra.mxu0 0.0
        %2322 = vmatprep.subr.mxu0 0.0
        %2323 = vmatpush2.msra.mxu0 0.0
        %2324 = vmatprep.subr.mxu0 0.0
        %2325 = vmatpush2.msra.mxu0 0.0
        %2326 = vmatprep.subr.mxu0 0.0
        %2327 = vmatpush2.msra.mxu0 0.0
        %2328 = vmatprep.subr.mxu0 0.0
        %2329 = vmatpush2.msra.mxu0 0.0
        %2330 = vmatprep.subr.mxu0 0.0
        %2331 = vmatpush2.msra.mxu0 0.0
        %2332 = vmatprep.subr.mxu0 0.0
        %2333 = vmatpush2.msra.mxu0 0.0
        %2334 = vmatprep.subr.mxu0 0.0
        %2335 = vmatpush2.msra.mxu0 0.0
        %2336 = vmatprep.subr.mxu0 0.0
        %2337 = vmatpush2.msra.mxu0 0.0
        %2338 = vmatprep.subr.mxu0 0.0
        %2339 = vmatpush2.msra.mxu0 0.0
        %2340 = vmatprep.subr.mxu0 0.0
        %2341 = vmatpush2.msra.mxu0 0.0
        %2342 = vmatprep.subr.mxu0 0.0
        %2343 = vmatpush2.msra.mxu0 0.0
        %2344 = vmatprep.subr.mxu0 0.0
        %2345 = vmatpush2.msra.mxu0 0.0
        %2346 = vmatprep.mubr.f32.mxu0 0.0
        %2347 = vmatmul.mubr.f32.gmra.mxu0 %v2274
        %v2348 = vpop.f32.mrf.mxu0
        %v2349 = vadd.f32 0.0, %v2348
        %v2350 = vpop.f32.mrf.mxu0
        %2351 = vmatprep.mubr.f32.mxu0 0.0
        %2352 = vmatmul.mubr.f32.gmra.mxu0 %v2277
        %v2353 = vpop.f32.mrf.mxu0
        %v2354 = vadd.f32 0.0, %v2353
        %v2355 = vpop.f32.mrf.mxu0
        %2356 = vmatprep.mubr.f32.mxu0 0.0
        %2357 = vmatmul.mubr.f32.gmra.mxu0 %v2280
        %v2358 = vpop.f32.mrf.mxu0
        %v2359 = vadd.f32 0.0, %v2358
        %v2360 = vpop.f32.mrf.mxu0
        %2361 = vdwg.mxu0
        %v2363 = vsel %vm996, %v2349, 0
        %v2366 = vsel %vm996, %v2354, 0
        %v2369 = vsel %vm996, %v2359, 0
        %2371 = vmatprep.subr.mxu0 0.0
        %2372 = vmatpush1.msra.mxu0 0.0
        %2373 = vmatprep.subr.mxu0 0.0
        %2374 = vmatpush1.msra.mxu0 0.0
        %2375 = vmatprep.subr.mxu0 0.0
        %2376 = vmatpush1.msra.mxu0 0.0
        %2377 = vmatprep.subr.mxu0 0.0
        %2378 = vmatpush1.msra.mxu0 0.0
        %2379 = vmatprep.subr.mxu0 0.0
        %2380 = vmatpush1.msra.mxu0 0.0
        %2381 = vmatprep.subr.mxu0 0.0
        %2382 = vmatpush1.msra.mxu0 0.0
        %2383 = vmatprep.subr.mxu0 0.0
        %2384 = vmatpush1.msra.mxu0 0.0
        %2385 = vmatprep.subr.mxu0 0.0
        %2386 = vmatpush1.msra.mxu0 0.0
        %2387 = vmatprep.subr.mxu0 0.0
        %2388 = vmatpush1.msra.mxu0 0.0
        %2389 = vmatprep.subr.mxu0 0.0
        %2390 = vmatpush1.msra.mxu0 0.0
        %2391 = vmatprep.subr.mxu0 0.0
        %2392 = vmatpush1.msra.mxu0 0.0
        %2393 = vmatprep.subr.mxu0 0.0
        %2394 = vmatpush1.msra.mxu0 0.0
        %2395 = vmatprep.subr.mxu0 0.0
        %2396 = vmatpush1.msra.mxu0 0.0
        %2397 = vmatprep.subr.mxu0 0.0
        %2398 = vmatpush1.msra.mxu0 0.0
        %2399 = vmatprep.subr.mxu0 0.0
        %2400 = vmatpush1.msra.mxu0 %v2119
        %2401 = vmatprep.subr.mxu0 0.0
        %2402 = vmatpush1.msra.mxu0 %v2118
        %2403 = vmatprep.subr.mxu0 0.0
        %2404 = vmatpush2.msra.mxu0 0.0
        %2405 = vmatprep.subr.mxu0 0.0
        %2406 = vmatpush2.msra.mxu0 0.0
        %2407 = vmatprep.subr.mxu0 0.0
        %2408 = vmatpush2.msra.mxu0 0.0
        %2409 = vmatprep.subr.mxu0 0.0
        %2410 = vmatpush2.msra.mxu0 0.0
        %2411 = vmatprep.subr.mxu0 0.0
        %2412 = vmatpush2.msra.mxu0 0.0
        %2413 = vmatprep.subr.mxu0 0.0
        %2414 = vmatpush2.msra.mxu0 0.0
        %2415 = vmatprep.subr.mxu0 0.0
        %2416 = vmatpush2.msra.mxu0 0.0
        %2417 = vmatprep.subr.mxu0 0.0
        %2418 = vmatpush2.msra.mxu0 0.0
        %2419 = vmatprep.subr.mxu0 0.0
        %2420 = vmatpush2.msra.mxu0 0.0
        %2421 = vmatprep.subr.mxu0 0.0
        %2422 = vmatpush2.msra.mxu0 0.0
        %2423 = vmatprep.subr.mxu0 0.0
        %2424 = vmatpush2.msra.mxu0 0.0
        %2425 = vmatprep.subr.mxu0 0.0
        %2426 = vmatpush2.msra.mxu0 0.0
        %2427 = vmatprep.subr.mxu0 0.0
        %2428 = vmatpush2.msra.mxu0 0.0
        %2429 = vmatprep.subr.mxu0 0.0
        %2430 = vmatpush2.msra.mxu0 0.0
        %2431 = vmatprep.subr.mxu0 0.0
        %2432 = vmatpush2.msra.mxu0 0.0
        %2433 = vmatprep.subr.mxu0 0.0
        %2434 = vmatpush2.msra.mxu0 0.0
        %2435 = vmatprep.mubr.f32.mxu0 0.0
        %2436 = vmatmul.mubr.f32.gmra.mxu0 %v2363
        %v2437 = vpop.f32.mrf.mxu0
        %v2438 = vadd.f32 0.0, %v2437
        %v2439 = vpop.f32.mrf.mxu0
        %2440 = vmatprep.mubr.f32.mxu0 0.0
        %2441 = vmatmul.mubr.f32.gmra.mxu0 %v2366
        %v2442 = vpop.f32.mrf.mxu0
        %v2443 = vadd.f32 0.0, %v2442
        %v2444 = vpop.f32.mrf.mxu0
        %2445 = vmatprep.mubr.f32.mxu0 0.0
        %2446 = vmatmul.mubr.f32.gmra.mxu0 %v2369
        %v2447 = vpop.f32.mrf.mxu0
        %v2448 = vadd.f32 0.0, %v2447
        %v2449 = vpop.f32.mrf.mxu0
        %2450 = vdwg.mxu0
        %v2452 = vlaneseq
        %v2453 = vshrl.u32 %v2452, 7
        %v2454 = vsub.s32 0, %v2453
        %v2455 = vrot.slane %v2123, %v2454
        %v2457 = vadd.f32 %v2455, %v2438
        %v2458 = vadd.f32 %v2455, %v2443
        %v2459 = vadd.f32 %v2455, %v2448
        %2460 = vrot.lane.b32.xlu0 %v2104, 112
        %v2461 = vpop.permute.xlu0 %2460
        %2462 = vrot.lane.b32.xlu0 %v2109, 112
        %v2463 = vpop.permute.xlu0 %2462
        %2464 = vrot.lane.b32.xlu0 %v2114, 112
        %v2465 = vpop.permute.xlu0 %2464
        %2466 = vrot.lane.b32.xlu0 %v2104, 80
        %v2467 = vpop.permute.xlu0 %2466
        %2468 = vrot.lane.b32.xlu0 %v2109, 80
        %v2469 = vpop.permute.xlu0 %2468
        %2470 = vrot.lane.b32.xlu0 %v2114, 80
        %v2471 = vpop.permute.xlu0 %2470
        %v2472 = vsel %vm996, %v2461, 0
        %v2474 = vsel %vm996, %v2463, 0
        %v2476 = vsel %vm996, %v2465, 0
        %v2478 = vsel %vm996, %v2467, 0
        %v2480 = vsel %vm996, %v2469, 0
        %v2482 = vsel %vm996, %v2471, 0
        %2484 = vmatprep.subr.mxu0 0.0
        %2485 = vmatpush1.xpose.msra.mxu0 0.0
        %2486 = vmatprep.subr.mxu0 0.0
        %2487 = vmatpush1.xpose.msra.mxu0 0.0
        %2488 = vmatprep.subr.mxu0 0.0
        %2489 = vmatpush1.xpose.msra.mxu0 0.0
        %2490 = vmatprep.subr.mxu0 0.0
        %2491 = vmatpush1.xpose.msra.mxu0 0.0
        %2492 = vmatprep.subr.mxu0 0.0
        %2493 = vmatpush1.xpose.msra.mxu0 0.0
        %2494 = vmatprep.subr.mxu0 0.0
        %2495 = vmatpush1.xpose.msra.mxu0 0.0
        %2496 = vmatprep.subr.mxu0 0.0
        %2497 = vmatpush1.xpose.msra.mxu0 0.0
        %2498 = vmatprep.subr.mxu0 0.0
        %2499 = vmatpush1.xpose.msra.mxu0 0.0
        %2500 = vmatprep.subr.mxu0 0.0
        %2501 = vmatpush1.xpose.msra.mxu0 0.0
        %2502 = vmatprep.subr.mxu0 0.0
        %2503 = vmatpush1.xpose.msra.mxu0 0.0
        %2504 = vmatprep.subr.mxu0 0.0
        %2505 = vmatpush1.xpose.msra.mxu0 0.0
        %2506 = vmatprep.subr.mxu0 0.0
        %2507 = vmatpush1.xpose.msra.mxu0 0.0
        %2508 = vmatprep.subr.mxu0 0.0
        %2509 = vmatpush1.xpose.msra.mxu0 0.0
        %2510 = vmatprep.subr.mxu0 0.0
        %2511 = vmatpush1.xpose.msra.mxu0 %v2482
        %2512 = vmatprep.subr.mxu0 0.0
        %2513 = vmatpush1.xpose.msra.mxu0 %v2480
        %2514 = vmatprep.subr.mxu0 0.0
        %2515 = vmatpush1.xpose.msra.mxu0 %v2478
        %2516 = vmatprep.subr.mxu0 0.0
        %2517 = vmatpush2.xpose.msra.mxu0 0.0
        %2518 = vmatprep.subr.mxu0 0.0
        %2519 = vmatpush2.xpose.msra.mxu0 0.0
        %2520 = vmatprep.subr.mxu0 0.0
        %2521 = vmatpush2.xpose.msra.mxu0 0.0
        %2522 = vmatprep.subr.mxu0 0.0
        %2523 = vmatpush2.xpose.msra.mxu0 0.0
        %2524 = vmatprep.subr.mxu0 0.0
        %2525 = vmatpush2.xpose.msra.mxu0 0.0
        %2526 = vmatprep.subr.mxu0 0.0
        %2527 = vmatpush2.xpose.msra.mxu0 0.0
        %2528 = vmatprep.subr.mxu0 0.0
        %2529 = vmatpush2.xpose.msra.mxu0 0.0
        %2530 = vmatprep.subr.mxu0 0.0
        %2531 = vmatpush2.xpose.msra.mxu0 0.0
        %2532 = vmatprep.subr.mxu0 0.0
        %2533 = vmatpush2.xpose.msra.mxu0 0.0
        %2534 = vmatprep.subr.mxu0 0.0
        %2535 = vmatpush2.xpose.msra.mxu0 0.0
        %2536 = vmatprep.subr.mxu0 0.0
        %2537 = vmatpush2.xpose.msra.mxu0 0.0
        %2538 = vmatprep.subr.mxu0 0.0
        %2539 = vmatpush2.xpose.msra.mxu0 0.0
        %2540 = vmatprep.subr.mxu0 0.0
        %2541 = vmatpush2.xpose.msra.mxu0 0.0
        %2542 = vmatprep.subr.mxu0 0.0
        %2543 = vmatpush2.xpose.msra.mxu0 0.0
        %2544 = vmatprep.subr.mxu0 0.0
        %2545 = vmatpush2.xpose.msra.mxu0 0.0
        %2546 = vmatprep.subr.mxu0 0.0
        %2547 = vmatpush2.xpose.msra.mxu0 0.0
        %2548 = vmatprep.mubr.f32.mxu0 0.0
        %2549 = vmatmul.mubr.f32.gmra.mxu0 %v2472
        %v2550 = vpop.f32.mrf.mxu0
        %v2551 = vadd.f32 0.0, %v2550
        %v2552 = vpop.f32.mrf.mxu0
        %2553 = vmatprep.mubr.f32.mxu0 0.0
        %2554 = vmatmul.mubr.f32.gmra.mxu0 %v2474
        %v2555 = vpop.f32.mrf.mxu0
        %v2556 = vadd.f32 0.0, %v2555
        %v2557 = vpop.f32.mrf.mxu0
        %2558 = vmatprep.mubr.f32.mxu0 0.0
        %2559 = vmatmul.mubr.f32.gmra.mxu0 %v2476
        %v2560 = vpop.f32.mrf.mxu0
        %v2561 = vadd.f32 0.0, %v2560
        %v2562 = vpop.f32.mrf.mxu0
        %2563 = vdwg.mxu0
        %v2564 = vmul.f32 %v2551, 0.25
        %v2565 = vmul.f32 %v2556, 0.25
        %v2566 = vmul.f32 %v2561, 0.25
        %v2567 = vadd.f32 %v2564, %v820
        %v2568 = vadd.f32 %v2565, %v820
        %v2569 = vadd.f32 %v2566, %v820
        %v2570 = vsel %vm1095, %v2567, -inf
        %2571 = vmax.xlane.f32.xlu0 %v2570
        %v2572 = vpop.xlane.xlu0 %2571
        %v2573 = vsel %vm1095, %v2568, -inf
        %2574 = vmax.xlane.f32.xlu0 %v2573
        %v2575 = vpop.xlane.xlu0 %2574
        %v2576 = vsel %vm1095, %v2569, -inf
        %2577 = vmax.xlane.f32.xlu0 %v2576
        %v2578 = vpop.xlane.xlu0 %2577
        %v2579 = vsub.f32 %v2567, %v2572
        %v2580 = vsub.f32 %v2568, %v2575
        %v2581 = vsub.f32 %v2569, %v2578
        %v2582 = vmul.f32 %v2579, 1.442695
        %v2583 = vpow.pop %v2582
        %v2584 = vmul.f32 %v2580, 1.442695
        %v2585 = vpow.pop %v2584
        %v2586 = vmul.f32 %v2581, 1.442695
        %v2587 = vpow.pop %v2586
        %v2588 = vsel %vm1095, %v2583, 0.0
        %2589 = vadd.xlane.f32.xlu0 %v2588
        %v2590 = vpop.xlane.xlu0 %2589
        %v2591 = vsel %vm1095, %v2585, 0.0
        %2592 = vadd.xlane.f32.xlu0 %v2591
        %v2593 = vpop.xlane.xlu0 %2592
        %v2594 = vsel %vm1095, %v2587, 0.0
        %2595 = vadd.xlane.f32.xlu0 %v2594
        %v2596 = vpop.xlane.xlu0 %2595
        %v2597 = vrcp.pop %v2590
        %v2598 = vrcp.pop %v2593
        %v2599 = vrcp.pop %v2596
        %v2600 = vmul.f32 %v2583, %v2597
        %v2601 = vmul.f32 %v2585, %v2598
        %v2602 = vmul.f32 %v2587, %v2599
        %2603 = vrot.lane.b32.xlu0 %v2104, 48
        %v2604 = vpop.permute.xlu0 %2603
        %2605 = vrot.lane.b32.xlu0 %v2109, 48
        %v2606 = vpop.permute.xlu0 %2605
        %2607 = vrot.lane.b32.xlu0 %v2114, 48
        %v2608 = vpop.permute.xlu0 %2607
        %v2613 = vsel %vm1095, %v2600, 0
        %v2616 = vsel %vm1095, %v2601, 0
        %v2619 = vsel %vm1095, %v2602, 0
        %2621 = vmatprep.subr.mxu0 0.0
        %2622 = vmatpush1.msra.mxu0 0.0
        %2623 = vmatprep.subr.mxu0 0.0
        %2624 = vmatpush1.msra.mxu0 0.0
        %2625 = vmatprep.subr.mxu0 0.0
        %2626 = vmatpush1.msra.mxu0 0.0
        %2627 = vmatprep.subr.mxu0 0.0
        %2628 = vmatpush1.msra.mxu0 0.0
        %2629 = vmatprep.subr.mxu0 0.0
        %2630 = vmatpush1.msra.mxu0 0.0
        %2631 = vmatprep.subr.mxu0 0.0
        %2632 = vmatpush1.msra.mxu0 0.0
        %2633 = vmatprep.subr.mxu0 0.0
        %2634 = vmatpush1.msra.mxu0 0.0
        %2635 = vmatprep.subr.mxu0 0.0
        %2636 = vmatpush1.msra.mxu0 0.0
        %2637 = vmatprep.subr.mxu0 0.0
        %2638 = vmatpush1.msra.mxu0 0.0
        %2639 = vmatprep.subr.mxu0 0.0
        %2640 = vmatpush1.msra.mxu0 0.0
        %2641 = vmatprep.subr.mxu0 0.0
        %2642 = vmatpush1.msra.mxu0 0.0
        %2643 = vmatprep.subr.mxu0 0.0
        %2644 = vmatpush1.msra.mxu0 0.0
        %2645 = vmatprep.subr.mxu0 0.0
        %2646 = vmatpush1.msra.mxu0 0.0
        %2647 = vmatprep.subr.mxu0 0.0
        %2648 = vmatpush1.msra.mxu0 %v2608
        %2649 = vmatprep.subr.mxu0 0.0
        %2650 = vmatpush1.msra.mxu0 %v2606
        %2651 = vmatprep.subr.mxu0 0.0
        %2652 = vmatpush1.msra.mxu0 %v2604
        %2653 = vmatprep.subr.mxu0 0.0
        %2654 = vmatpush2.msra.mxu0 0.0
        %2655 = vmatprep.subr.mxu0 0.0
        %2656 = vmatpush2.msra.mxu0 0.0
        %2657 = vmatprep.subr.mxu0 0.0
        %2658 = vmatpush2.msra.mxu0 0.0
        %2659 = vmatprep.subr.mxu0 0.0
        %2660 = vmatpush2.msra.mxu0 0.0
        %2661 = vmatprep.subr.mxu0 0.0
        %2662 = vmatpush2.msra.mxu0 0.0
        %2663 = vmatprep.subr.mxu0 0.0
        %2664 = vmatpush2.msra.mxu0 0.0
        %2665 = vmatprep.subr.mxu0 0.0
        %2666 = vmatpush2.msra.mxu0 0.0
        %2667 = vmatprep.subr.mxu0 0.0
        %2668 = vmatpush2.msra.mxu0 0.0
        %2669 = vmatprep.subr.mxu0 0.0
        %2670 = vmatpush2.msra.mxu0 0.0
        %2671 = vmatprep.subr.mxu0 0.0
        %2672 = vmatpush2.msra.mxu0 0.0
        %2673 = vmatprep.subr.mxu0 0.0
        %2674 = vmatpush2.msra.mxu0 0.0
        %2675 = vmatprep.subr.mxu0 0.0
        %2676 = vmatpush2.msra.mxu0 0.0
        %2677 = vmatprep.subr.mxu0 0.0
        %2678 = vmatpush2.msra.mxu0 0.0
        %2679 = vmatprep.subr.mxu0 0.0
        %2680 = vmatpush2.msra.mxu0 0.0
        %2681 = vmatprep.subr.mxu0 0.0
        %2682 = vmatpush2.msra.mxu0 0.0
        %2683 = vmatprep.subr.mxu0 0.0
        %2684 = vmatpush2.msra.mxu0 0.0
        %2685 = vmatprep.mubr.f32.mxu0 0.0
        %2686 = vmatmul.mubr.f32.gmra.mxu0 %v2613
        %v2687 = vpop.f32.mrf.mxu0
        %v2688 = vadd.f32 0.0, %v2687
        %v2689 = vpop.f32.mrf.mxu0
        %2690 = vmatprep.mubr.f32.mxu0 0.0
        %2691 = vmatmul.mubr.f32.gmra.mxu0 %v2616
        %v2692 = vpop.f32.mrf.mxu0
        %v2693 = vadd.f32 0.0, %v2692
        %v2694 = vpop.f32.mrf.mxu0
        %2695 = vmatprep.mubr.f32.mxu0 0.0
        %2696 = vmatmul.mubr.f32.gmra.mxu0 %v2619
        %v2697 = vpop.f32.mrf.mxu0
        %v2698 = vadd.f32 0.0, %v2697
        %v2699 = vpop.f32.mrf.mxu0
        %2700 = vdwg.mxu0
        %v2702 = vsel %vm996, %v2688, 0
        %v2705 = vsel %vm996, %v2693, 0
        %v2708 = vsel %vm996, %v2698, 0
        %2710 = vmatprep.subr.mxu0 0.0
        %2711 = vmatpush1.msra.mxu0 0.0
        %2712 = vmatprep.subr.mxu0 0.0
        %2713 = vmatpush1.msra.mxu0 0.0
        %2714 = vmatprep.subr.mxu0 0.0
        %2715 = vmatpush1.msra.mxu0 0.0
        %2716 = vmatprep.subr.mxu0 0.0
        %2717 = vmatpush1.msra.mxu0 0.0
        %2718 = vmatprep.subr.mxu0 0.0
        %2719 = vmatpush1.msra.mxu0 0.0
        %2720 = vmatprep.subr.mxu0 0.0
        %2721 = vmatpush1.msra.mxu0 0.0
        %2722 = vmatprep.subr.mxu0 0.0
        %2723 = vmatpush1.msra.mxu0 0.0
        %2724 = vmatprep.subr.mxu0 0.0
        %2725 = vmatpush1.msra.mxu0 0.0
        %2726 = vmatprep.subr.mxu0 0.0
        %2727 = vmatpush1.msra.mxu0 0.0
        %2728 = vmatprep.subr.mxu0 0.0
        %2729 = vmatpush1.msra.mxu0 0.0
        %2730 = vmatprep.subr.mxu0 0.0
        %2731 = vmatpush1.msra.mxu0 0.0
        %2732 = vmatprep.subr.mxu0 0.0
        %2733 = vmatpush1.msra.mxu0 0.0
        %2734 = vmatprep.subr.mxu0 0.0
        %2735 = vmatpush1.msra.mxu0 0.0
        %2736 = vmatprep.subr.mxu0 0.0
        %2737 = vmatpush1.msra.mxu0 0.0
        %2738 = vmatprep.subr.mxu0 0.0
        %2739 = vmatpush1.msra.mxu0 %v2121
        %2740 = vmatprep.subr.mxu0 0.0
        %2741 = vmatpush1.msra.mxu0 %v2120
        %2742 = vmatprep.subr.mxu0 0.0
        %2743 = vmatpush2.msra.mxu0 0.0
        %2744 = vmatprep.subr.mxu0 0.0
        %2745 = vmatpush2.msra.mxu0 0.0
        %2746 = vmatprep.subr.mxu0 0.0
        %2747 = vmatpush2.msra.mxu0 0.0
        %2748 = vmatprep.subr.mxu0 0.0
        %2749 = vmatpush2.msra.mxu0 0.0
        %2750 = vmatprep.subr.mxu0 0.0
        %2751 = vmatpush2.msra.mxu0 0.0
        %2752 = vmatprep.subr.mxu0 0.0
        %2753 = vmatpush2.msra.mxu0 0.0
        %2754 = vmatprep.subr.mxu0 0.0
        %2755 = vmatpush2.msra.mxu0 0.0
        %2756 = vmatprep.subr.mxu0 0.0
        %2757 = vmatpush2.msra.mxu0 0.0
        %2758 = vmatprep.subr.mxu0 0.0
        %2759 = vmatpush2.msra.mxu0 0.0
        %2760 = vmatprep.subr.mxu0 0.0
        %2761 = vmatpush2.msra.mxu0 0.0
        %2762 = vmatprep.subr.mxu0 0.0
        %2763 = vmatpush2.msra.mxu0 0.0
        %2764 = vmatprep.subr.mxu0 0.0
        %2765 = vmatpush2.msra.mxu0 0.0
        %2766 = vmatprep.subr.mxu0 0.0
        %2767 = vmatpush2.msra.mxu0 0.0
        %2768 = vmatprep.subr.mxu0 0.0
        %2769 = vmatpush2.msra.mxu0 0.0
        %2770 = vmatprep.subr.mxu0 0.0
        %2771 = vmatpush2.msra.mxu0 0.0
        %2772 = vmatprep.subr.mxu0 0.0
        %2773 = vmatpush2.msra.mxu0 0.0
        %2774 = vmatprep.mubr.f32.mxu0 0.0
        %2775 = vmatmul.mubr.f32.gmra.mxu0 %v2702
        %v2776 = vpop.f32.mrf.mxu0
        %v2777 = vadd.f32 0.0, %v2776
        %v2778 = vpop.f32.mrf.mxu0
        %2779 = vmatprep.mubr.f32.mxu0 0.0
        %2780 = vmatmul.mubr.f32.gmra.mxu0 %v2705
        %v2781 = vpop.f32.mrf.mxu0
        %v2782 = vadd.f32 0.0, %v2781
        %v2783 = vpop.f32.mrf.mxu0
        %2784 = vmatprep.mubr.f32.mxu0 0.0
        %2785 = vmatmul.mubr.f32.gmra.mxu0 %v2708
        %v2786 = vpop.f32.mrf.mxu0
        %v2787 = vadd.f32 0.0, %v2786
        %v2788 = vpop.f32.mrf.mxu0
        %2789 = vdwg.mxu0
        %v2790 = vadd.f32 %v2457, %v2777
        %v2791 = vadd.f32 %v2458, %v2782
        %v2792 = vadd.f32 %v2459, %v2787
        %v2793 = vadd.f32 %v1951, %v2790
        %v2794 = vadd.f32 %v1952, %v2791
        %v2795 = vadd.f32 %v1953, %v2792
        %s2796 = scalar_lea.vmem %s10, 1
        %v2797 = vld [vmem:[%s2796] sm:$0x1]
        %s2798 = scalar_lea.vmem %s11, 1
        %v2799 = vld [vmem:[%s2798] sm:$0x1]
        %v2800 = vsel %vm823, %v2793, 0.0
        %2801 = vadd.xlane.f32.xlu0 %v2800
        %v2802 = vpop.xlane.xlu0 %2801
        %v2803 = vsel %vm823, %v2794, 0.0
        %2804 = vadd.xlane.f32.xlu0 %v2803
        %v2805 = vpop.xlane.xlu0 %2804
        %v2806 = vsel %vm823, %v2795, 0.0
        %2807 = vadd.xlane.f32.xlu0 %v2806
        %v2808 = vpop.xlane.xlu0 %2807
        %v2809 = vmul.f32 %v2802, %v833
        %v2810 = vmul.f32 %v2805, %v833
        %v2811 = vmul.f32 %v2808, %v833
        %v2812 = vsub.f32 %v2793, %v2809
        %v2813 = vsub.f32 %v2794, %v2810
        %v2814 = vsub.f32 %v2795, %v2811
        %v2815 = vmul.f32 %v2812, %v2812
        %v2816 = vmul.f32 %v2813, %v2813
        %v2817 = vmul.f32 %v2814, %v2814
        %v2818 = vsel %vm823, %v2815, 0.0
        %2819 = vadd.xlane.f32.xlu0 %v2818
        %v2820 = vpop.xlane.xlu0 %2819
        %v2821 = vsel %vm823, %v2816, 0.0
        %2822 = vadd.xlane.f32.xlu0 %v2821
        %v2823 = vpop.xlane.xlu0 %2822
        %v2824 = vsel %vm823, %v2817, 0.0
        %2825 = vadd.xlane.f32.xlu0 %v2824
        %v2826 = vpop.xlane.xlu0 %2825
        %v2827 = vmul.f32 %v2820, %v833
        %v2828 = vmul.f32 %v2823, %v833
        %v2829 = vmul.f32 %v2826, %v833
        %v2830 = vadd.f32 %v2827, 1e-06
        %v2831 = vadd.f32 %v2828, 1e-06
        %v2832 = vadd.f32 %v2829, 1e-06
        %v2833 = vrsqrt.pop %v2830
        %v2834 = vrsqrt.pop %v2831
        %v2835 = vrsqrt.pop %v2832
        %v2836 = vmul.f32 %v2812, %v2833
        %v2837 = vmul.f32 %v2813, %v2834
        %v2838 = vmul.f32 %v2814, %v2835
        %v2840 = vlaneseq
        %v2841 = vshrl.u32 %v2840, 7
        %v2842 = vsub.s32 0, %v2841
        %v2843 = vrot.slane %v2797, %v2842
        %v2845 = vmul.f32 %v2836, %v2843
        %v2846 = vmul.f32 %v2837, %v2843
        %v2847 = vmul.f32 %v2838, %v2843
        %v2849 = vlaneseq
        %v2850 = vshrl.u32 %v2849, 7
        %v2851 = vsub.s32 0, %v2850
        %v2852 = vrot.slane %v2799, %v2851
        %v2854 = vadd.f32 %v2845, %v2852
        %v2855 = vadd.f32 %v2846, %v2852
        %v2856 = vadd.f32 %v2847, %v2852
        %s2857 = scalar_lea.vmem %s12, 32
        %v2858 = vld [vmem:[%s2857] sm:$0xff]
        %v2859 = vld [vmem:[%s2857 + $0x8] sm:$0xff]
        %v2860 = vld [vmem:[%s2857 + $0x10] sm:$0xff]
        %v2861 = vld [vmem:[%s2857 + $0x18] sm:$0xff]
        %s2862 = scalar_lea.vmem %s13, 1
        %v2863 = vld [vmem:[%s2862] sm:$0x1]
        %v2865 = vlaneseq
        %v2866 = vshrl.u32 %v2865, 7
        %v2867 = vsub.s32 0, %v2866
        %v2868 = vrot.slane %v2863, %v2867
        %v2871 = vsel %vm823, %v2854, 0
        %v2874 = vsel %vm823, %v2855, 0
        %v2877 = vsel %vm823, %v2856, 0
        %2879 = vmatprep.subr.mxu0 0.0
        %2880 = vmatpush1.msra.mxu0 0.0
        %2881 = vmatprep.subr.mxu0 0.0
        %2882 = vmatpush1.msra.mxu0 0.0
        %2883 = vmatprep.subr.mxu0 0.0
        %2884 = vmatpush1.msra.mxu0 0.0
        %2885 = vmatprep.subr.mxu0 0.0
        %2886 = vmatpush1.msra.mxu0 0.0
        %2887 = vmatprep.subr.mxu0 0.0
        %2888 = vmatpush1.msra.mxu0 0.0
        %2889 = vmatprep.subr.mxu0 0.0
        %2890 = vmatpush1.msra.mxu0 0.0
        %2891 = vmatprep.subr.mxu0 0.0
        %2892 = vmatpush1.msra.mxu0 0.0
        %2893 = vmatprep.subr.mxu0 0.0
        %2894 = vmatpush1.msra.mxu0 0.0
        %2895 = vmatprep.subr.mxu0 0.0
        %2896 = vmatpush1.msra.mxu0 0.0
        %2897 = vmatprep.subr.mxu0 0.0
        %2898 = vmatpush1.msra.mxu0 0.0
        %2899 = vmatprep.subr.mxu0 0.0
        %2900 = vmatpush1.msra.mxu0 0.0
        %2901 = vmatprep.subr.mxu0 0.0
        %2902 = vmatpush1.msra.mxu0 0.0
        %2903 = vmatprep.subr.mxu0 0.0
        %2904 = vmatpush1.msra.mxu0 %v2861
        %2905 = vmatprep.subr.mxu0 0.0
        %2906 = vmatpush1.msra.mxu0 %v2860
        %2907 = vmatprep.subr.mxu0 0.0
        %2908 = vmatpush1.msra.mxu0 %v2859
        %2909 = vmatprep.subr.mxu0 0.0
        %2910 = vmatpush1.msra.mxu0 %v2858
        %2911 = vmatprep.subr.mxu0 0.0
        %2912 = vmatpush2.msra.mxu0 0.0
        %2913 = vmatprep.subr.mxu0 0.0
        %2914 = vmatpush2.msra.mxu0 0.0
        %2915 = vmatprep.subr.mxu0 0.0
        %2916 = vmatpush2.msra.mxu0 0.0
        %2917 = vmatprep.subr.mxu0 0.0
        %2918 = vmatpush2.msra.mxu0 0.0
        %2919 = vmatprep.subr.mxu0 0.0
        %2920 = vmatpush2.msra.mxu0 0.0
        %2921 = vmatprep.subr.mxu0 0.0
        %2922 = vmatpush2.msra.mxu0 0.0
        %2923 = vmatprep.subr.mxu0 0.0
        %2924 = vmatpush2.msra.mxu0 0.0
        %2925 = vmatprep.subr.mxu0 0.0
        %2926 = vmatpush2.msra.mxu0 0.0
        %2927 = vmatprep.subr.mxu0 0.0
        %2928 = vmatpush2.msra.mxu0 0.0
        %2929 = vmatprep.subr.mxu0 0.0
        %2930 = vmatpush2.msra.mxu0 0.0
        %2931 = vmatprep.subr.mxu0 0.0
        %2932 = vmatpush2.msra.mxu0 0.0
        %2933 = vmatprep.subr.mxu0 0.0
        %2934 = vmatpush2.msra.mxu0 0.0
        %2935 = vmatprep.subr.mxu0 0.0
        %2936 = vmatpush2.msra.mxu0 0.0
        %2937 = vmatprep.subr.mxu0 0.0
        %2938 = vmatpush2.msra.mxu0 0.0
        %2939 = vmatprep.subr.mxu0 0.0
        %2940 = vmatpush2.msra.mxu0 0.0
        %2941 = vmatprep.subr.mxu0 0.0
        %2942 = vmatpush2.msra.mxu0 0.0
        %2943 = vmatprep.mubr.f32.mxu0 0.0
        %2944 = vmatmul.mubr.f32.gmra.mxu0 %v2871
        %v2945 = vpop.f32.mrf.mxu0
        %v2946 = vadd.f32 %v2868, %v2945
        %v2947 = vpop.f32.mrf.mxu0
        %2948 = vmatprep.mubr.f32.mxu0 0.0
        %2949 = vmatmul.mubr.f32.gmra.mxu0 %v2874
        %v2950 = vpop.f32.mrf.mxu0
        %v2951 = vadd.f32 %v2868, %v2950
        %v2952 = vpop.f32.mrf.mxu0
        %2953 = vmatprep.mubr.f32.mxu0 0.0
        %2954 = vmatmul.mubr.f32.gmra.mxu0 %v2877
        %v2955 = vpop.f32.mrf.mxu0
        %v2956 = vadd.f32 %v2868, %v2955
        %v2957 = vpop.f32.mrf.mxu0
        %2958 = vdwg.mxu0
        %v2959 = vmul.f32 %v2946, %v2946
        %v2960 = vmul.f32 %v2951, %v2951
        %v2961 = vmul.f32 %v2956, %v2956
        %v2962 = vmul.f32 %v2946, %v2959
        %v2963 = vmul.f32 %v2951, %v2960
        %v2964 = vmul.f32 %v2956, %v2961
        %v2965 = vmul.f32 %v2962, 0.044715
        %v2966 = vmul.f32 %v2963, 0.044715
        %v2967 = vmul.f32 %v2964, 0.044715
        %v2968 = vadd.f32 %v2946, %v2965
        %v2969 = vadd.f32 %v2951, %v2966
        %v2970 = vadd.f32 %v2956, %v2967
        %v2971 = vmul.f32 %v2968, 0.7978846
        %v2972 = vmul.f32 %v2969, 0.7978846
        %v2973 = vmul.f32 %v2970, 0.7978846
        %v2974 = vtanh.pop %v2971
        %v2975 = vtanh.pop %v2972
        %v2976 = vtanh.pop %v2973
        %v2977 = vadd.f32 %v2974, 1.0
        %v2978 = vadd.f32 %v2975, 1.0
        %v2979 = vadd.f32 %v2976, 1.0
        %v2980 = vmul.f32 %v2977, 0.5
        %v2981 = vmul.f32 %v2978, 0.5
        %v2982 = vmul.f32 %v2979, 0.5
        %v2983 = vmul.f32 %v2946, %v2980
        %v2984 = vmul.f32 %v2951, %v2981
        %v2985 = vmul.f32 %v2956, %v2982
        %s2986 = scalar_lea.vmem %s14, 64
        %v2987 = vld [vmem:[%s2986] sm:$0xff]
        %v2988 = vld [vmem:[%s2986 + $0x8] sm:$0xff]
        %v2989 = vld [vmem:[%s2986 + $0x10] sm:$0xff]
        %v2990 = vld [vmem:[%s2986 + $0x18] sm:$0xff]
        %v2991 = vld [vmem:[%s2986 + $0x20] sm:$0xff]
        %v2992 = vld [vmem:[%s2986 + $0x28] sm:$0xff]
        %v2993 = vld [vmem:[%s2986 + $0x30] sm:$0xff]
        %v2994 = vld [vmem:[%s2986 + $0x38] sm:$0xff]
        %s2995 = scalar_lea.vmem %s15, 1
        %v2996 = vld [vmem:[%s2995] sm:$0x1]
        %v2998 = vlaneseq
        %v2999 = vshrl.u32 %v2998, 7
        %v3000 = vsub.s32 0, %v2999
        %v3001 = vrot.slane %v2996, %v3000
        %v3004 = vsel %vm699, %v2983, 0
        %v3007 = vsel %vm699, %v2984, 0
        %v3010 = vsel %vm699, %v2985, 0
        %3012 = vmatprep.subr.mxu0 0.0
        %3013 = vmatpush1.msra.mxu0 0.0
        %3014 = vmatprep.subr.mxu0 0.0
        %3015 = vmatpush1.msra.mxu0 0.0
        %3016 = vmatprep.subr.mxu0 0.0
        %3017 = vmatpush1.msra.mxu0 0.0
        %3018 = vmatprep.subr.mxu0 0.0
        %3019 = vmatpush1.msra.mxu0 0.0
        %3020 = vmatprep.subr.mxu0 0.0
        %3021 = vmatpush1.msra.mxu0 0.0
        %3022 = vmatprep.subr.mxu0 0.0
        %3023 = vmatpush1.msra.mxu0 0.0
        %3024 = vmatprep.subr.mxu0 0.0
        %3025 = vmatpush1.msra.mxu0 0.0
        %3026 = vmatprep.subr.mxu0 0.0
        %3027 = vmatpush1.msra.mxu0 0.0
        %3028 = vmatprep.subr.mxu0 0.0
        %3029 = vmatpush1.msra.mxu0 %v2994
        %3030 = vmatprep.subr.mxu0 0.0
        %3031 = vmatpush1.msra.mxu0 %v2993
        %3032 = vmatprep.subr.mxu0 0.0
        %3033 = vmatpush1.msra.mxu0 %v2992
        %3034 = vmatprep.subr.mxu0 0.0
        %3035 = vmatpush1.msra.mxu0 %v2991
        %3036 = vmatprep.subr.mxu0 0.0
        %3037 = vmatpush1.msra.mxu0 %v2990
        %3038 = vmatprep.subr.mxu0 0.0
        %3039 = vmatpush1.msra.mxu0 %v2989
        %3040 = vmatprep.subr.mxu0 0.0
        %3041 = vmatpush1.msra.mxu0 %v2988
        %3042 = vmatprep.subr.mxu0 0.0
        %3043 = vmatpush1.msra.mxu0 %v2987
        %3044 = vmatprep.subr.mxu0 0.0
        %3045 = vmatpush2.msra.mxu0 0.0
        %3046 = vmatprep.subr.mxu0 0.0
        %3047 = vmatpush2.msra.mxu0 0.0
        %3048 = vmatprep.subr.mxu0 0.0
        %3049 = vmatpush2.msra.mxu0 0.0
        %3050 = vmatprep.subr.mxu0 0.0
        %3051 = vmatpush2.msra.mxu0 0.0
        %3052 = vmatprep.subr.mxu0 0.0
        %3053 = vmatpush2.msra.mxu0 0.0
        %3054 = vmatprep.subr.mxu0 0.0
        %3055 = vmatpush2.msra.mxu0 0.0
        %3056 = vmatprep.subr.mxu0 0.0
        %3057 = vmatpush2.msra.mxu0 0.0
        %3058 = vmatprep.subr.mxu0 0.0
        %3059 = vmatpush2.msra.mxu0 0.0
        %3060 = vmatprep.subr.mxu0 0.0
        %3061 = vmatpush2.msra.mxu0 0.0
        %3062 = vmatprep.subr.mxu0 0.0
        %3063 = vmatpush2.msra.mxu0 0.0
        %3064 = vmatprep.subr.mxu0 0.0
        %3065 = vmatpush2.msra.mxu0 0.0
        %3066 = vmatprep.subr.mxu0 0.0
        %3067 = vmatpush2.msra.mxu0 0.0
        %3068 = vmatprep.subr.mxu0 0.0
        %3069 = vmatpush2.msra.mxu0 0.0
        %3070 = vmatprep.subr.mxu0 0.0
        %3071 = vmatpush2.msra.mxu0 0.0
        %3072 = vmatprep.subr.mxu0 0.0
        %3073 = vmatpush2.msra.mxu0 0.0
        %3074 = vmatprep.subr.mxu0 0.0
        %3075 = vmatpush2.msra.mxu0 0.0
        %3076 = vmatprep.mubr.f32.mxu0 0.0
        %3077 = vmatmul.mubr.f32.gmra.mxu0 %v3004
        %v3078 = vpop.f32.mrf.mxu0
        %v3079 = vadd.f32 %v3001, %v3078
        %v3080 = vpop.f32.mrf.mxu0
        %3081 = vmatprep.mubr.f32.mxu0 0.0
        %3082 = vmatmul.mubr.f32.gmra.mxu0 %v3007
        %v3083 = vpop.f32.mrf.mxu0
        %v3084 = vpop.f32.mrf.mxu0
        %3085 = vmatprep.mubr.f32.mxu0 0.0
        %3086 = vmatmul.mubr.f32.gmra.mxu0 %v3010
        %v3087 = vpop.f32.mrf.mxu0
        %v3088 = vpop.f32.mrf.mxu0
        %3089 = vdwg.mxu0
        %v3090 = vadd.f32 %v2793, %v3079
        %v3091 = vld [vmem:[%s16] sm:$0x1]
        %v3092 = vld [vmem:[%s17] sm:$0x1]
        %v3093 = vsel %vm823, %v3090, 0.0
        %3094 = vadd.xlane.f32.xlu0 %v3093
        %v3095 = vpop.xlane.xlu0 %3094
        %v3096 = vmul.f32 %v3095, %v833
        %v3097 = vsub.f32 %v3090, %v3096
        %v3098 = vmul.f32 %v3097, %v3097
        %v3099 = vsel %vm823, %v3098, 0.0
        %3100 = vadd.xlane.f32.xlu0 %v3099
        %v3101 = vpop.xlane.xlu0 %3100
        %v3102 = vmul.f32 %v3101, %v833
        %v3103 = vadd.f32 %v3102, 1e-06
        %v3104 = vrsqrt.pop %v3103
        %v3105 = vmul.f32 %v3097, %v3104
        %v3107 = vlaneseq
        %v3108 = vshrl.u32 %v3107, 7
        %v3109 = vsub.s32 0, %v3108
        %v3110 = vrot.slane %v3091, %v3109
        %v3112 = vmul.f32 %v3105, %v3110
        %v3114 = vlaneseq
        %v3115 = vshrl.u32 %v3114, 7
        %v3116 = vsub.s32 0, %v3115
        %v3117 = vrot.slane %v3092, %v3116
        %v3119 = vadd.f32 %v3112, %v3117
        %v3120 = vld [vmem:[%s18] sm:$0xff]
        %v3121 = vld [vmem:[%s18 + $0x8] sm:$0xff]
        %v3122 = vld [vmem:[%s18 + $0x10] sm:$0xff]
        %v3123 = vld [vmem:[%s18 + $0x18] sm:$0xff]
        %v3124 = vld [vmem:[%s19] sm:$0x1]
        %v3126 = vsel %vm823, %v3119, 0
        %3128 = vmatprep.subr.mxu0 0.0
        %3129 = vmatpush1.msra.mxu0 0.0
        %3130 = vmatprep.subr.mxu0 0.0
        %3131 = vmatpush1.msra.mxu0 0.0
        %3132 = vmatprep.subr.mxu0 0.0
        %3133 = vmatpush1.msra.mxu0 0.0
        %3134 = vmatprep.subr.mxu0 0.0
        %3135 = vmatpush1.msra.mxu0 0.0
        %3136 = vmatprep.subr.mxu0 0.0
        %3137 = vmatpush1.msra.mxu0 0.0
        %3138 = vmatprep.subr.mxu0 0.0
        %3139 = vmatpush1.msra.mxu0 0.0
        %3140 = vmatprep.subr.mxu0 0.0
        %3141 = vmatpush1.msra.mxu0 0.0
        %3142 = vmatprep.subr.mxu0 0.0
        %3143 = vmatpush1.msra.mxu0 0.0
        %3144 = vmatprep.subr.mxu0 0.0
        %3145 = vmatpush1.msra.mxu0 0.0
        %3146 = vmatprep.subr.mxu0 0.0
        %3147 = vmatpush1.msra.mxu0 0.0
        %3148 = vmatprep.subr.mxu0 0.0
        %3149 = vmatpush1.msra.mxu0 0.0
        %3150 = vmatprep.subr.mxu0 0.0
        %3151 = vmatpush1.msra.mxu0 0.0
        %3152 = vmatprep.subr.mxu0 0.0
        %3153 = vmatpush1.msra.mxu0 %v3123
        %3154 = vmatprep.subr.mxu0 0.0
        %3155 = vmatpush1.msra.mxu0 %v3122
        %3156 = vmatprep.subr.mxu0 0.0
        %3157 = vmatpush1.msra.mxu0 %v3121
        %3158 = vmatprep.subr.mxu0 0.0
        %3159 = vmatpush1.msra.mxu0 %v3120
        %3160 = vmatprep.subr.mxu0 0.0
        %3161 = vmatpush2.msra.mxu0 0.0
        %3162 = vmatprep.subr.mxu0 0.0
        %3163 = vmatpush2.msra.mxu0 0.0
        %3164 = vmatprep.subr.mxu0 0.0
        %3165 = vmatpush2.msra.mxu0 0.0
        %3166 = vmatprep.subr.mxu0 0.0
        %3167 = vmatpush2.msra.mxu0 0.0
        %3168 = vmatprep.subr.mxu0 0.0
        %3169 = vmatpush2.msra.mxu0 0.0
        %3170 = vmatprep.subr.mxu0 0.0
        %3171 = vmatpush2.msra.mxu0 0.0
        %3172 = vmatprep.subr.mxu0 0.0
        %3173 = vmatpush2.msra.mxu0 0.0
        %3174 = vmatprep.subr.mxu0 0.0
        %3175 = vmatpush2.msra.mxu0 0.0
        %3176 = vmatprep.subr.mxu0 0.0
        %3177 = vmatpush2.msra.mxu0 0.0
        %3178 = vmatprep.subr.mxu0 0.0
        %3179 = vmatpush2.msra.mxu0 0.0
        %3180 = vmatprep.subr.mxu0 0.0
        %3181 = vmatpush2.msra.mxu0 0.0
        %3182 = vmatprep.subr.mxu0 0.0
        %3183 = vmatpush2.msra.mxu0 0.0
        %3184 = vmatprep.subr.mxu0 0.0
        %3185 = vmatpush2.msra.mxu0 0.0
        %3186 = vmatprep.subr.mxu0 0.0
        %3187 = vmatpush2.msra.mxu0 0.0
        %3188 = vmatprep.subr.mxu0 0.0
        %3189 = vmatpush2.msra.mxu0 0.0
        %3190 = vmatprep.subr.mxu0 0.0
        %3191 = vmatpush2.msra.mxu0 0.0
        %3192 = vmatprep.mubr.f32.mxu0 0.0
        %3193 = vmatmul.mubr.f32.gmra.mxu0 %v3126
        %v3194 = vpop.f32.mrf.mxu0
        %v3195 = vadd.f32 %v3124, %v3194
        %v3196 = vpop.f32.mrf.mxu0
        %3197 = vdwg.mxu0
        %v3198 = vtanh.pop %v3195
        %v3199 = vld [vmem:[%s20] sm:$0xff]
        %v3200 = vld [vmem:[%s20 + $0x8] sm:$0xff]
        %v3201 = vld [vmem:[%s20 + $0x10] sm:$0xff]
        %v3202 = vld [vmem:[%s20 + $0x18] sm:$0xff]
        %v3203 = vld [vmem:[%s21] sm:$0x1]
        %v3205 = vsel %vm823, %v3198, 0
        %3207 = vmatprep.subr.mxu0 0.0
        %3208 = vmatpush1.msra.mxu0 0.0
        %3209 = vmatprep.subr.mxu0 0.0
        %3210 = vmatpush1.msra.mxu0 0.0
        %3211 = vmatprep.subr.mxu0 0.0
        %3212 = vmatpush1.msra.mxu0 0.0
        %3213 = vmatprep.subr.mxu0 0.0
        %3214 = vmatpush1.msra.mxu0 0.0
        %3215 = vmatprep.subr.mxu0 0.0
        %3216 = vmatpush1.msra.mxu0 0.0
        %3217 = vmatprep.subr.mxu0 0.0
        %3218 = vmatpush1.msra.mxu0 0.0
        %3219 = vmatprep.subr.mxu0 0.0
        %3220 = vmatpush1.msra.mxu0 0.0
        %3221 = vmatprep.subr.mxu0 0.0
        %3222 = vmatpush1.msra.mxu0 0.0
        %3223 = vmatprep.subr.mxu0 0.0
        %3224 = vmatpush1.msra.mxu0 0.0
        %3225 = vmatprep.subr.mxu0 0.0
        %3226 = vmatpush1.msra.mxu0 0.0
        %3227 = vmatprep.subr.mxu0 0.0
        %3228 = vmatpush1.msra.mxu0 0.0
        %3229 = vmatprep.subr.mxu0 0.0
        %3230 = vmatpush1.msra.mxu0 0.0
        %3231 = vmatprep.subr.mxu0 0.0
        %3232 = vmatpush1.msra.mxu0 %v3202
        %3233 = vmatprep.subr.mxu0 0.0
        %3234 = vmatpush1.msra.mxu0 %v3201
        %3235 = vmatprep.subr.mxu0 0.0
        %3236 = vmatpush1.msra.mxu0 %v3200
        %3237 = vmatprep.subr.mxu0 0.0
        %3238 = vmatpush1.msra.mxu0 %v3199
        %3239 = vmatprep.subr.mxu0 0.0
        %3240 = vmatpush2.msra.mxu0 0.0
        %3241 = vmatprep.subr.mxu0 0.0
        %3242 = vmatpush2.msra.mxu0 0.0
        %3243 = vmatprep.subr.mxu0 0.0
        %3244 = vmatpush2.msra.mxu0 0.0
        %3245 = vmatprep.subr.mxu0 0.0
        %3246 = vmatpush2.msra.mxu0 0.0
        %3247 = vmatprep.subr.mxu0 0.0
        %3248 = vmatpush2.msra.mxu0 0.0
        %3249 = vmatprep.subr.mxu0 0.0
        %3250 = vmatpush2.msra.mxu0 0.0
        %3251 = vmatprep.subr.mxu0 0.0
        %3252 = vmatpush2.msra.mxu0 0.0
        %3253 = vmatprep.subr.mxu0 0.0
        %3254 = vmatpush2.msra.mxu0 0.0
        %3255 = vmatprep.subr.mxu0 0.0
        %3256 = vmatpush2.msra.mxu0 0.0
        %3257 = vmatprep.subr.mxu0 0.0
        %3258 = vmatpush2.msra.mxu0 0.0
        %3259 = vmatprep.subr.mxu0 0.0
        %3260 = vmatpush2.msra.mxu0 0.0
        %3261 = vmatprep.subr.mxu0 0.0
        %3262 = vmatpush2.msra.mxu0 0.0
        %3263 = vmatprep.subr.mxu0 0.0
        %3264 = vmatpush2.msra.mxu0 0.0
        %3265 = vmatprep.subr.mxu0 0.0
        %3266 = vmatpush2.msra.mxu0 0.0
        %3267 = vmatprep.subr.mxu0 0.0
        %3268 = vmatpush2.msra.mxu0 0.0
        %3269 = vmatprep.subr.mxu0 0.0
        %3270 = vmatpush2.msra.mxu0 0.0
        %3271 = vmatprep.mubr.f32.mxu0 0.0
        %3272 = vmatmul.mubr.f32.gmra.mxu0 %v3205
        %v3273 = vpop.f32.mrf.mxu0
        %v3274 = vadd.f32 %v3203, %v3273
        %v3275 = vpop.f32.mrf.mxu0
        %3276 = vdwg.mxu0
        %vm3277 = vcmask 57344
        %3278 = vst.msk [vmem:[%s675] sm:$0x1] %vm3277, %v3274
        %s3279 = sand.u32 %s511, 1
        %s3280 = scalar_lea.sflag [#allocation3], %s3279
        %s3281 = sand.u32 %s511, 1
        %s3282 = scalar_lea.vmem [#allocation2], %s3281
        // Predicated region
        $region109: #{haframe_vit_forward.1} parent=107 // pred_check
          %p3283 = pneg %p521
        $region110: #{haframe_vit_forward.1} parent=107 // pred_check_branch
          %3285 = sbr.rel (%p3283) target = $region112
        $region111: #{haframe_vit_forward.1} parent=107 // pred_region
          %s3287 = ssub.s32 16, 16
          %3288 = vsyncadd %s3280, %s3287
          %s3289 = smul.addr %s36, 16
          %s3290 = scalar_lea.hbm %s22, %s3289
          %s3292 = sshll.u32 %s3282, 4
          %s3293 = int_to_ptr.vmem [resolvable:$true] %s3292
          %3295 = dma.vmem_to_hbm [thread:$0]  %s3293, 16, %s3290, %s3280
        $region112: #{haframe_vit_forward.1} parent=107 // pred_fallthru
          _
      $region108: #{haframe_vit_forward.1} parent=5 // pred_fallthru
        _
      %p3296 = scmp.le.s32.totalorder 2, %s31
      // Predicated region
      $region113: #{haframe_vit_forward.1} parent=5 // pred_check
        %p3297 = pneg %p3296
      $region114: #{haframe_vit_forward.1} parent=5 // pred_check_branch
        %3299 = sbr.rel (%p3297) target = $region116
      $region115: #{haframe_vit_forward.1} parent=5 // pred_region
        %s3300 = ssub.s32 %s31, 2
        // Predicated region
        $region117: #{haframe_vit_forward.1} parent=115 // pred_check
          %p3301 = pneg %p527
        $region118: #{haframe_vit_forward.1} parent=115 // pred_check_branch
          %3303 = sbr.rel (%p3301) target = $region120
        $region119: #{haframe_vit_forward.1} parent=115 // pred_region
          %s3304 = sand.u32 %s512, 1
          %s3305 = scalar_lea.sflag [#allocation3], %s3304
          %s3306 = sand.u32 %s512, 1
          %s3307 = scalar_lea.vmem [#allocation2], %s3306
          %3308 = dma.done %s3305, 16
        $region120: #{haframe_vit_forward.1} parent=115 // pred_fallthru
          _
      $region116: #{haframe_vit_forward.1} parent=5 // pred_fallthru
        _
    $region6: #{haframe_vit_forward.1} parent=1 // loop_footer
      %s35 = sadd.s32 1, %s31
    $region7: #{haframe_vit_forward.1} parent=1 // loop_footer_branch
      %30 = sbr.rel target = $region3
    $region8: #{haframe_vit_forward.1} parent=1 // loop_exit
      _
    %3309 = vsyncpa [#allocation3], 1
    %s3310 = scalar_lea.sflag [#allocation3], 1
    %3311 = vsyncpa %s3310, 1

</llo_original>
